<compile_context>
chip_gen: v7x
topology: tpu7x:2x2x1
jax: 0.10.0
libtpu: 0.0.40
codegen_flags: <defaults>
</compile_context>

<pallas_src>
import functools
import math

import jax
import jax.numpy as jnp
from jax import lax
from jax.experimental import pallas as pl
from jax.experimental.pallas import tpu as pltpu


def _leaky_relu(x, slope=0.2):
    return jnp.where(x > 0, x, slope * x)


# --------------------------------------------------------------------------- #
# Kernels
# --------------------------------------------------------------------------- #
def _stage_a_kernel(z_ref, w1_ref, b1_ref, w2_ref, b2_ref, stats_ref, *,
                    block_b, valid_b):
    """Linear1 + LeakyReLU + Linear2; emit per-tile BN partial statistics.

    stats block layout (8, hidden): row 0 = sum(h2), row 1 = sum(h2*h2),
    rows 2..7 = 0 (padding so the store is a full (8, 128k) lane-dense tile).
    """
    z = z_ref[...].astype(jnp.bfloat16)
    h1 = jnp.dot(z, w1_ref[...], preferred_element_type=jnp.float32) + b1_ref[...]
    h1 = _leaky_relu(h1)
    h2 = jnp.dot(h1.astype(jnp.bfloat16), w2_ref[...],
                 preferred_element_type=jnp.float32) + b2_ref[...]

    # Mask rows that are batch padding so they don't pollute the statistics.
    row = pl.program_id(0) * block_b + lax.broadcasted_iota(
        jnp.int32, (block_b, 1), 0)
    mask = (row < valid_b).astype(jnp.float32)
    h2m = h2 * mask
    s = jnp.sum(h2m, axis=0, keepdims=True)
    sq = jnp.sum(h2m * h2, axis=0, keepdims=True)      # == sum(mask * h2^2)
    pad = jnp.zeros((6, s.shape[1]), jnp.float32)
    stats_ref[...] = jnp.concatenate([s, sq, pad], axis=0)


def _stage_b_kernel(z_ref, w1_ref, b1_ref, w2_ref, b2_ref,
                    scale_ref, shift_ref, w3_ref, b3_ref, out_ref):
    """Recompute h1/h2, fused BN affine (one FMA) + LeakyReLU + Linear3 + Tanh."""
    z = z_ref[...].astype(jnp.bfloat16)
    h1 = jnp.dot(z, w1_ref[...], preferred_element_type=jnp.float32) + b1_ref[...]
    h1 = _leaky_relu(h1)
    h2 = jnp.dot(h1.astype(jnp.bfloat16), w2_ref[...],
                 preferred_element_type=jnp.float32) + b2_ref[...]
    h2n = _leaky_relu(h2 * scale_ref[...] + shift_ref[...])
    h3 = jnp.dot(h2n.astype(jnp.bfloat16), w3_ref[...],
                 preferred_element_type=jnp.float32) + b3_ref[...]
    out_ref[...] = jnp.tanh(h3)


# --------------------------------------------------------------------------- #
# Host-side wrapper
# --------------------------------------------------------------------------- #
def _round_up(x, m):
    return (x + m - 1) // m * m


def _vmem_capacity_bytes():
    try:
        return int(pltpu.get_tpu_info().vmem_capacity_bytes)
    except Exception:
        return 64 << 20         # conservative default: v7x per-TensorCore VMEM


def _pick_n_tile(out_dim_pad, cap=2048):
    """Largest multiple-of-128 divisor of out_dim_pad that is <= cap."""
    for cand in range(min(cap, out_dim_pad), 127, -128):
        if out_dim_pad % cand == 0:
            return cand
    return 128                  # unreachable: out_dim_pad is a multiple of 128


def decoder_forward(z, params, channels, img_size):
    B, latent_dim = z.shape
    hidden = params["w1"].shape[1]
    out_dim = params["w3"].shape[1]

    f32, bf16 = 4, 2
    vmem_cap = _vmem_capacity_bytes()
    small_vmem = vmem_cap <= (64 << 20)           # v7x-class parts
    max_tb = 512 if small_vmem else 1024          # v5e/v6e have 128 MiB VMEM
    vmem_req_cap = (30 << 20) if small_vmem else (64 << 20)

    # ---- batch / out_dim tiling (pad instead of whole-batch fallback) -------
    tb = min(_round_up(B, 8), max_tb)
    b_pad = _round_up(B, tb)
    out_dim_pad = _round_up(out_dim, 128)
    tn = _pick_n_tile(out_dim_pad)
    nb, nn = b_pad // tb, out_dim_pad // tn

    z_p = z if b_pad == B else jnp.pad(z, ((0, b_pad - B), (0, 0)))
    w3, b3 = params["w3"], params["b3"]
    if out_dim_pad != out_dim:
        w3 = jnp.pad(w3, ((0, 0), (0, out_dim_pad - out_dim)))
        b3 = jnp.pad(b3, ((0, 0), (0, out_dim_pad - out_dim)))

    def vmem_limit(block_bytes, headroom):
        # 2x for default double-buffering + headroom for in-kernel temporaries.
        return int(min(vmem_req_cap, max(8 << 20, 2 * block_bytes + headroom)))

    resident_a = (latent_dim * hidden * bf16      # w1
                  + hidden * hidden * bf16        # w2
                  + 2 * hidden * f32)             # b1, b2
    vmem_a = vmem_limit(
        tb * latent_dim * f32 + resident_a + 8 * hidden * f32,
        headroom=3 * tb * hidden * f32 + (4 << 20))
    resident_b = resident_a + 2 * hidden * f32    # + scale, shift
    vmem_b = vmem_limit(
        tb * latent_dim * f32 + resident_b
        + hidden * tn * bf16 + tn * f32 + tb * tn * f32,
        headroom=3 * tb * hidden * f32 + tb * tn * f32 + (4 << 20))

    # ---- Stage A: first two linears -> per-tile BN partial statistics -------
    stats = pl.pallas_call(
        functools.partial(_stage_a_kernel, block_b=tb, valid_b=B),
        out_shape=jax.ShapeDtypeStruct((nb * 8, hidden), jnp.float32),
        grid=(nb,),
        in_specs=[
            pl.BlockSpec((tb, latent_dim), lambda i: (i, 0)),       # z tile
            pl.BlockSpec((latent_dim, hidden), lambda i: (0, 0)),   # w1 resident
            pl.BlockSpec((1, hidden), lambda i: (0, 0)),            # b1
            pl.BlockSpec((hidden, hidden), lambda i: (0, 0)),       # w2 resident
            pl.BlockSpec((1, hidden), lambda i: (0, 0)),            # b2
        ],
        out_specs=pl.BlockSpec((8, hidden), lambda i: (i, 0)),      # per-tile stats
        compiler_params=pltpu.CompilerParams(
            dimension_semantics=("parallel",),    # independent tiles -> megacore
            vmem_limit_bytes=vmem_a),
    )(z_p, params["w1"], params["b1"], params["w2"], params["b2"])

    # Tiny (nb, 512) reduction + BN scale/shift in plain JAX (f32).
    stats = stats.reshape(nb, 8, hidden)
    ssum = jnp.sum(stats[:, 0, :], axis=0, keepdims=True)
    ssumsq = jnp.sum(stats[:, 1, :], axis=0, keepdims=True)
    eps = 1e-5
    mean = ssum / B
    var = jnp.maximum(ssumsq / B - mean * mean, 0.0)   # biased variance
    scale = params["gamma"] * lax.rsqrt(var + eps)
    shift = params["beta"] - mean * scale

    # ---- Stage B: recompute h2, BN apply + LeakyReLU + Linear3 + Tanh -------
    flat = pl.pallas_call(
        _stage_b_kernel,
        out_shape=jax.ShapeDtypeStruct((b_pad, out_dim_pad), jnp.float32),
        grid=(nb, nn),
        in_specs=[
            pl.BlockSpec((tb, latent_dim), lambda i, j: (i, 0)),      # z tile
            pl.BlockSpec((latent_dim, hidden), lambda i, j: (0, 0)),  # w1 resident
            pl.BlockSpec((1, hidden), lambda i, j: (0, 0)),           # b1
            pl.BlockSpec((hidden, hidden), lambda i, j: (0, 0)),      # w2 resident
            pl.BlockSpec((1, hidden), lambda i, j: (0, 0)),           # b2
            pl.BlockSpec((1, hidden), lambda i, j: (0, 0)),           # scale
            pl.BlockSpec((1, hidden), lambda i, j: (0, 0)),           # shift
            pl.BlockSpec((hidden, tn), lambda i, j: (0, j)),          # w3 N-tile
            pl.BlockSpec((1, tn), lambda i, j: (0, j)),               # b3 N-tile
        ],
        out_specs=pl.BlockSpec((tb, tn), lambda i, j: (i, j)),
        compiler_params=pltpu.CompilerParams(
            dimension_semantics=("parallel", "parallel"),
            vmem_limit_bytes=vmem_b),
    )(z_p, params["w1"], params["b1"], params["w2"], params["b2"],
      scale, shift, w3, b3)

    flat = flat[:B, :out_dim]
    # NCHW reshape, identical to img_flat.view(B, C, H, W)
    return flat.reshape(B, channels, img_size, img_size)


# --------------------------------------------------------------------------- #
# Params + reference
# --------------------------------------------------------------------------- #
def make_decoder_params(key, latent_dim, out_dim, hidden=512):
    """PyTorch nn.Linear-style init; weights stored bf16, biases/BN in f32."""
    ks = jax.random.split(key, 6)

    def linear_init(kw, kb, fan_in, fan_out):
        bound = 1.0 / math.sqrt(fan_in)
        w = jax.random.uniform(kw, (fan_in, fan_out), jnp.float32, -bound, bound)
        b = jax.random.uniform(kb, (1, fan_out), jnp.float32, -bound, bound)
        return w.astype(jnp.bfloat16), b

    w1, b1 = linear_init(ks[0], ks[1], latent_dim, hidden)
    w2, b2 = linear_init(ks[2], ks[3], hidden, hidden)
    w3, b3 = linear_init(ks[4], ks[5], hidden, out_dim)
    gamma = jnp.ones((1, hidden), jnp.float32)   # BatchNorm1d weight
    beta = jnp.zeros((1, hidden), jnp.float32)   # BatchNorm1d bias
    return dict(w1=w1, b1=b1, w2=w2, b2=b2, gamma=gamma, beta=beta, w3=w3, b3=b3)


def decoder_reference(z, params):
    """Pure-JAX reference with the same bf16-operand / f32-accumulate matmuls."""
    def mm(x, w):
        return jnp.dot(x.astype(jnp.bfloat16), w.astype(jnp.bfloat16),
                       preferred_element_type=jnp.float32)

    h1 = _leaky_relu(mm(z, params["w1"]) + params["b1"])
    h2 = mm(h1, params["w2"]) + params["b2"]
    mean = jnp.mean(h2, axis=0, keepdims=True)
    var = jnp.mean((h2 - mean) ** 2, axis=0, keepdims=True)
    h2n = (h2 - mean) * lax.rsqrt(var + 1e-5) * params["gamma"] + params["beta"]
    h2n = _leaky_relu(h2n)
    return jnp.tanh(mm(h2n, params["w3"]) + params["b3"])


if __name__ == "__main__":
    # Small, forward-consistent shapes: batch=2, latent_dim=32, channels=4, img_size=16
    batch = 2
    latent_dim = 32
    channels = 4
    img_size = 16
    out_dim = channels * img_size * img_size  # 1024

    key = jax.random.PRNGKey(0)
    kz, kp = jax.random.split(key)
    z = jax.random.normal(kz, (batch, latent_dim), jnp.float32)
    params = make_decoder_params(kp, latent_dim, out_dim)

    fwd = jax.jit(decoder_forward, static_argnums=(2, 3))
    img = jax.block_until_ready(fwd(z, params, channels, img_size))
    assert img.shape == (batch, channels, img_size, img_size), img.shape

    ref = decoder_reference(z, params).reshape(batch, channels, img_size, img_size)
    err = float(jnp.max(jnp.abs(img - ref)))
    # bf16 matmul operands -> compare against the bf16-matched reference.
    assert err < 1e-2, err

    print("KERNEL_OK")
</pallas_src>

<mosaic_0001>
module attributes {stable_mosaic.version = 11 : i64} {
  func.func @_stage_b_kernel(%arg0: i32, %arg1: i32, %arg2: memref<8x32xf32, #tpu.memory_space<vmem>>, %arg3: memref<32x512xbf16, #tpu.memory_space<vmem>>, %arg4: memref<1x512xf32, #tpu.memory_space<vmem>>, %arg5: memref<512x512xbf16, #tpu.memory_space<vmem>>, %arg6: memref<1x512xf32, #tpu.memory_space<vmem>>, %arg7: memref<1x512xf32, #tpu.memory_space<vmem>>, %arg8: memref<1x512xf32, #tpu.memory_space<vmem>>, %arg9: memref<512x1024xbf16, #tpu.memory_space<vmem>>, %arg10: memref<1x1024xf32, #tpu.memory_space<vmem>>, %arg11: memref<8x1024xf32, #tpu.memory_space<vmem>>) attributes {dimension_semantics = [#tpu.dimension_semantics<parallel>, #tpu.dimension_semantics<parallel>], iteration_bounds = array<i64: 1, 1>, scalar_prefetch = 0 : i64, scratch_operands = 0 : i64, tpu.core_type = #tpu.core_type<tc>, window_params = [{transform_indices = @transform_0, window_bounds = array<i64: 8, 32>}, {pipeline_mode = #tpu.pipeline_mode<synchronous>, transform_indices = @transform_1, window_bounds = array<i64: 32, 512>}, {pipeline_mode = #tpu.pipeline_mode<synchronous>, transform_indices = @transform_2, window_bounds = array<i64: 1, 512>}, {pipeline_mode = #tpu.pipeline_mode<synchronous>, transform_indices = @transform_3, window_bounds = array<i64: 512, 512>}, {pipeline_mode = #tpu.pipeline_mode<synchronous>, transform_indices = @transform_4, window_bounds = array<i64: 1, 512>}, {pipeline_mode = #tpu.pipeline_mode<synchronous>, transform_indices = @transform_5, window_bounds = array<i64: 1, 512>}, {pipeline_mode = #tpu.pipeline_mode<synchronous>, transform_indices = @transform_6, window_bounds = array<i64: 1, 512>}, {transform_indices = @transform_7, window_bounds = array<i64: 512, 1024>}, {transform_indices = @transform_8, window_bounds = array<i64: 1, 1024>}, {transform_indices = @transform_9, window_bounds = array<i64: 8, 1024>}]} {
    %c0 = arith.constant 0 : index
    %c0_0 = arith.constant 0 : index
    %0 = vector.load %arg2[%c0, %c0_0] : memref<8x32xf32, #tpu.memory_space<vmem>>, vector<8x32xf32>
    %1 = arith.truncf %0 : vector<8x32xf32> to vector<8x32xbf16>
    %c0_1 = arith.constant 0 : index
    %c0_2 = arith.constant 0 : index
    %2 = vector.load %arg3[%c0_1, %c0_2] : memref<32x512xbf16, #tpu.memory_space<vmem>>, vector<32x512xbf16>
    %cst = arith.constant dense<0.000000e+00> : vector<8x512xf32>
    %3 = tpu.matmul %1, %2, %cst {dimension_numbers = #tpu.dot_dimension_numbers<[1], [0], [0], [1], [0, 0, 1, 1], [], []>} : vector<8x32xbf16>, vector<32x512xbf16>, vector<8x512xf32> -> vector<8x512xf32>
    %c0_3 = arith.constant 0 : index
    %c0_4 = arith.constant 0 : index
    %4 = vector.load %arg4[%c0_3, %c0_4] : memref<1x512xf32, #tpu.memory_space<vmem>>, vector<1x512xf32>
    %5 = vector.broadcast %4 : vector<1x512xf32> to vector<8x512xf32>
    %6 = arith.addf %3, %5 : vector<8x512xf32>
    %cst_5 = arith.constant 0.000000e+00 : f32
    %7 = vector.broadcast %cst_5 : f32 to vector<8x512xf32>
    %8 = arith.cmpf ogt, %6, %7 : vector<8x512xf32>
    %cst_6 = arith.constant 2.000000e-01 : f32
    %9 = vector.broadcast %cst_6 : f32 to vector<8x512xf32>
    %10 = arith.mulf %9, %6 : vector<8x512xf32>
    %11 = arith.select %8, %6, %10 : vector<8x512xi1>, vector<8x512xf32>
    %12 = arith.truncf %11 : vector<8x512xf32> to vector<8x512xbf16>
    %c0_7 = arith.constant 0 : index
    %c0_8 = arith.constant 0 : index
    %13 = vector.load %arg5[%c0_7, %c0_8] : memref<512x512xbf16, #tpu.memory_space<vmem>>, vector<512x512xbf16>
    %cst_9 = arith.constant dense<0.000000e+00> : vector<8x512xf32>
    %14 = tpu.matmul %12, %13, %cst_9 {dimension_numbers = #tpu.dot_dimension_numbers<[1], [0], [0], [1], [0, 0, 1, 1], [], []>} : vector<8x512xbf16>, vector<512x512xbf16>, vector<8x512xf32> -> vector<8x512xf32>
    %c0_10 = arith.constant 0 : index
    %c0_11 = arith.constant 0 : index
    %15 = vector.load %arg6[%c0_10, %c0_11] : memref<1x512xf32, #tpu.memory_space<vmem>>, vector<1x512xf32>
    %16 = vector.broadcast %15 : vector<1x512xf32> to vector<8x512xf32>
    %17 = arith.addf %14, %16 : vector<8x512xf32>
    %c0_12 = arith.constant 0 : index
    %c0_13 = arith.constant 0 : index
    %18 = vector.load %arg7[%c0_12, %c0_13] : memref<1x512xf32, #tpu.memory_space<vmem>>, vector<1x512xf32>
    %19 = vector.broadcast %18 : vector<1x512xf32> to vector<8x512xf32>
    %20 = arith.mulf %17, %19 : vector<8x512xf32>
    %c0_14 = arith.constant 0 : index
    %c0_15 = arith.constant 0 : index
    %21 = vector.load %arg8[%c0_14, %c0_15] : memref<1x512xf32, #tpu.memory_space<vmem>>, vector<1x512xf32>
    %22 = vector.broadcast %21 : vector<1x512xf32> to vector<8x512xf32>
    %23 = arith.addf %20, %22 : vector<8x512xf32>
    %cst_16 = arith.constant 0.000000e+00 : f32
    %24 = vector.broadcast %cst_16 : f32 to vector<8x512xf32>
    %25 = arith.cmpf ogt, %23, %24 : vector<8x512xf32>
    %cst_17 = arith.constant 2.000000e-01 : f32
    %26 = vector.broadcast %cst_17 : f32 to vector<8x512xf32>
    %27 = arith.mulf %26, %23 : vector<8x512xf32>
    %28 = arith.select %25, %23, %27 : vector<8x512xi1>, vector<8x512xf32>
    %29 = arith.truncf %28 : vector<8x512xf32> to vector<8x512xbf16>
    %c0_18 = arith.constant 0 : index
    %c0_19 = arith.constant 0 : index
    %30 = vector.load %arg9[%c0_18, %c0_19] : memref<512x1024xbf16, #tpu.memory_space<vmem>>, vector<512x1024xbf16>
    %cst_20 = arith.constant dense<0.000000e+00> : vector<8x1024xf32>
    %31 = tpu.matmul %29, %30, %cst_20 {dimension_numbers = #tpu.dot_dimension_numbers<[1], [0], [0], [1], [0, 0, 1, 1], [], []>} : vector<8x512xbf16>, vector<512x1024xbf16>, vector<8x1024xf32> -> vector<8x1024xf32>
    %c0_21 = arith.constant 0 : index
    %c0_22 = arith.constant 0 : index
    %32 = vector.load %arg10[%c0_21, %c0_22] : memref<1x1024xf32, #tpu.memory_space<vmem>>, vector<1x1024xf32>
    %33 = vector.broadcast %32 : vector<1x1024xf32> to vector<8x1024xf32>
    %34 = arith.addf %31, %33 : vector<8x1024xf32>
    %35 = math.tanh %34 : vector<8x1024xf32>
    %c0_23 = arith.constant 0 : index
    %c0_24 = arith.constant 0 : index
    %36 = vector.load %arg11[%c0_23, %c0_24] : memref<8x1024xf32, #tpu.memory_space<vmem>>, vector<8x1024xf32>
    tpu.vector_store %arg11[%c0_23, %c0_24], %35 {strides = array<i32>} : memref<8x1024xf32, #tpu.memory_space<vmem>>, vector<8x1024xf32>,
    return
  }
  func.func @transform_0(%arg0: i32, %arg1: i32) -> (i32, i32) {
    %c0_i32 = arith.constant 0 : i32
    %c0_i32_0 = arith.constant 0 : i32
    return %arg0, %c0_i32 : i32, i32
  }
  func.func @transform_1(%arg0: i32, %arg1: i32) -> (i32, i32) {
    %c0_i32 = arith.constant 0 : i32
    %c0_i32_0 = arith.constant 0 : i32
    %c0_i32_1 = arith.constant 0 : i32
    return %c0_i32, %c0_i32_0 : i32, i32
  }
  func.func @transform_2(%arg0: i32, %arg1: i32) -> (i32, i32) {
    %c0_i32 = arith.constant 0 : i32
    %c0_i32_0 = arith.constant 0 : i32
    %c0_i32_1 = arith.constant 0 : i32
    return %c0_i32, %c0_i32_0 : i32, i32
  }
  func.func @transform_3(%arg0: i32, %arg1: i32) -> (i32, i32) {
    %c0_i32 = arith.constant 0 : i32
    %c0_i32_0 = arith.constant 0 : i32
    %c0_i32_1 = arith.constant 0 : i32
    return %c0_i32, %c0_i32_0 : i32, i32
  }
  func.func @transform_4(%arg0: i32, %arg1: i32) -> (i32, i32) {
    %c0_i32 = arith.constant 0 : i32
    %c0_i32_0 = arith.constant 0 : i32
    %c0_i32_1 = arith.constant 0 : i32
    return %c0_i32, %c0_i32_0 : i32, i32
  }
  func.func @transform_5(%arg0: i32, %arg1: i32) -> (i32, i32) {
    %c0_i32 = arith.constant 0 : i32
    %c0_i32_0 = arith.constant 0 : i32
    %c0_i32_1 = arith.constant 0 : i32
    return %c0_i32, %c0_i32_0 : i32, i32
  }
  func.func @transform_6(%arg0: i32, %arg1: i32) -> (i32, i32) {
    %c0_i32 = arith.constant 0 : i32
    %c0_i32_0 = arith.constant 0 : i32
    %c0_i32_1 = arith.constant 0 : i32
    return %c0_i32, %c0_i32_0 : i32, i32
  }
  func.func @transform_7(%arg0: i32, %arg1: i32) -> (i32, i32) {
    %c0_i32 = arith.constant 0 : i32
    %c0_i32_0 = arith.constant 0 : i32
    return %c0_i32, %arg1 : i32, i32
  }
  func.func @transform_8(%arg0: i32, %arg1: i32) -> (i32, i32) {
    %c0_i32 = arith.constant 0 : i32
    %c0_i32_0 = arith.constant 0 : i32
    return %c0_i32, %arg1 : i32, i32
  }
  func.func @transform_9(%arg0: i32, %arg1: i32) -> (i32, i32) {
    %c0_i32 = arith.constant 0 : i32
    return %arg0, %arg1 : i32, i32
  }
}

module attributes {stable_mosaic.version = 11 : i64} {
  func.func @_stage_a_kernel(%arg0: i32, %arg1: memref<8x32xf32, #tpu.memory_space<vmem>>, %arg2: memref<32x512xbf16, #tpu.memory_space<vmem>>, %arg3: memref<1x512xf32, #tpu.memory_space<vmem>>, %arg4: memref<512x512xbf16, #tpu.memory_space<vmem>>, %arg5: memref<1x512xf32, #tpu.memory_space<vmem>>, %arg6: memref<8x512xf32, #tpu.memory_space<vmem>>) attributes {dimension_semantics = [#tpu.dimension_semantics<parallel>], iteration_bounds = array<i64: 1>, scalar_prefetch = 0 : i64, scratch_operands = 0 : i64, tpu.core_type = #tpu.core_type<tc>, window_params = [{transform_indices = @transform_0, window_bounds = array<i64: 8, 32>}, {pipeline_mode = #tpu.pipeline_mode<synchronous>, transform_indices = @transform_1, window_bounds = array<i64: 32, 512>}, {pipeline_mode = #tpu.pipeline_mode<synchronous>, transform_indices = @transform_2, window_bounds = array<i64: 1, 512>}, {pipeline_mode = #tpu.pipeline_mode<synchronous>, transform_indices = @transform_3, window_bounds = array<i64: 512, 512>}, {pipeline_mode = #tpu.pipeline_mode<synchronous>, transform_indices = @transform_4, window_bounds = array<i64: 1, 512>}, {transform_indices = @transform_5, window_bounds = array<i64: 8, 512>}]} {
    %c0 = arith.constant 0 : index
    %c0_0 = arith.constant 0 : index
    %0 = vector.load %arg1[%c0, %c0_0] : memref<8x32xf32, #tpu.memory_space<vmem>>, vector<8x32xf32>
    %1 = arith.truncf %0 : vector<8x32xf32> to vector<8x32xbf16>
    %c0_1 = arith.constant 0 : index
    %c0_2 = arith.constant 0 : index
    %2 = vector.load %arg2[%c0_1, %c0_2] : memref<32x512xbf16, #tpu.memory_space<vmem>>, vector<32x512xbf16>
    %cst = arith.constant dense<0.000000e+00> : vector<8x512xf32>
    %3 = tpu.matmul %1, %2, %cst {dimension_numbers = #tpu.dot_dimension_numbers<[1], [0], [0], [1], [0, 0, 1, 1], [], []>} : vector<8x32xbf16>, vector<32x512xbf16>, vector<8x512xf32> -> vector<8x512xf32>
    %c0_3 = arith.constant 0 : index
    %c0_4 = arith.constant 0 : index
    %4 = vector.load %arg3[%c0_3, %c0_4] : memref<1x512xf32, #tpu.memory_space<vmem>>, vector<1x512xf32>
    %5 = vector.broadcast %4 : vector<1x512xf32> to vector<8x512xf32>
    %6 = arith.addf %3, %5 : vector<8x512xf32>
    %cst_5 = arith.constant 0.000000e+00 : f32
    %7 = vector.broadcast %cst_5 : f32 to vector<8x512xf32>
    %8 = arith.cmpf ogt, %6, %7 : vector<8x512xf32>
    %cst_6 = arith.constant 2.000000e-01 : f32
    %9 = vector.broadcast %cst_6 : f32 to vector<8x512xf32>
    %10 = arith.mulf %9, %6 : vector<8x512xf32>
    %11 = arith.select %8, %6, %10 : vector<8x512xi1>, vector<8x512xf32>
    %12 = arith.truncf %11 : vector<8x512xf32> to vector<8x512xbf16>
    %c0_7 = arith.constant 0 : index
    %c0_8 = arith.constant 0 : index
    %13 = vector.load %arg4[%c0_7, %c0_8] : memref<512x512xbf16, #tpu.memory_space<vmem>>, vector<512x512xbf16>
    %cst_9 = arith.constant dense<0.000000e+00> : vector<8x512xf32>
    %14 = tpu.matmul %12, %13, %cst_9 {dimension_numbers = #tpu.dot_dimension_numbers<[1], [0], [0], [1], [0, 0, 1, 1], [], []>} : vector<8x512xbf16>, vector<512x512xbf16>, vector<8x512xf32> -> vector<8x512xf32>
    %c0_10 = arith.constant 0 : index
    %c0_11 = arith.constant 0 : index
    %15 = vector.load %arg5[%c0_10, %c0_11] : memref<1x512xf32, #tpu.memory_space<vmem>>, vector<1x512xf32>
    %16 = vector.broadcast %15 : vector<1x512xf32> to vector<8x512xf32>
    %17 = arith.addf %14, %16 : vector<8x512xf32>
    %c8_i32 = arith.constant 8 : i32
    %18 = arith.muli %arg0, %c8_i32 : i32
    %19 = tpu.iota {dimensions = array<i32: 0>} : vector<8x1xi32>
    %20 = vector.broadcast %18 : i32 to vector<8x1xi32>
    %21 = arith.addi %20, %19 : vector<8x1xi32>
    %c2_i32 = arith.constant 2 : i32
    %22 = vector.broadcast %c2_i32 : i32 to vector<8x1xi32>
    %23 = arith.cmpi slt, %21, %22 : vector<8x1xi32>
    %24 = arith.extui %23 : vector<8x1xi1> to vector<8x1xi32>
    %25 = arith.sitofp %24 : vector<8x1xi32> to vector<8x1xf32>
    %26 = vector.broadcast %25 : vector<8x1xf32> to vector<8x512xf32>
    %27 = arith.mulf %17, %26 : vector<8x512xf32>
    %cst_12 = arith.constant dense<0.000000e+00> : vector<512xf32>
    %28 = vector.multi_reduction <add>, %27, %cst_12 [0] : vector<8x512xf32> to vector<512xf32>
    %29 = vector.shape_cast %28 : vector<512xf32> to vector<1x512xf32>
    %30 = arith.mulf %27, %17 : vector<8x512xf32>
    %cst_13 = arith.constant dense<0.000000e+00> : vector<512xf32>
    %31 = vector.multi_reduction <add>, %30, %cst_13 [0] : vector<8x512xf32> to vector<512xf32>
    %32 = vector.shape_cast %31 : vector<512xf32> to vector<1x512xf32>
    %cst_14 = arith.constant 0.000000e+00 : f32
    %33 = vector.broadcast %cst_14 : f32 to vector<6x512xf32>
    %34 = tpu.concatenate %29, %32, %33 in 0 : vector<1x512xf32>, vector<1x512xf32>, vector<6x512xf32> -> vector<8x512xf32>
    %c0_15 = arith.constant 0 : index
    %c0_16 = arith.constant 0 : index
    %35 = vector.load %arg6[%c0_15, %c0_16] : memref<8x512xf32, #tpu.memory_space<vmem>>, vector<8x512xf32>
    tpu.vector_store %arg6[%c0_15, %c0_16], %34 {strides = array<i32>} : memref<8x512xf32, #tpu.memory_space<vmem>>, vector<8x512xf32>,
    return
  }
  func.func @transform_0(%arg0: i32) -> (i32, i32) {
    %c0_i32 = arith.constant 0 : i32
    %c0_i32_0 = arith.constant 0 : i32
    return %arg0, %c0_i32 : i32, i32
  }
  func.func @transform_1(%arg0: i32) -> (i32, i32) {
    %c0_i32 = arith.constant 0 : i32
    %c0_i32_0 = arith.constant 0 : i32
    %c0_i32_1 = arith.constant 0 : i32
    return %c0_i32, %c0_i32_0 : i32, i32
  }
  func.func @transform_2(%arg0: i32) -> (i32, i32) {
    %c0_i32 = arith.constant 0 : i32
    %c0_i32_0 = arith.constant 0 : i32
    %c0_i32_1 = arith.constant 0 : i32
    return %c0_i32, %c0_i32_0 : i32, i32
  }
  func.func @transform_3(%arg0: i32) -> (i32, i32) {
    %c0_i32 = arith.constant 0 : i32
    %c0_i32_0 = arith.constant 0 : i32
    %c0_i32_1 = arith.constant 0 : i32
    return %c0_i32, %c0_i32_0 : i32, i32
  }
  func.func @transform_4(%arg0: i32) -> (i32, i32) {
    %c0_i32 = arith.constant 0 : i32
    %c0_i32_0 = arith.constant 0 : i32
    %c0_i32_1 = arith.constant 0 : i32
    return %c0_i32, %c0_i32_0 : i32, i32
  }
  func.func @transform_5(%arg0: i32) -> (i32, i32) {
    %c0_i32 = arith.constant 0 : i32
    %c0_i32_0 = arith.constant 0 : i32
    return %arg0, %c0_i32 : i32, i32
  }
}

</mosaic_0001>

<llo_original>
// kernel: decoder_forward.2
$region0: #{decoder_forward.2}
  #allocation0 [shape = 'u32[]', space=smem, size = 0x4, offset = 0x4, fixed_abs, tag = 'smem constant byte address 0x4 - core index']
  #allocation1 [shape = 'u32[144,128]{1,0:T(1,128)}', space=vmem, size = 0x12000, scoped, tag = 'internal scratch']
  %s0 = inlined_call_operand.vmem [shape: f32[8,32], index: 0, kind: input, shape index: {}]
  %s1 = inlined_call_operand.hbm [shape: bf16[32,512], index: 1, kind: input, shape index: {}]
  %s2 = inlined_call_operand.hbm [shape: f32[1,512], index: 2, kind: input, shape index: {}]
  %s3 = inlined_call_operand.hbm [shape: bf16[512,512], index: 3, kind: input, shape index: {}]
  %s4 = inlined_call_operand.hbm [shape: f32[1,512], index: 4, kind: input, shape index: {}]
  %s5 = inlined_call_operand.vmem [shape: f32[8,512], index: 5, kind: output, shape index: {}]
  %s6 = sld [smem:[#allocation0]]
  $region46: #{decoder_forward.2} parent=0
    _
  %s8 = ssub.s32 1, %s6
  %s9 = scalar_select 0, %s8, %s6
  $region1: #{decoder_forward.2} parent=0
    #allocation2 [shape = 'u8[32768]{0}', space=vmem, size = 0x8000, scoped, tag = 'input window, operand 1, single buffered']
    #allocation3 [shape = 's32[1]{0}', space=sflag, size = 0x4, scoped, tag = 'scoped memory for decoder_forward.2']
    #allocation4 [shape = 'u8[2048]{0}', space=vmem, size = 0x800, scoped, tag = 'input window, operand 2, single buffered']
    #allocation5 [shape = 's32[1]{0}', space=sflag, size = 0x4, scoped, tag = 'scoped memory for decoder_forward.2']
    #allocation6 [shape = 'u8[524288]{0}', space=vmem, size = 0x80000, scoped, tag = 'input window, operand 3, single buffered']
    #allocation7 [shape = 'u8[2048]{0}', space=vmem, size = 0x800, scoped, tag = 'input window, operand 4, single buffered']
    #allocation8 [shape = 's32[1]{0}', space=sflag, size = 0x4, scoped, tag = 'scoped memory for decoder_forward.2']
    %10 = vsyncpa [#allocation3], 0
    %11 = vsyncpa [#allocation5], 0
    %12 = vsyncpa [#allocation8], 0
    // Predicated region
    $region2: #{decoder_forward.2} parent=1 // pred_check
      _
    $region3: #{decoder_forward.2} parent=1 // pred_check_branch
      %14 = sbr.rel (0) target = $region5
    $region4: #{decoder_forward.2} parent=1 // pred_region
      _
    $region5: #{decoder_forward.2} parent=1 // pred_fallthru
      _
    // Predicated region
    $region6: #{decoder_forward.2} parent=1 // pred_check
      _
    $region7: #{decoder_forward.2} parent=1 // pred_check_branch
      %16 = sbr.rel (0) target = $region9
    $region8: #{decoder_forward.2} parent=1 // pred_region
      %s18 = ssub.s32 1024, 1024
      %19 = vsyncadd [#allocation3], %s18
      %s20 = sshll.u32 [#allocation2], 4
      %s21 = int_to_ptr.vmem [resolvable:$true] %s20
      %26 = dma.hbm_to_vmem [thread:$0]  %s1, 1024, %s21, [#allocation3], 256, 256, 16
    $region9: #{decoder_forward.2} parent=1 // pred_fallthru
      _
    // Predicated region
    $region10: #{decoder_forward.2} parent=1 // pred_check
      _
    $region11: #{decoder_forward.2} parent=1 // pred_check_branch
      %28 = sbr.rel (0) target = $region13
    $region12: #{decoder_forward.2} parent=1 // pred_region
      %s30 = ssub.s32 64, 64
      %31 = vsyncadd [#allocation5], %s30
      %s33 = sshll.u32 [#allocation4], 4
      %s34 = int_to_ptr.vmem [resolvable:$true] %s33
      %36 = dma.hbm_to_vmem [thread:$0]  %s2, 64, %s34, [#allocation5]
    $region13: #{decoder_forward.2} parent=1 // pred_fallthru
      _
    // Predicated region
    $region14: #{decoder_forward.2} parent=1 // pred_check
      _
    $region15: #{decoder_forward.2} parent=1 // pred_check_branch
      %38 = sbr.rel (0) target = $region17
    $region16: #{decoder_forward.2} parent=1 // pred_region
      %s40 = ssub.s32 16384, 16384
      %41 = vsyncadd [#allocation5], %s40
      %s42 = sshll.u32 [#allocation6], 4
      %s43 = int_to_ptr.vmem [resolvable:$true] %s42
      %48 = dma.hbm_to_vmem [thread:$0]  %s3, 16384, %s43, [#allocation5], 256, 256, 16
    $region17: #{decoder_forward.2} parent=1 // pred_fallthru
      _
    // Predicated region
    $region18: #{decoder_forward.2} parent=1 // pred_check
      _
    $region19: #{decoder_forward.2} parent=1 // pred_check_branch
      %50 = sbr.rel (0) target = $region21
    $region20: #{decoder_forward.2} parent=1 // pred_region
      %s52 = ssub.s32 64, 64
      %53 = vsyncadd [#allocation8], %s52
      %s55 = sshll.u32 [#allocation7], 4
      %s56 = int_to_ptr.vmem [resolvable:$true] %s55
      %58 = dma.hbm_to_vmem [thread:$0]  %s4, 64, %s56, [#allocation8]
    $region21: #{decoder_forward.2} parent=1 // pred_fallthru
      _
    // Predicated region
    $region22: #{decoder_forward.2} parent=1 // pred_check
      _
    $region23: #{decoder_forward.2} parent=1 // pred_check_branch
      %60 = sbr.rel (0) target = $region25
    $region24: #{decoder_forward.2} parent=1 // pred_region
      %61 = dma.done [#allocation3], 1024
    $region25: #{decoder_forward.2} parent=1 // pred_fallthru
      _
    // Predicated region
    $region26: #{decoder_forward.2} parent=1 // pred_check
      _
    $region27: #{decoder_forward.2} parent=1 // pred_check_branch
      %63 = sbr.rel (0) target = $region29
    $region28: #{decoder_forward.2} parent=1 // pred_region
      %64 = dma.done [#allocation5], 64
    $region29: #{decoder_forward.2} parent=1 // pred_fallthru
      _
    // Predicated region
    $region30: #{decoder_forward.2} parent=1 // pred_check
      _
    $region31: #{decoder_forward.2} parent=1 // pred_check_branch
      %66 = sbr.rel (0) target = $region33
    $region32: #{decoder_forward.2} parent=1 // pred_region
      %67 = dma.done [#allocation5], 16384
    $region33: #{decoder_forward.2} parent=1 // pred_fallthru
      _
    // Predicated region
    $region34: #{decoder_forward.2} parent=1 // pred_check
      _
    $region35: #{decoder_forward.2} parent=1 // pred_check_branch
      %69 = sbr.rel (0) target = $region37
    $region36: #{decoder_forward.2} parent=1 // pred_region
      %70 = dma.done [#allocation8], 64
    $region37: #{decoder_forward.2} parent=1 // pred_fallthru
      _
    %v72 = vld [vmem:[%s0] sm:$0xff]
    %v73 = vpack.c.bf16 %v72, %v72
    %v74 = vld [vmem:[#allocation2] sm:$0xff]
    %v75 = vld [vmem:[#allocation2 + $0x8] sm:$0xff]
    %v76 = vld [vmem:[#allocation2 + $0x10] sm:$0xff]
    %v77 = vld [vmem:[#allocation2 + $0x18] sm:$0xff]
    %v78 = vld [vmem:[#allocation2 + $0x20] sm:$0xff]
    %v79 = vld [vmem:[#allocation2 + $0x28] sm:$0xff]
    %v80 = vld [vmem:[#allocation2 + $0x30] sm:$0xff]
    %v81 = vld [vmem:[#allocation2 + $0x38] sm:$0xff]
    %v82 = vld [vmem:[#allocation4] sm:$0xf]
    %v84 = vlaneseq
    %v85 = vshrl.u32 %v84, 7
    %v86 = vsub.s32 0, %v85
    %v87 = vrot.slane %v82, %v86
    %v88 = vlaneseq
    %v89 = vshrl.u32 %v88, 7
    %v90 = vsub.s32 1, %v89
    %v91 = vrot.slane %v82, %v90
    %v92 = vlaneseq
    %v93 = vshrl.u32 %v92, 7
    %v94 = vsub.s32 2, %v93
    %v95 = vrot.slane %v82, %v94
    %v96 = vlaneseq
    %v97 = vshrl.u32 %v96, 7
    %v98 = vsub.s32 3, %v97
    %v99 = vrot.slane %v82, %v98
    %v112 = vunpack.c.l.b16 %v74
    %v113 = vunpack.c.h.b16 %v74
    %v114 = vunpack.c.l.b16 %v75
    %v115 = vunpack.c.h.b16 %v75
    %v116 = vunpack.c.l.b16 %v76
    %v117 = vunpack.c.h.b16 %v76
    %v118 = vunpack.c.l.b16 %v77
    %v119 = vunpack.c.h.b16 %v77
    %v120 = vunpack.c.l.b16 %v78
    %v121 = vunpack.c.h.b16 %v78
    %v122 = vunpack.c.l.b16 %v79
    %v123 = vunpack.c.h.b16 %v79
    %v124 = vunpack.c.l.b16 %v80
    %v125 = vunpack.c.h.b16 %v80
    %v126 = vunpack.c.l.b16 %v81
    %v127 = vunpack.c.h.b16 %v81
    %v128 = vpack.c.b16 %v116, %v112
    %v129 = vpack.c.b16 %v117, %v113
    %v130 = vpack.c.b16 %v118, %v114
    %v131 = vpack.c.b16 %v119, %v115
    %v132 = vpack.c.b16 %v124, %v120
    %v133 = vpack.c.b16 %v125, %v121
    %v134 = vpack.c.b16 %v126, %v122
    %v135 = vpack.c.b16 %v127, %v123
    %vm144 = vcmask 261120
    %v146 = vsel %vm144, %v73, 0
    %148 = vmatprep.subr.bf16.mxu0 %v129
    %149 = vmatpush1.bf16.msra.mxu0 %v128
    %150 = vmatprep.subr.bf16.mxu0 %v133
    %151 = vmatpush1.bf16.msra.mxu0 %v132
    %152 = vmatprep.subr.bf16.mxu0 0
    %153 = vmatpush1.bf16.msra.mxu0 0
    %154 = vmatprep.subr.bf16.mxu0 0
    %155 = vmatpush1.bf16.msra.mxu0 0
    %156 = vmatprep.subr.bf16.mxu0 0
    %157 = vmatpush1.bf16.msra.mxu0 0
    %158 = vmatprep.subr.bf16.mxu0 0
    %159 = vmatpush1.bf16.msra.mxu0 0
    %160 = vmatprep.subr.bf16.mxu0 0
    %161 = vmatpush1.bf16.msra.mxu0 0
    %162 = vmatprep.subr.bf16.mxu0 0
    %163 = vmatpush1.bf16.msra.mxu0 0
    %164 = vmatprep.subr.bf16.mxu0 0
    %165 = vmatpush1.bf16.msra.mxu0 0
    %166 = vmatprep.subr.bf16.mxu0 0
    %167 = vmatpush1.bf16.msra.mxu0 0
    %168 = vmatprep.subr.bf16.mxu0 0
    %169 = vmatpush1.bf16.msra.mxu0 0
    %170 = vmatprep.subr.bf16.mxu0 0
    %171 = vmatpush1.bf16.msra.mxu0 0
    %172 = vmatprep.subr.bf16.mxu0 0
    %173 = vmatpush1.bf16.msra.mxu0 0
    %174 = vmatprep.subr.bf16.mxu0 0
    %175 = vmatpush1.bf16.msra.mxu0 0
    %176 = vmatprep.subr.bf16.mxu0 0
    %177 = vmatpush1.bf16.msra.mxu0 0
    %178 = vmatprep.subr.bf16.mxu0 0
    %179 = vmatpush1.bf16.msra.mxu0 0
    %180 = vmatprep.mubr.bf16.mxu0 0
    %181 = vmatmul.mubr.bf16.gmra.mrb[0].mxu0 %v146
    %v182 = vpop.f32.mrb[0].mxu0
    %v183 = vadd.f32 %v87, %v182
    %v184 = vpop.f32.mrb[0].mxu0
    %v185 = vadd.f32 %v91, %v184
    %v186 = vpop.f32.mrb[0].mxu0
    %v187 = vpop.f32.mrb[0].mxu0
    %188 = vdwg.mxu0
    %189 = vmatprep.subr.bf16.mxu0 %v131
    %190 = vmatpush1.bf16.msra.mxu0 %v130
    %191 = vmatprep.subr.bf16.mxu0 %v135
    %192 = vmatpush1.bf16.msra.mxu0 %v134
    %193 = vmatprep.subr.bf16.mxu0 0
    %194 = vmatpush1.bf16.msra.mxu0 0
    %195 = vmatprep.subr.bf16.mxu0 0
    %196 = vmatpush1.bf16.msra.mxu0 0
    %197 = vmatprep.subr.bf16.mxu0 0
    %198 = vmatpush1.bf16.msra.mxu0 0
    %199 = vmatprep.subr.bf16.mxu0 0
    %200 = vmatpush1.bf16.msra.mxu0 0
    %201 = vmatprep.subr.bf16.mxu0 0
    %202 = vmatpush1.bf16.msra.mxu0 0
    %203 = vmatprep.subr.bf16.mxu0 0
    %204 = vmatpush1.bf16.msra.mxu0 0
    %205 = vmatprep.subr.bf16.mxu0 0
    %206 = vmatpush1.bf16.msra.mxu0 0
    %207 = vmatprep.subr.bf16.mxu0 0
    %208 = vmatpush1.bf16.msra.mxu0 0
    %209 = vmatprep.subr.bf16.mxu0 0
    %210 = vmatpush1.bf16.msra.mxu0 0
    %211 = vmatprep.subr.bf16.mxu0 0
    %212 = vmatpush1.bf16.msra.mxu0 0
    %213 = vmatprep.subr.bf16.mxu0 0
    %214 = vmatpush1.bf16.msra.mxu0 0
    %215 = vmatprep.subr.bf16.mxu0 0
    %216 = vmatpush1.bf16.msra.mxu0 0
    %217 = vmatprep.subr.bf16.mxu0 0
    %218 = vmatpush1.bf16.msra.mxu0 0
    %219 = vmatprep.subr.bf16.mxu0 0
    %220 = vmatpush1.bf16.msra.mxu0 0
    %221 = vmatprep.mubr.bf16.mxu0 0
    %222 = vmatmul.mubr.bf16.gmra.mrb[0].mxu0 %v146
    %v223 = vpop.f32.mrb[0].mxu0
    %v224 = vadd.f32 %v95, %v223
    %v225 = vpop.f32.mrb[0].mxu0
    %v226 = vadd.f32 %v99, %v225
    %v227 = vpop.f32.mrb[0].mxu0
    %v228 = vpop.f32.mrb[0].mxu0
    %229 = vdwg.mxu0
    %vm230 = vcmp.gt.f32.partialorder %v183, 0.0
    %vm231 = vcmp.gt.f32.partialorder %v185, 0.0
    %vm232 = vcmp.gt.f32.partialorder %v224, 0.0
    %vm233 = vcmp.gt.f32.partialorder %v226, 0.0
    %v234 = vmul.f32 %v183, 0.2
    %v235 = vmul.f32 %v185, 0.2
    %v236 = vmul.f32 %v224, 0.2
    %v237 = vmul.f32 %v226, 0.2
    %v238 = vsel %vm230, %v183, %v234
    %v239 = vsel %vm231, %v185, %v235
    %v240 = vsel %vm232, %v224, %v236
    %v241 = vsel %vm233, %v226, %v237
    %v242 = vpack.c.bf16 %v238, %v238
    %v243 = vpack.c.bf16 %v239, %v239
    %v244 = vpack.c.bf16 %v240, %v240
    %v245 = vpack.c.bf16 %v241, %v241
    %v246 = vld [vmem:[#allocation6] sm:$0xff]
    %v247 = vld [vmem:[#allocation6 + $0x8] sm:$0xff]
    %v248 = vld [vmem:[#allocation6 + $0x10] sm:$0xff]
    %v249 = vld [vmem:[#allocation6 + $0x18] sm:$0xff]
    %v250 = vld [vmem:[#allocation6 + $0x20] sm:$0xff]
    %v251 = vld [vmem:[#allocation6 + $0x28] sm:$0xff]
    %v252 = vld [vmem:[#allocation6 + $0x30] sm:$0xff]
    %v253 = vld [vmem:[#allocation6 + $0x38] sm:$0xff]
    %v254 = vld [vmem:[#allocation6 + $0x40] sm:$0xff]
    %v255 = vld [vmem:[#allocation6 + $0x48] sm:$0xff]
    %v256 = vld [vmem:[#allocation6 + $0x50] sm:$0xff]
    %v257 = vld [vmem:[#allocation6 + $0x58] sm:$0xff]
    %v258 = vld [vmem:[#allocation6 + $0x60] sm:$0xff]
    %v259 = vld [vmem:[#allocation6 + $0x68] sm:$0xff]
    %v260 = vld [vmem:[#allocation6 + $0x70] sm:$0xff]
    %v261 = vld [vmem:[#allocation6 + $0x78] sm:$0xff]
    %v262 = vld [vmem:[#allocation6 + $0x80] sm:$0xff]
    %v263 = vld [vmem:[#allocation6 + $0x88] sm:$0xff]
    %v264 = vld [vmem:[#allocation6 + $0x90] sm:$0xff]
    %v265 = vld [vmem:[#allocation6 + $0x98] sm:$0xff]
    %v266 = vld [vmem:[#allocation6 + $0xa0] sm:$0xff]
    %v267 = vld [vmem:[#allocation6 + $0xa8] sm:$0xff]
    %v268 = vld [vmem:[#allocation6 + $0xb0] sm:$0xff]
    %v269 = vld [vmem:[#allocation6 + $0xb8] sm:$0xff]
    %v270 = vld [vmem:[#allocation6 + $0xc0] sm:$0xff]
    %v271 = vld [vmem:[#allocation6 + $0xc8] sm:$0xff]
    %v272 = vld [vmem:[#allocation6 + $0xd0] sm:$0xff]
    %v273 = vld [vmem:[#allocation6 + $0xd8] sm:$0xff]
    %v274 = vld [vmem:[#allocation6 + $0xe0] sm:$0xff]
    %v275 = vld [vmem:[#allocation6 + $0xe8] sm:$0xff]
    %v276 = vld [vmem:[#allocation6 + $0xf0] sm:$0xff]
    %v277 = vld [vmem:[#allocation6 + $0xf8] sm:$0xff]
    %v278 = vld [vmem:[#allocation6 + $0x100] sm:$0xff]
    %v279 = vld [vmem:[#allocation6 + $0x108] sm:$0xff]
    %v280 = vld [vmem:[#allocation6 + $0x110] sm:$0xff]
    %v281 = vld [vmem:[#allocation6 + $0x118] sm:$0xff]
    %v282 = vld [vmem:[#allocation6 + $0x120] sm:$0xff]
    %v283 = vld [vmem:[#allocation6 + $0x128] sm:$0xff]
    %v284 = vld [vmem:[#allocation6 + $0x130] sm:$0xff]
    %v285 = vld [vmem:[#allocation6 + $0x138] sm:$0xff]
    %v286 = vld [vmem:[#allocation6 + $0x140] sm:$0xff]
    %v287 = vld [vmem:[#allocation6 + $0x148] sm:$0xff]
    %v288 = vld [vmem:[#allocation6 + $0x150] sm:$0xff]
    %v289 = vld [vmem:[#allocation6 + $0x158] sm:$0xff]
    %v290 = vld [vmem:[#allocation6 + $0x160] sm:$0xff]
    %v291 = vld [vmem:[#allocation6 + $0x168] sm:$0xff]
    %v292 = vld [vmem:[#allocation6 + $0x170] sm:$0xff]
    %v293 = vld [vmem:[#allocation6 + $0x178] sm:$0xff]
    %v294 = vld [vmem:[#allocation6 + $0x180] sm:$0xff]
    %v295 = vld [vmem:[#allocation6 + $0x188] sm:$0xff]
    %v296 = vld [vmem:[#allocation6 + $0x190] sm:$0xff]
    %v297 = vld [vmem:[#allocation6 + $0x198] sm:$0xff]
    %v298 = vld [vmem:[#allocation6 + $0x1a0] sm:$0xff]
    %v299 = vld [vmem:[#allocation6 + $0x1a8] sm:$0xff]
    %v300 = vld [vmem:[#allocation6 + $0x1b0] sm:$0xff]
    %v301 = vld [vmem:[#allocation6 + $0x1b8] sm:$0xff]
    %v302 = vld [vmem:[#allocation6 + $0x1c0] sm:$0xff]
    %v303 = vld [vmem:[#allocation6 + $0x1c8] sm:$0xff]
    %v304 = vld [vmem:[#allocation6 + $0x1d0] sm:$0xff]
    %v305 = vld [vmem:[#allocation6 + $0x1d8] sm:$0xff]
    %v306 = vld [vmem:[#allocation6 + $0x1e0] sm:$0xff]
    %v307 = vld [vmem:[#allocation6 + $0x1e8] sm:$0xff]
    %v308 = vld [vmem:[#allocation6 + $0x1f0] sm:$0xff]
    %v309 = vld [vmem:[#allocation6 + $0x1f8] sm:$0xff]
    %v310 = vld [vmem:[#allocation6 + $0x200] sm:$0xff]
    %v311 = vld [vmem:[#allocation6 + $0x208] sm:$0xff]
    %v312 = vld [vmem:[#allocation6 + $0x210] sm:$0xff]
    %v313 = vld [vmem:[#allocation6 + $0x218] sm:$0xff]
    %v314 = vld [vmem:[#allocation6 + $0x220] sm:$0xff]
    %v315 = vld [vmem:[#allocation6 + $0x228] sm:$0xff]
    %v316 = vld [vmem:[#allocation6 + $0x230] sm:$0xff]
    %v317 = vld [vmem:[#allocation6 + $0x238] sm:$0xff]
    %v318 = vld [vmem:[#allocation6 + $0x240] sm:$0xff]
    %v319 = vld [vmem:[#allocation6 + $0x248] sm:$0xff]
    %v320 = vld [vmem:[#allocation6 + $0x250] sm:$0xff]
    %v321 = vld [vmem:[#allocation6 + $0x258] sm:$0xff]
    %v322 = vld [vmem:[#allocation6 + $0x260] sm:$0xff]
    %v323 = vld [vmem:[#allocation6 + $0x268] sm:$0xff]
    %v324 = vld [vmem:[#allocation6 + $0x270] sm:$0xff]
    %v325 = vld [vmem:[#allocation6 + $0x278] sm:$0xff]
    %v326 = vld [vmem:[#allocation6 + $0x280] sm:$0xff]
    %v327 = vld [vmem:[#allocation6 + $0x288] sm:$0xff]
    %v328 = vld [vmem:[#allocation6 + $0x290] sm:$0xff]
    %v329 = vld [vmem:[#allocation6 + $0x298] sm:$0xff]
    %v330 = vld [vmem:[#allocation6 + $0x2a0] sm:$0xff]
    %v331 = vld [vmem:[#allocation6 + $0x2a8] sm:$0xff]
    %v332 = vld [vmem:[#allocation6 + $0x2b0] sm:$0xff]
    %v333 = vld [vmem:[#allocation6 + $0x2b8] sm:$0xff]
    %v334 = vld [vmem:[#allocation6 + $0x2c0] sm:$0xff]
    %v335 = vld [vmem:[#allocation6 + $0x2c8] sm:$0xff]
    %v336 = vld [vmem:[#allocation6 + $0x2d0] sm:$0xff]
    %v337 = vld [vmem:[#allocation6 + $0x2d8] sm:$0xff]
    %v338 = vld [vmem:[#allocation6 + $0x2e0] sm:$0xff]
    %v339 = vld [vmem:[#allocation6 + $0x2e8] sm:$0xff]
    %v340 = vld [vmem:[#allocation6 + $0x2f0] sm:$0xff]
    %v341 = vld [vmem:[#allocation6 + $0x2f8] sm:$0xff]
    %v342 = vld [vmem:[#allocation6 + $0x300] sm:$0xff]
    %v343 = vld [vmem:[#allocation6 + $0x308] sm:$0xff]
    %v344 = vld [vmem:[#allocation6 + $0x310] sm:$0xff]
    %v345 = vld [vmem:[#allocation6 + $0x318] sm:$0xff]
    %v346 = vld [vmem:[#allocation6 + $0x320] sm:$0xff]
    %v347 = vld [vmem:[#allocation6 + $0x328] sm:$0xff]
    %v348 = vld [vmem:[#allocation6 + $0x330] sm:$0xff]
    %v349 = vld [vmem:[#allocation6 + $0x338] sm:$0xff]
    %v350 = vld [vmem:[#allocation6 + $0x340] sm:$0xff]
    %v351 = vld [vmem:[#allocation6 + $0x348] sm:$0xff]
    %v352 = vld [vmem:[#allocation6 + $0x350] sm:$0xff]
    %v353 = vld [vmem:[#allocation6 + $0x358] sm:$0xff]
    %v354 = vld [vmem:[#allocation6 + $0x360] sm:$0xff]
    %v355 = vld [vmem:[#allocation6 + $0x368] sm:$0xff]
    %v356 = vld [vmem:[#allocation6 + $0x370] sm:$0xff]
    %v357 = vld [vmem:[#allocation6 + $0x378] sm:$0xff]
    %v358 = vld [vmem:[#allocation6 + $0x380] sm:$0xff]
    %v359 = vld [vmem:[#allocation6 + $0x388] sm:$0xff]
    %v360 = vld [vmem:[#allocation6 + $0x390] sm:$0xff]
    %v361 = vld [vmem:[#allocation6 + $0x398] sm:$0xff]
    %v362 = vld [vmem:[#allocation6 + $0x3a0] sm:$0xff]
    %v363 = vld [vmem:[#allocation6 + $0x3a8] sm:$0xff]
    %v364 = vld [vmem:[#allocation6 + $0x3b0] sm:$0xff]
    %v365 = vld [vmem:[#allocation6 + $0x3b8] sm:$0xff]
    %v366 = vld [vmem:[#allocation6 + $0x3c0] sm:$0xff]
    %v367 = vld [vmem:[#allocation6 + $0x3c8] sm:$0xff]
    %v368 = vld [vmem:[#allocation6 + $0x3d0] sm:$0xff]
    %v369 = vld [vmem:[#allocation6 + $0x3d8] sm:$0xff]
    %v370 = vld [vmem:[#allocation6 + $0x3e0] sm:$0xff]
    %v371 = vld [vmem:[#allocation6 + $0x3e8] sm:$0xff]
    %v372 = vld [vmem:[#allocation6 + $0x3f0] sm:$0xff]
    %v373 = vld [vmem:[#allocation6 + $0x3f8] sm:$0xff]
    %v374 = vld [vmem:[#allocation7] sm:$0xf]
    %v376 = vlaneseq
    %v377 = vshrl.u32 %v376, 7
    %v378 = vsub.s32 0, %v377
    %v379 = vrot.slane %v374, %v378
    %v380 = vlaneseq
    %v381 = vshrl.u32 %v380, 7
    %v382 = vsub.s32 1, %v381
    %v383 = vrot.slane %v374, %v382
    %v384 = vlaneseq
    %v385 = vshrl.u32 %v384, 7
    %v386 = vsub.s32 2, %v385
    %v387 = vrot.slane %v374, %v386
    %v388 = vlaneseq
    %v389 = vshrl.u32 %v388, 7
    %v390 = vsub.s32 3, %v389
    %v391 = vrot.slane %v374, %v390
    %v524 = vunpack.c.l.b16 %v246
    %v525 = vunpack.c.h.b16 %v246
    %v526 = vunpack.c.l.b16 %v247
    %v527 = vunpack.c.h.b16 %v247
    %v528 = vunpack.c.l.b16 %v248
    %v529 = vunpack.c.h.b16 %v248
    %v530 = vunpack.c.l.b16 %v249
    %v531 = vunpack.c.h.b16 %v249
    %v532 = vunpack.c.l.b16 %v250
    %v533 = vunpack.c.h.b16 %v250
    %v534 = vunpack.c.l.b16 %v251
    %v535 = vunpack.c.h.b16 %v251
    %v536 = vunpack.c.l.b16 %v252
    %v537 = vunpack.c.h.b16 %v252
    %v538 = vunpack.c.l.b16 %v253
    %v539 = vunpack.c.h.b16 %v253
    %v540 = vunpack.c.l.b16 %v254
    %v541 = vunpack.c.h.b16 %v254
    %v542 = vunpack.c.l.b16 %v255
    %v543 = vunpack.c.h.b16 %v255
    %v544 = vunpack.c.l.b16 %v256
    %v545 = vunpack.c.h.b16 %v256
    %v546 = vunpack.c.l.b16 %v257
    %v547 = vunpack.c.h.b16 %v257
    %v548 = vunpack.c.l.b16 %v258
    %v549 = vunpack.c.h.b16 %v258
    %v550 = vunpack.c.l.b16 %v259
    %v551 = vunpack.c.h.b16 %v259
    %v552 = vunpack.c.l.b16 %v260
    %v553 = vunpack.c.h.b16 %v260
    %v554 = vunpack.c.l.b16 %v261
    %v555 = vunpack.c.h.b16 %v261
    %v556 = vunpack.c.l.b16 %v262
    %v557 = vunpack.c.h.b16 %v262
    %v558 = vunpack.c.l.b16 %v263
    %v559 = vunpack.c.h.b16 %v263
    %v560 = vunpack.c.l.b16 %v264
    %v561 = vunpack.c.h.b16 %v264
    %v562 = vunpack.c.l.b16 %v265
    %v563 = vunpack.c.h.b16 %v265
    %v564 = vunpack.c.l.b16 %v266
    %v565 = vunpack.c.h.b16 %v266
    %v566 = vunpack.c.l.b16 %v267
    %v567 = vunpack.c.h.b16 %v267
    %v568 = vunpack.c.l.b16 %v268
    %v569 = vunpack.c.h.b16 %v268
    %v570 = vunpack.c.l.b16 %v269
    %v571 = vunpack.c.h.b16 %v269
    %v572 = vunpack.c.l.b16 %v270
    %v573 = vunpack.c.h.b16 %v270
    %v574 = vunpack.c.l.b16 %v271
    %v575 = vunpack.c.h.b16 %v271
    %v576 = vunpack.c.l.b16 %v272
    %v577 = vunpack.c.h.b16 %v272
    %v578 = vunpack.c.l.b16 %v273
    %v579 = vunpack.c.h.b16 %v273
    %v580 = vunpack.c.l.b16 %v274
    %v581 = vunpack.c.h.b16 %v274
    %v582 = vunpack.c.l.b16 %v275
    %v583 = vunpack.c.h.b16 %v275
    %v584 = vunpack.c.l.b16 %v276
    %v585 = vunpack.c.h.b16 %v276
    %v586 = vunpack.c.l.b16 %v277
    %v587 = vunpack.c.h.b16 %v277
    %v588 = vunpack.c.l.b16 %v278
    %v589 = vunpack.c.h.b16 %v278
    %v590 = vunpack.c.l.b16 %v279
    %v591 = vunpack.c.h.b16 %v279
    %v592 = vunpack.c.l.b16 %v280
    %v593 = vunpack.c.h.b16 %v280
    %v594 = vunpack.c.l.b16 %v281
    %v595 = vunpack.c.h.b16 %v281
    %v596 = vunpack.c.l.b16 %v282
    %v597 = vunpack.c.h.b16 %v282
    %v598 = vunpack.c.l.b16 %v283
    %v599 = vunpack.c.h.b16 %v283
    %v600 = vunpack.c.l.b16 %v284
    %v601 = vunpack.c.h.b16 %v284
    %v602 = vunpack.c.l.b16 %v285
    %v603 = vunpack.c.h.b16 %v285
    %v604 = vunpack.c.l.b16 %v286
    %v605 = vunpack.c.h.b16 %v286
    %v606 = vunpack.c.l.b16 %v287
    %v607 = vunpack.c.h.b16 %v287
    %v608 = vunpack.c.l.b16 %v288
    %v609 = vunpack.c.h.b16 %v288
    %v610 = vunpack.c.l.b16 %v289
    %v611 = vunpack.c.h.b16 %v289
    %v612 = vunpack.c.l.b16 %v290
    %v613 = vunpack.c.h.b16 %v290
    %v614 = vunpack.c.l.b16 %v291
    %v615 = vunpack.c.h.b16 %v291
    %v616 = vunpack.c.l.b16 %v292
    %v617 = vunpack.c.h.b16 %v292
    %v618 = vunpack.c.l.b16 %v293
    %v619 = vunpack.c.h.b16 %v293
    %v620 = vunpack.c.l.b16 %v294
    %v621 = vunpack.c.h.b16 %v294
    %v622 = vunpack.c.l.b16 %v295
    %v623 = vunpack.c.h.b16 %v295
    %v624 = vunpack.c.l.b16 %v296
    %v625 = vunpack.c.h.b16 %v296
    %v626 = vunpack.c.l.b16 %v297
    %v627 = vunpack.c.h.b16 %v297
    %v628 = vunpack.c.l.b16 %v298
    %v629 = vunpack.c.h.b16 %v298
    %v630 = vunpack.c.l.b16 %v299
    %v631 = vunpack.c.h.b16 %v299
    %v632 = vunpack.c.l.b16 %v300
    %v633 = vunpack.c.h.b16 %v300
    %v634 = vunpack.c.l.b16 %v301
    %v635 = vunpack.c.h.b16 %v301
    %v636 = vunpack.c.l.b16 %v302
    %v637 = vunpack.c.h.b16 %v302
    %v638 = vunpack.c.l.b16 %v303
    %v639 = vunpack.c.h.b16 %v303
    %v640 = vunpack.c.l.b16 %v304
    %v641 = vunpack.c.h.b16 %v304
    %v642 = vunpack.c.l.b16 %v305
    %v643 = vunpack.c.h.b16 %v305
    %v644 = vunpack.c.l.b16 %v306
    %v645 = vunpack.c.h.b16 %v306
    %v646 = vunpack.c.l.b16 %v307
    %v647 = vunpack.c.h.b16 %v307
    %v648 = vunpack.c.l.b16 %v308
    %v649 = vunpack.c.h.b16 %v308
    %v650 = vunpack.c.l.b16 %v309
    %v651 = vunpack.c.h.b16 %v309
    %v652 = vunpack.c.l.b16 %v310
    %v653 = vunpack.c.h.b16 %v310
    %v654 = vunpack.c.l.b16 %v311
    %v655 = vunpack.c.h.b16 %v311
    %v656 = vunpack.c.l.b16 %v312
    %v657 = vunpack.c.h.b16 %v312
    %v658 = vunpack.c.l.b16 %v313
    %v659 = vunpack.c.h.b16 %v313
    %v660 = vunpack.c.l.b16 %v314
    %v661 = vunpack.c.h.b16 %v314
    %v662 = vunpack.c.l.b16 %v315
    %v663 = vunpack.c.h.b16 %v315
    %v664 = vunpack.c.l.b16 %v316
    %v665 = vunpack.c.h.b16 %v316
    %v666 = vunpack.c.l.b16 %v317
    %v667 = vunpack.c.h.b16 %v317
    %v668 = vunpack.c.l.b16 %v318
    %v669 = vunpack.c.h.b16 %v318
    %v670 = vunpack.c.l.b16 %v319
    %v671 = vunpack.c.h.b16 %v319
    %v672 = vunpack.c.l.b16 %v320
    %v673 = vunpack.c.h.b16 %v320
    %v674 = vunpack.c.l.b16 %v321
    %v675 = vunpack.c.h.b16 %v321
    %v676 = vunpack.c.l.b16 %v322
    %v677 = vunpack.c.h.b16 %v322
    %v678 = vunpack.c.l.b16 %v323
    %v679 = vunpack.c.h.b16 %v323
    %v680 = vunpack.c.l.b16 %v324
    %v681 = vunpack.c.h.b16 %v324
    %v682 = vunpack.c.l.b16 %v325
    %v683 = vunpack.c.h.b16 %v325
    %v684 = vunpack.c.l.b16 %v326
    %v685 = vunpack.c.h.b16 %v326
    %v686 = vunpack.c.l.b16 %v327
    %v687 = vunpack.c.h.b16 %v327
    %v688 = vunpack.c.l.b16 %v328
    %v689 = vunpack.c.h.b16 %v328
    %v690 = vunpack.c.l.b16 %v329
    %v691 = vunpack.c.h.b16 %v329
    %v692 = vunpack.c.l.b16 %v330
    %v693 = vunpack.c.h.b16 %v330
    %v694 = vunpack.c.l.b16 %v331
    %v695 = vunpack.c.h.b16 %v331
    %v696 = vunpack.c.l.b16 %v332
    %v697 = vunpack.c.h.b16 %v332
    %v698 = vunpack.c.l.b16 %v333
    %v699 = vunpack.c.h.b16 %v333
    %v700 = vunpack.c.l.b16 %v334
    %v701 = vunpack.c.h.b16 %v334
    %v702 = vunpack.c.l.b16 %v335
    %v703 = vunpack.c.h.b16 %v335
    %v704 = vunpack.c.l.b16 %v336
    %v705 = vunpack.c.h.b16 %v336
    %v706 = vunpack.c.l.b16 %v337
    %v707 = vunpack.c.h.b16 %v337
    %v708 = vunpack.c.l.b16 %v338
    %v709 = vunpack.c.h.b16 %v338
    %v710 = vunpack.c.l.b16 %v339
    %v711 = vunpack.c.h.b16 %v339
    %v712 = vunpack.c.l.b16 %v340
    %v713 = vunpack.c.h.b16 %v340
    %v714 = vunpack.c.l.b16 %v341
    %v715 = vunpack.c.h.b16 %v341
    %v716 = vunpack.c.l.b16 %v342
    %v717 = vunpack.c.h.b16 %v342
    %v718 = vunpack.c.l.b16 %v343
    %v719 = vunpack.c.h.b16 %v343
    %v720 = vunpack.c.l.b16 %v344
    %v721 = vunpack.c.h.b16 %v344
    %v722 = vunpack.c.l.b16 %v345
    %v723 = vunpack.c.h.b16 %v345
    %v724 = vunpack.c.l.b16 %v346
    %v725 = vunpack.c.h.b16 %v346
    %v726 = vunpack.c.l.b16 %v347
    %v727 = vunpack.c.h.b16 %v347
    %v728 = vunpack.c.l.b16 %v348
    %v729 = vunpack.c.h.b16 %v348
    %v730 = vunpack.c.l.b16 %v349
    %v731 = vunpack.c.h.b16 %v349
    %v732 = vunpack.c.l.b16 %v350
    %v733 = vunpack.c.h.b16 %v350
    %v734 = vunpack.c.l.b16 %v351
    %v735 = vunpack.c.h.b16 %v351
    %v736 = vunpack.c.l.b16 %v352
    %v737 = vunpack.c.h.b16 %v352
    %v738 = vunpack.c.l.b16 %v353
    %v739 = vunpack.c.h.b16 %v353
    %v740 = vunpack.c.l.b16 %v354
    %v741 = vunpack.c.h.b16 %v354
    %v742 = vunpack.c.l.b16 %v355
    %v743 = vunpack.c.h.b16 %v355
    %v744 = vunpack.c.l.b16 %v356
    %v745 = vunpack.c.h.b16 %v356
    %v746 = vunpack.c.l.b16 %v357
    %v747 = vunpack.c.h.b16 %v357
    %v748 = vunpack.c.l.b16 %v358
    %v749 = vunpack.c.h.b16 %v358
    %v750 = vunpack.c.l.b16 %v359
    %v751 = vunpack.c.h.b16 %v359
    %v752 = vunpack.c.l.b16 %v360
    %v753 = vunpack.c.h.b16 %v360
    %v754 = vunpack.c.l.b16 %v361
    %v755 = vunpack.c.h.b16 %v361
    %v756 = vunpack.c.l.b16 %v362
    %v757 = vunpack.c.h.b16 %v362
    %v758 = vunpack.c.l.b16 %v363
    %v759 = vunpack.c.h.b16 %v363
    %v760 = vunpack.c.l.b16 %v364
    %v761 = vunpack.c.h.b16 %v364
    %v762 = vunpack.c.l.b16 %v365
    %v763 = vunpack.c.h.b16 %v365
    %v764 = vunpack.c.l.b16 %v366
    %v765 = vunpack.c.h.b16 %v366
    %v766 = vunpack.c.l.b16 %v367
    %v767 = vunpack.c.h.b16 %v367
    %v768 = vunpack.c.l.b16 %v368
    %v769 = vunpack.c.h.b16 %v368
    %v770 = vunpack.c.l.b16 %v369
    %v771 = vunpack.c.h.b16 %v369
    %v772 = vunpack.c.l.b16 %v370
    %v773 = vunpack.c.h.b16 %v370
    %v774 = vunpack.c.l.b16 %v371
    %v775 = vunpack.c.h.b16 %v371
    %v776 = vunpack.c.l.b16 %v372
    %v777 = vunpack.c.h.b16 %v372
    %v778 = vunpack.c.l.b16 %v373
    %v779 = vunpack.c.h.b16 %v373
    %v780 = vpack.c.b16 %v528, %v524
    %v781 = vpack.c.b16 %v529, %v525
    %v782 = vpack.c.b16 %v530, %v526
    %v783 = vpack.c.b16 %v531, %v527
    %v784 = vpack.c.b16 %v536, %v532
    %v785 = vpack.c.b16 %v537, %v533
    %v786 = vpack.c.b16 %v538, %v534
    %v787 = vpack.c.b16 %v539, %v535
    %v788 = vpack.c.b16 %v544, %v540
    %v789 = vpack.c.b16 %v545, %v541
    %v790 = vpack.c.b16 %v546, %v542
    %v791 = vpack.c.b16 %v547, %v543
    %v792 = vpack.c.b16 %v552, %v548
    %v793 = vpack.c.b16 %v553, %v549
    %v794 = vpack.c.b16 %v554, %v550
    %v795 = vpack.c.b16 %v555, %v551
    %v796 = vpack.c.b16 %v560, %v556
    %v797 = vpack.c.b16 %v561, %v557
    %v798 = vpack.c.b16 %v562, %v558
    %v799 = vpack.c.b16 %v563, %v559
    %v800 = vpack.c.b16 %v568, %v564
    %v801 = vpack.c.b16 %v569, %v565
    %v802 = vpack.c.b16 %v570, %v566
    %v803 = vpack.c.b16 %v571, %v567
    %v804 = vpack.c.b16 %v576, %v572
    %v805 = vpack.c.b16 %v577, %v573
    %v806 = vpack.c.b16 %v578, %v574
    %v807 = vpack.c.b16 %v579, %v575
    %v808 = vpack.c.b16 %v584, %v580
    %v809 = vpack.c.b16 %v585, %v581
    %v810 = vpack.c.b16 %v586, %v582
    %v811 = vpack.c.b16 %v587, %v583
    %v812 = vpack.c.b16 %v592, %v588
    %v813 = vpack.c.b16 %v593, %v589
    %v814 = vpack.c.b16 %v594, %v590
    %v815 = vpack.c.b16 %v595, %v591
    %v816 = vpack.c.b16 %v600, %v596
    %v817 = vpack.c.b16 %v601, %v597
    %v818 = vpack.c.b16 %v602, %v598
    %v819 = vpack.c.b16 %v603, %v599
    %v820 = vpack.c.b16 %v608, %v604
    %v821 = vpack.c.b16 %v609, %v605
    %v822 = vpack.c.b16 %v610, %v606
    %v823 = vpack.c.b16 %v611, %v607
    %v824 = vpack.c.b16 %v616, %v612
    %v825 = vpack.c.b16 %v617, %v613
    %v826 = vpack.c.b16 %v618, %v614
    %v827 = vpack.c.b16 %v619, %v615
    %v828 = vpack.c.b16 %v624, %v620
    %v829 = vpack.c.b16 %v625, %v621
    %v830 = vpack.c.b16 %v626, %v622
    %v831 = vpack.c.b16 %v627, %v623
    %v832 = vpack.c.b16 %v632, %v628
    %v833 = vpack.c.b16 %v633, %v629
    %v834 = vpack.c.b16 %v634, %v630
    %v835 = vpack.c.b16 %v635, %v631
    %v836 = vpack.c.b16 %v640, %v636
    %v837 = vpack.c.b16 %v641, %v637
    %v838 = vpack.c.b16 %v642, %v638
    %v839 = vpack.c.b16 %v643, %v639
    %v840 = vpack.c.b16 %v648, %v644
    %v841 = vpack.c.b16 %v649, %v645
    %v842 = vpack.c.b16 %v650, %v646
    %v843 = vpack.c.b16 %v651, %v647
    %v844 = vpack.c.b16 %v656, %v652
    %v845 = vpack.c.b16 %v657, %v653
    %v846 = vpack.c.b16 %v658, %v654
    %v847 = vpack.c.b16 %v659, %v655
    %v848 = vpack.c.b16 %v664, %v660
    %v849 = vpack.c.b16 %v665, %v661
    %v850 = vpack.c.b16 %v666, %v662
    %v851 = vpack.c.b16 %v667, %v663
    %v852 = vpack.c.b16 %v672, %v668
    %v853 = vpack.c.b16 %v673, %v669
    %v854 = vpack.c.b16 %v674, %v670
    %v855 = vpack.c.b16 %v675, %v671
    %v856 = vpack.c.b16 %v680, %v676
    %v857 = vpack.c.b16 %v681, %v677
    %v858 = vpack.c.b16 %v682, %v678
    %v859 = vpack.c.b16 %v683, %v679
    %v860 = vpack.c.b16 %v688, %v684
    %v861 = vpack.c.b16 %v689, %v685
    %v862 = vpack.c.b16 %v690, %v686
    %v863 = vpack.c.b16 %v691, %v687
    %v864 = vpack.c.b16 %v696, %v692
    %v865 = vpack.c.b16 %v697, %v693
    %v866 = vpack.c.b16 %v698, %v694
    %v867 = vpack.c.b16 %v699, %v695
    %v868 = vpack.c.b16 %v704, %v700
    %v869 = vpack.c.b16 %v705, %v701
    %v870 = vpack.c.b16 %v706, %v702
    %v871 = vpack.c.b16 %v707, %v703
    %v872 = vpack.c.b16 %v712, %v708
    %v873 = vpack.c.b16 %v713, %v709
    %v874 = vpack.c.b16 %v714, %v710
    %v875 = vpack.c.b16 %v715, %v711
    %v876 = vpack.c.b16 %v720, %v716
    %v877 = vpack.c.b16 %v721, %v717
    %v878 = vpack.c.b16 %v722, %v718
    %v879 = vpack.c.b16 %v723, %v719
    %v880 = vpack.c.b16 %v728, %v724
    %v881 = vpack.c.b16 %v729, %v725
    %v882 = vpack.c.b16 %v730, %v726
    %v883 = vpack.c.b16 %v731, %v727
    %v884 = vpack.c.b16 %v736, %v732
    %v885 = vpack.c.b16 %v737, %v733
    %v886 = vpack.c.b16 %v738, %v734
    %v887 = vpack.c.b16 %v739, %v735
    %v888 = vpack.c.b16 %v744, %v740
    %v889 = vpack.c.b16 %v745, %v741
    %v890 = vpack.c.b16 %v746, %v742
    %v891 = vpack.c.b16 %v747, %v743
    %v892 = vpack.c.b16 %v752, %v748
    %v893 = vpack.c.b16 %v753, %v749
    %v894 = vpack.c.b16 %v754, %v750
    %v895 = vpack.c.b16 %v755, %v751
    %v896 = vpack.c.b16 %v760, %v756
    %v897 = vpack.c.b16 %v761, %v757
    %v898 = vpack.c.b16 %v762, %v758
    %v899 = vpack.c.b16 %v763, %v759
    %v900 = vpack.c.b16 %v768, %v764
    %v901 = vpack.c.b16 %v769, %v765
    %v902 = vpack.c.b16 %v770, %v766
    %v903 = vpack.c.b16 %v771, %v767
    %v904 = vpack.c.b16 %v776, %v772
    %v905 = vpack.c.b16 %v777, %v773
    %v906 = vpack.c.b16 %v778, %v774
    %v907 = vpack.c.b16 %v779, %v775
    %1036 = vmatprep.subr.bf16.mxu0 %v781
    %1037 = vmatpush1.bf16.msra.mxu0 %v780
    %1038 = vmatprep.subr.bf16.mxu0 %v785
    %1039 = vmatpush1.bf16.msra.mxu0 %v784
    %1040 = vmatprep.subr.bf16.mxu0 %v789
    %1041 = vmatpush1.bf16.msra.mxu0 %v788
    %1042 = vmatprep.subr.bf16.mxu0 %v793
    %1043 = vmatpush1.bf16.msra.mxu0 %v792
    %1044 = vmatprep.subr.bf16.mxu0 %v797
    %1045 = vmatpush1.bf16.msra.mxu0 %v796
    %1046 = vmatprep.subr.bf16.mxu0 %v801
    %1047 = vmatpush1.bf16.msra.mxu0 %v800
    %1048 = vmatprep.subr.bf16.mxu0 %v805
    %1049 = vmatpush1.bf16.msra.mxu0 %v804
    %1050 = vmatprep.subr.bf16.mxu0 %v809
    %1051 = vmatpush1.bf16.msra.mxu0 %v808
    %1052 = vmatprep.subr.bf16.mxu0 %v813
    %1053 = vmatpush1.bf16.msra.mxu0 %v812
    %1054 = vmatprep.subr.bf16.mxu0 %v817
    %1055 = vmatpush1.bf16.msra.mxu0 %v816
    %1056 = vmatprep.subr.bf16.mxu0 %v821
    %1057 = vmatpush1.bf16.msra.mxu0 %v820
    %1058 = vmatprep.subr.bf16.mxu0 %v825
    %1059 = vmatpush1.bf16.msra.mxu0 %v824
    %1060 = vmatprep.subr.bf16.mxu0 %v829
    %1061 = vmatpush1.bf16.msra.mxu0 %v828
    %1062 = vmatprep.subr.bf16.mxu0 %v833
    %1063 = vmatpush1.bf16.msra.mxu0 %v832
    %1064 = vmatprep.subr.bf16.mxu0 %v837
    %1065 = vmatpush1.bf16.msra.mxu0 %v836
    %1066 = vmatprep.subr.bf16.mxu0 %v841
    %1067 = vmatpush1.bf16.msra.mxu0 %v840
    %1068 = vmatprep.mubr.bf16.mxu0 %v243
    %1069 = vmatmul.mubr.bf16.gmra.mrb[0].mxu0 %v242
    %v1070 = vpop.f32.mrb[0].mxu0
    %v1071 = vadd.f32 %v379, %v1070
    %v1072 = vpop.f32.mrb[0].mxu0
    %v1073 = vadd.f32 %v383, %v1072
    %v1074 = vpop.f32.mrb[0].mxu0
    %v1075 = vpop.f32.mrb[0].mxu0
    %1076 = vdwg.mxu0
    %1077 = vmatprep.subr.bf16.mxu0 %v845
    %1078 = vmatpush1.bf16.msra.mxu0 %v844
    %1079 = vmatprep.subr.bf16.mxu0 %v849
    %1080 = vmatpush1.bf16.msra.mxu0 %v848
    %1081 = vmatprep.subr.bf16.mxu0 %v853
    %1082 = vmatpush1.bf16.msra.mxu0 %v852
    %1083 = vmatprep.subr.bf16.mxu0 %v857
    %1084 = vmatpush1.bf16.msra.mxu0 %v856
    %1085 = vmatprep.subr.bf16.mxu0 %v861
    %1086 = vmatpush1.bf16.msra.mxu0 %v860
    %1087 = vmatprep.subr.bf16.mxu0 %v865
    %1088 = vmatpush1.bf16.msra.mxu0 %v864
    %1089 = vmatprep.subr.bf16.mxu0 %v869
    %1090 = vmatpush1.bf16.msra.mxu0 %v868
    %1091 = vmatprep.subr.bf16.mxu0 %v873
    %1092 = vmatpush1.bf16.msra.mxu0 %v872
    %1093 = vmatprep.subr.bf16.mxu0 %v877
    %1094 = vmatpush1.bf16.msra.mxu0 %v876
    %1095 = vmatprep.subr.bf16.mxu0 %v881
    %1096 = vmatpush1.bf16.msra.mxu0 %v880
    %1097 = vmatprep.subr.bf16.mxu0 %v885
    %1098 = vmatpush1.bf16.msra.mxu0 %v884
    %1099 = vmatprep.subr.bf16.mxu0 %v889
    %1100 = vmatpush1.bf16.msra.mxu0 %v888
    %1101 = vmatprep.subr.bf16.mxu0 %v893
    %1102 = vmatpush1.bf16.msra.mxu0 %v892
    %1103 = vmatprep.subr.bf16.mxu0 %v897
    %1104 = vmatpush1.bf16.msra.mxu0 %v896
    %1105 = vmatprep.subr.bf16.mxu0 %v901
    %1106 = vmatpush1.bf16.msra.mxu0 %v900
    %1107 = vmatprep.subr.bf16.mxu0 %v905
    %1108 = vmatpush1.bf16.msra.mxu0 %v904
    %1109 = vmatprep.mubr.bf16.mxu0 %v245
    %1110 = vmatmul.mubr.bf16.gmra.mrb[0].mxu0 %v244
    %v1111 = vpop.f32.mrb[0].mxu0
    %v1112 = vadd.f32 %v1071, %v1111
    %v1113 = vpop.f32.mrb[0].mxu0
    %v1114 = vadd.f32 %v1073, %v1113
    %v1115 = vpop.f32.mrb[0].mxu0
    %v1116 = vpop.f32.mrb[0].mxu0
    %1117 = vdwg.mxu0
    %1118 = vmatprep.subr.bf16.mxu0 %v783
    %1119 = vmatpush1.bf16.msra.mxu0 %v782
    %1120 = vmatprep.subr.bf16.mxu0 %v787
    %1121 = vmatpush1.bf16.msra.mxu0 %v786
    %1122 = vmatprep.subr.bf16.mxu0 %v791
    %1123 = vmatpush1.bf16.msra.mxu0 %v790
    %1124 = vmatprep.subr.bf16.mxu0 %v795
    %1125 = vmatpush1.bf16.msra.mxu0 %v794
    %1126 = vmatprep.subr.bf16.mxu0 %v799
    %1127 = vmatpush1.bf16.msra.mxu0 %v798
    %1128 = vmatprep.subr.bf16.mxu0 %v803
    %1129 = vmatpush1.bf16.msra.mxu0 %v802
    %1130 = vmatprep.subr.bf16.mxu0 %v807
    %1131 = vmatpush1.bf16.msra.mxu0 %v806
    %1132 = vmatprep.subr.bf16.mxu0 %v811
    %1133 = vmatpush1.bf16.msra.mxu0 %v810
    %1134 = vmatprep.subr.bf16.mxu0 %v815
    %1135 = vmatpush1.bf16.msra.mxu0 %v814
    %1136 = vmatprep.subr.bf16.mxu0 %v819
    %1137 = vmatpush1.bf16.msra.mxu0 %v818
    %1138 = vmatprep.subr.bf16.mxu0 %v823
    %1139 = vmatpush1.bf16.msra.mxu0 %v822
    %1140 = vmatprep.subr.bf16.mxu0 %v827
    %1141 = vmatpush1.bf16.msra.mxu0 %v826
    %1142 = vmatprep.subr.bf16.mxu0 %v831
    %1143 = vmatpush1.bf16.msra.mxu0 %v830
    %1144 = vmatprep.subr.bf16.mxu0 %v835
    %1145 = vmatpush1.bf16.msra.mxu0 %v834
    %1146 = vmatprep.subr.bf16.mxu0 %v839
    %1147 = vmatpush1.bf16.msra.mxu0 %v838
    %1148 = vmatprep.subr.bf16.mxu0 %v843
    %1149 = vmatpush1.bf16.msra.mxu0 %v842
    %1150 = vmatprep.mubr.bf16.mxu0 %v243
    %1151 = vmatmul.mubr.bf16.gmra.mrb[0].mxu0 %v242
    %v1152 = vpop.f32.mrb[0].mxu0
    %v1153 = vadd.f32 %v387, %v1152
    %v1154 = vpop.f32.mrb[0].mxu0
    %v1155 = vadd.f32 %v391, %v1154
    %v1156 = vpop.f32.mrb[0].mxu0
    %v1157 = vpop.f32.mrb[0].mxu0
    %1158 = vdwg.mxu0
    %1159 = vmatprep.subr.bf16.mxu0 %v847
    %1160 = vmatpush1.bf16.msra.mxu0 %v846
    %1161 = vmatprep.subr.bf16.mxu0 %v851
    %1162 = vmatpush1.bf16.msra.mxu0 %v850
    %1163 = vmatprep.subr.bf16.mxu0 %v855
    %1164 = vmatpush1.bf16.msra.mxu0 %v854
    %1165 = vmatprep.subr.bf16.mxu0 %v859
    %1166 = vmatpush1.bf16.msra.mxu0 %v858
    %1167 = vmatprep.subr.bf16.mxu0 %v863
    %1168 = vmatpush1.bf16.msra.mxu0 %v862
    %1169 = vmatprep.subr.bf16.mxu0 %v867
    %1170 = vmatpush1.bf16.msra.mxu0 %v866
    %1171 = vmatprep.subr.bf16.mxu0 %v871
    %1172 = vmatpush1.bf16.msra.mxu0 %v870
    %1173 = vmatprep.subr.bf16.mxu0 %v875
    %1174 = vmatpush1.bf16.msra.mxu0 %v874
    %1175 = vmatprep.subr.bf16.mxu0 %v879
    %1176 = vmatpush1.bf16.msra.mxu0 %v878
    %1177 = vmatprep.subr.bf16.mxu0 %v883
    %1178 = vmatpush1.bf16.msra.mxu0 %v882
    %1179 = vmatprep.subr.bf16.mxu0 %v887
    %1180 = vmatpush1.bf16.msra.mxu0 %v886
    %1181 = vmatprep.subr.bf16.mxu0 %v891
    %1182 = vmatpush1.bf16.msra.mxu0 %v890
    %1183 = vmatprep.subr.bf16.mxu0 %v895
    %1184 = vmatpush1.bf16.msra.mxu0 %v894
    %1185 = vmatprep.subr.bf16.mxu0 %v899
    %1186 = vmatpush1.bf16.msra.mxu0 %v898
    %1187 = vmatprep.subr.bf16.mxu0 %v903
    %1188 = vmatpush1.bf16.msra.mxu0 %v902
    %1189 = vmatprep.subr.bf16.mxu0 %v907
    %1190 = vmatpush1.bf16.msra.mxu0 %v906
    %1191 = vmatprep.mubr.bf16.mxu0 %v245
    %1192 = vmatmul.mubr.bf16.gmra.mrb[0].mxu0 %v244
    %v1193 = vpop.f32.mrb[0].mxu0
    %v1194 = vadd.f32 %v1153, %v1193
    %v1195 = vpop.f32.mrb[0].mxu0
    %v1196 = vadd.f32 %v1155, %v1195
    %v1197 = vpop.f32.mrb[0].mxu0
    %v1198 = vpop.f32.mrb[0].mxu0
    %1199 = vdwg.mxu0
    %s1200 = smul.u32 0, 8
    %v1201 = vlaneseq
    %v1202 = vshrl.u32 %v1201, 7
    %v1203 = vstv %s1200
    %v1204 = vadd.s32 %v1203, %v1202
    %vm1205 = vcmp.lt.s32.totalorder %v1204, 2
    %v1206 = vsel %vm1205, 1, 0
    %v1207 = vcvt.s32.f32 %v1206
    %v1208 = vmul.f32 %v1112, %v1207
    %v1209 = vmul.f32 %v1114, %v1207
    %v1210 = vmul.f32 %v1194, %v1207
    %v1211 = vmul.f32 %v1196, %v1207
    %v1212 = vrot.slane %v1208, 4
    %v1213 = vadd.f32 %v1208, %v1212
    %v1214 = vrot.slane %v1213, 2
    %v1215 = vadd.f32 %v1213, %v1214
    %v1216 = vrot.slane %v1215, 1
    %v1217 = vadd.f32 %v1215, %v1216
    %v1218 = vrot.slane %v1209, 4
    %v1219 = vadd.f32 %v1209, %v1218
    %v1220 = vrot.slane %v1219, 2
    %v1221 = vadd.f32 %v1219, %v1220
    %v1222 = vrot.slane %v1221, 1
    %v1223 = vadd.f32 %v1221, %v1222
    %v1224 = vrot.slane %v1210, 4
    %v1225 = vadd.f32 %v1210, %v1224
    %v1226 = vrot.slane %v1225, 2
    %v1227 = vadd.f32 %v1225, %v1226
    %v1228 = vrot.slane %v1227, 1
    %v1229 = vadd.f32 %v1227, %v1228
    %v1230 = vrot.slane %v1211, 4
    %v1231 = vadd.f32 %v1211, %v1230
    %v1232 = vrot.slane %v1231, 2
    %v1233 = vadd.f32 %v1231, %v1232
    %v1234 = vrot.slane %v1233, 1
    %v1235 = vadd.f32 %v1233, %v1234
    %v1236 = vmul.f32 %v1208, %v1112
    %v1237 = vmul.f32 %v1209, %v1114
    %v1238 = vmul.f32 %v1210, %v1194
    %v1239 = vmul.f32 %v1211, %v1196
    %v1240 = vrot.slane %v1236, 4
    %v1241 = vadd.f32 %v1236, %v1240
    %v1242 = vrot.slane %v1241, 2
    %v1243 = vadd.f32 %v1241, %v1242
    %v1244 = vrot.slane %v1243, 1
    %v1245 = vadd.f32 %v1243, %v1244
    %v1246 = vrot.slane %v1237, 4
    %v1247 = vadd.f32 %v1237, %v1246
    %v1248 = vrot.slane %v1247, 2
    %v1249 = vadd.f32 %v1247, %v1248
    %v1250 = vrot.slane %v1249, 1
    %v1251 = vadd.f32 %v1249, %v1250
    %v1252 = vrot.slane %v1238, 4
    %v1253 = vadd.f32 %v1238, %v1252
    %v1254 = vrot.slane %v1253, 2
    %v1255 = vadd.f32 %v1253, %v1254
    %v1256 = vrot.slane %v1255, 1
    %v1257 = vadd.f32 %v1255, %v1256
    %v1258 = vrot.slane %v1239, 4
    %v1259 = vadd.f32 %v1239, %v1258
    %v1260 = vrot.slane %v1259, 2
    %v1261 = vadd.f32 %v1259, %v1260
    %v1262 = vrot.slane %v1261, 1
    %v1263 = vadd.f32 %v1261, %v1262
    %vm1264 = vcmask 1040384
    %v1265 = vsel %vm1264, %v1217, %v1245
    %v1266 = vsel %vm1264, %v1223, %v1251
    %v1267 = vsel %vm1264, %v1229, %v1257
    %v1268 = vsel %vm1264, %v1235, %v1263
    %vm1269 = vcmask 1041408
    %v1270 = vsel %vm1269, %v1265, 0.0
    %v1271 = vsel %vm1269, %v1266, 0.0
    %v1272 = vsel %vm1269, %v1267, 0.0
    %v1273 = vsel %vm1269, %v1268, 0.0
    %1274 = vst [vmem:[%s5] sm:$0xff] %v1270
    %1275 = vst [vmem:[%s5 + $0x8] sm:$0xff] %v1271
    %1276 = vst [vmem:[%s5 + $0x10] sm:$0xff] %v1272
    %1277 = vst [vmem:[%s5 + $0x18] sm:$0xff] %v1273
    // Predicated region
    $region38: #{decoder_forward.2} parent=1 // pred_check
      _
    $region39: #{decoder_forward.2} parent=1 // pred_check_branch
      %1279 = sbr.rel (0) target = $region41
    $region40: #{decoder_forward.2} parent=1 // pred_region
      _
    $region41: #{decoder_forward.2} parent=1 // pred_fallthru
      _
    // Predicated region
    $region42: #{decoder_forward.2} parent=1 // pred_check
      _
    $region43: #{decoder_forward.2} parent=1 // pred_check_branch
      %1281 = sbr.rel (0) target = $region45
    $region44: #{decoder_forward.2} parent=1 // pred_region
      _
    $region45: #{decoder_forward.2} parent=1 // pred_fallthru
      _
    %1282 = vsyncpa [#allocation3], 1
    %1283 = vsyncpa [#allocation5], 1
    %1284 = vsyncpa [#allocation8], 1

// kernel: decoder_forward.3
$region0: #{decoder_forward.3}
  #allocation0 [shape = 'u32[]', space=smem, size = 0x4, offset = 0x4, fixed_abs, tag = 'smem constant byte address 0x4 - core index']
  #allocation1 [shape = 'u32[144,128]{1,0:T(1,128)}', space=vmem, size = 0x12000, scoped, tag = 'internal scratch']
  %s0 = inlined_call_operand.vmem [shape: f32[8,32], index: 0, kind: input, shape index: {}]
  %s1 = inlined_call_operand.vmem [shape: bf16[32,512], index: 1, kind: input, shape index: {}]
  %s2 = inlined_call_operand.vmem [shape: f32[1,512], index: 2, kind: input, shape index: {}]
  %s3 = inlined_call_operand.vmem [shape: bf16[512,512], index: 3, kind: input, shape index: {}]
  %s4 = inlined_call_operand.vmem [shape: f32[1,512], index: 4, kind: input, shape index: {}]
  %s5 = inlined_call_operand.vmem [shape: f32[1,512], index: 5, kind: input, shape index: {}]
  %s6 = inlined_call_operand.vmem [shape: f32[1,512], index: 6, kind: input, shape index: {}]
  %s7 = inlined_call_operand.hbm [shape: bf16[512,1024], index: 7, kind: input, shape index: {}]
  %s8 = inlined_call_operand.vmem [shape: f32[1,1024], index: 8, kind: input, shape index: {}]
  %s9 = inlined_call_operand.vmem [shape: f32[8,1024], index: 9, kind: output, shape index: {}]
  %s10 = sld [smem:[#allocation0]]
  $region50: #{decoder_forward.3} parent=0
    _
  %s12 = ssub.s32 1, %s10
  %s13 = scalar_select 0, %s12, %s10
  $region1: #{decoder_forward.3} parent=0
    #allocation2 [shape = 'u8[1048576]{0}', space=vmem, size = 0x100000, scoped, tag = 'input window, operand 7, single buffered']
    #allocation3 [shape = 's32[1]{0}', space=sflag, size = 0x4, scoped, tag = 'scoped memory for decoder_forward.3']
    %14 = vsyncpa [#allocation3], 0
    // Predicated region
    $region2: #{decoder_forward.3} parent=1 // pred_check
      _
    $region3: #{decoder_forward.3} parent=1 // pred_check_branch
      %16 = sbr.rel (0) target = $region5
    $region4: #{decoder_forward.3} parent=1 // pred_region
      _
    $region5: #{decoder_forward.3} parent=1 // pred_fallthru
      _
    // Predicated region
    $region6: #{decoder_forward.3} parent=1 // pred_check
      _
    $region7: #{decoder_forward.3} parent=1 // pred_check_branch
      %18 = sbr.rel (0) target = $region9
    $region8: #{decoder_forward.3} parent=1 // pred_region
      _
    $region9: #{decoder_forward.3} parent=1 // pred_fallthru
      _
    // Predicated region
    $region10: #{decoder_forward.3} parent=1 // pred_check
      _
    $region11: #{decoder_forward.3} parent=1 // pred_check_branch
      %20 = sbr.rel (0) target = $region13
    $region12: #{decoder_forward.3} parent=1 // pred_region
      _
    $region13: #{decoder_forward.3} parent=1 // pred_fallthru
      _
    // Predicated region
    $region14: #{decoder_forward.3} parent=1 // pred_check
      _
    $region15: #{decoder_forward.3} parent=1 // pred_check_branch
      %22 = sbr.rel (0) target = $region17
    $region16: #{decoder_forward.3} parent=1 // pred_region
      _
    $region17: #{decoder_forward.3} parent=1 // pred_fallthru
      _
    // Predicated region
    $region18: #{decoder_forward.3} parent=1 // pred_check
      _
    $region19: #{decoder_forward.3} parent=1 // pred_check_branch
      %24 = sbr.rel (0) target = $region21
    $region20: #{decoder_forward.3} parent=1 // pred_region
      _
    $region21: #{decoder_forward.3} parent=1 // pred_fallthru
      _
    // Predicated region
    $region22: #{decoder_forward.3} parent=1 // pred_check
      _
    $region23: #{decoder_forward.3} parent=1 // pred_check_branch
      %26 = sbr.rel (0) target = $region25
    $region24: #{decoder_forward.3} parent=1 // pred_region
      _
    $region25: #{decoder_forward.3} parent=1 // pred_fallthru
      _
    // Predicated region
    $region26: #{decoder_forward.3} parent=1 // pred_check
      _
    $region27: #{decoder_forward.3} parent=1 // pred_check_branch
      %28 = sbr.rel (0) target = $region29
    $region28: #{decoder_forward.3} parent=1 // pred_region
      _
    $region29: #{decoder_forward.3} parent=1 // pred_fallthru
      _
    // Predicated region
    $region30: #{decoder_forward.3} parent=1 // pred_check
      _
    $region31: #{decoder_forward.3} parent=1 // pred_check_branch
      %30 = sbr.rel (0) target = $region33
    $region32: #{decoder_forward.3} parent=1 // pred_region
      %s32 = ssub.s32 32768, 32768
      %33 = vsyncadd [#allocation3], %s32
      %s34 = sshll.u32 [#allocation2], 4
      %s35 = int_to_ptr.vmem [resolvable:$true] %s34
      %40 = dma.hbm_to_vmem [thread:$0]  %s7, 32768, %s35, [#allocation3], 512, 512, 32
    $region33: #{decoder_forward.3} parent=1 // pred_fallthru
      _
    // Predicated region
    $region34: #{decoder_forward.3} parent=1 // pred_check
      _
    $region35: #{decoder_forward.3} parent=1 // pred_check_branch
      %42 = sbr.rel (0) target = $region37
    $region36: #{decoder_forward.3} parent=1 // pred_region
      _
    $region37: #{decoder_forward.3} parent=1 // pred_fallthru
      _
    // Predicated region
    $region38: #{decoder_forward.3} parent=1 // pred_check
      _
    $region39: #{decoder_forward.3} parent=1 // pred_check_branch
      %44 = sbr.rel (0) target = $region41
    $region40: #{decoder_forward.3} parent=1 // pred_region
      %45 = dma.done [#allocation3], 32768
    $region41: #{decoder_forward.3} parent=1 // pred_fallthru
      _
    %v47 = vld [vmem:[%s0] sm:$0xff]
    %v48 = vpack.c.bf16 %v47, %v47
    %v49 = vld [vmem:[%s1] sm:$0xff]
    %v50 = vld [vmem:[%s1 + $0x8] sm:$0xff]
    %v51 = vld [vmem:[%s1 + $0x10] sm:$0xff]
    %v52 = vld [vmem:[%s1 + $0x18] sm:$0xff]
    %v53 = vld [vmem:[%s1 + $0x20] sm:$0xff]
    %v54 = vld [vmem:[%s1 + $0x28] sm:$0xff]
    %v55 = vld [vmem:[%s1 + $0x30] sm:$0xff]
    %v56 = vld [vmem:[%s1 + $0x38] sm:$0xff]
    %v57 = vld [vmem:[%s2] sm:$0xf]
    %v59 = vlaneseq
    %v60 = vshrl.u32 %v59, 7
    %v61 = vsub.s32 0, %v60
    %v62 = vrot.slane %v57, %v61
    %v63 = vlaneseq
    %v64 = vshrl.u32 %v63, 7
    %v65 = vsub.s32 1, %v64
    %v66 = vrot.slane %v57, %v65
    %v67 = vlaneseq
    %v68 = vshrl.u32 %v67, 7
    %v69 = vsub.s32 2, %v68
    %v70 = vrot.slane %v57, %v69
    %v71 = vlaneseq
    %v72 = vshrl.u32 %v71, 7
    %v73 = vsub.s32 3, %v72
    %v74 = vrot.slane %v57, %v73
    %v87 = vunpack.c.l.b16 %v49
    %v88 = vunpack.c.h.b16 %v49
    %v89 = vunpack.c.l.b16 %v50
    %v90 = vunpack.c.h.b16 %v50
    %v91 = vunpack.c.l.b16 %v51
    %v92 = vunpack.c.h.b16 %v51
    %v93 = vunpack.c.l.b16 %v52
    %v94 = vunpack.c.h.b16 %v52
    %v95 = vunpack.c.l.b16 %v53
    %v96 = vunpack.c.h.b16 %v53
    %v97 = vunpack.c.l.b16 %v54
    %v98 = vunpack.c.h.b16 %v54
    %v99 = vunpack.c.l.b16 %v55
    %v100 = vunpack.c.h.b16 %v55
    %v101 = vunpack.c.l.b16 %v56
    %v102 = vunpack.c.h.b16 %v56
    %v103 = vpack.c.b16 %v91, %v87
    %v104 = vpack.c.b16 %v92, %v88
    %v105 = vpack.c.b16 %v93, %v89
    %v106 = vpack.c.b16 %v94, %v90
    %v107 = vpack.c.b16 %v99, %v95
    %v108 = vpack.c.b16 %v100, %v96
    %v109 = vpack.c.b16 %v101, %v97
    %v110 = vpack.c.b16 %v102, %v98
    %vm119 = vcmask 261120
    %v121 = vsel %vm119, %v48, 0
    %123 = vmatprep.subr.bf16.mxu0 %v104
    %124 = vmatpush1.bf16.msra.mxu0 %v103
    %125 = vmatprep.subr.bf16.mxu0 %v108
    %126 = vmatpush1.bf16.msra.mxu0 %v107
    %127 = vmatprep.subr.bf16.mxu0 0
    %128 = vmatpush1.bf16.msra.mxu0 0
    %129 = vmatprep.subr.bf16.mxu0 0
    %130 = vmatpush1.bf16.msra.mxu0 0
    %131 = vmatprep.subr.bf16.mxu0 0
    %132 = vmatpush1.bf16.msra.mxu0 0
    %133 = vmatprep.subr.bf16.mxu0 0
    %134 = vmatpush1.bf16.msra.mxu0 0
    %135 = vmatprep.subr.bf16.mxu0 0
    %136 = vmatpush1.bf16.msra.mxu0 0
    %137 = vmatprep.subr.bf16.mxu0 0
    %138 = vmatpush1.bf16.msra.mxu0 0
    %139 = vmatprep.subr.bf16.mxu0 0
    %140 = vmatpush1.bf16.msra.mxu0 0
    %141 = vmatprep.subr.bf16.mxu0 0
    %142 = vmatpush1.bf16.msra.mxu0 0
    %143 = vmatprep.subr.bf16.mxu0 0
    %144 = vmatpush1.bf16.msra.mxu0 0
    %145 = vmatprep.subr.bf16.mxu0 0
    %146 = vmatpush1.bf16.msra.mxu0 0
    %147 = vmatprep.subr.bf16.mxu0 0
    %148 = vmatpush1.bf16.msra.mxu0 0
    %149 = vmatprep.subr.bf16.mxu0 0
    %150 = vmatpush1.bf16.msra.mxu0 0
    %151 = vmatprep.subr.bf16.mxu0 0
    %152 = vmatpush1.bf16.msra.mxu0 0
    %153 = vmatprep.subr.bf16.mxu0 0
    %154 = vmatpush1.bf16.msra.mxu0 0
    %155 = vmatprep.mubr.bf16.mxu0 0
    %156 = vmatmul.mubr.bf16.gmra.mrb[0].mxu0 %v121
    %v157 = vpop.f32.mrb[0].mxu0
    %v158 = vadd.f32 %v62, %v157
    %v159 = vpop.f32.mrb[0].mxu0
    %v160 = vadd.f32 %v66, %v159
    %v161 = vpop.f32.mrb[0].mxu0
    %v162 = vpop.f32.mrb[0].mxu0
    %163 = vdwg.mxu0
    %164 = vmatprep.subr.bf16.mxu0 %v106
    %165 = vmatpush1.bf16.msra.mxu0 %v105
    %166 = vmatprep.subr.bf16.mxu0 %v110
    %167 = vmatpush1.bf16.msra.mxu0 %v109
    %168 = vmatprep.subr.bf16.mxu0 0
    %169 = vmatpush1.bf16.msra.mxu0 0
    %170 = vmatprep.subr.bf16.mxu0 0
    %171 = vmatpush1.bf16.msra.mxu0 0
    %172 = vmatprep.subr.bf16.mxu0 0
    %173 = vmatpush1.bf16.msra.mxu0 0
    %174 = vmatprep.subr.bf16.mxu0 0
    %175 = vmatpush1.bf16.msra.mxu0 0
    %176 = vmatprep.subr.bf16.mxu0 0
    %177 = vmatpush1.bf16.msra.mxu0 0
    %178 = vmatprep.subr.bf16.mxu0 0
    %179 = vmatpush1.bf16.msra.mxu0 0
    %180 = vmatprep.subr.bf16.mxu0 0
    %181 = vmatpush1.bf16.msra.mxu0 0
    %182 = vmatprep.subr.bf16.mxu0 0
    %183 = vmatpush1.bf16.msra.mxu0 0
    %184 = vmatprep.subr.bf16.mxu0 0
    %185 = vmatpush1.bf16.msra.mxu0 0
    %186 = vmatprep.subr.bf16.mxu0 0
    %187 = vmatpush1.bf16.msra.mxu0 0
    %188 = vmatprep.subr.bf16.mxu0 0
    %189 = vmatpush1.bf16.msra.mxu0 0
    %190 = vmatprep.subr.bf16.mxu0 0
    %191 = vmatpush1.bf16.msra.mxu0 0
    %192 = vmatprep.subr.bf16.mxu0 0
    %193 = vmatpush1.bf16.msra.mxu0 0
    %194 = vmatprep.subr.bf16.mxu0 0
    %195 = vmatpush1.bf16.msra.mxu0 0
    %196 = vmatprep.mubr.bf16.mxu0 0
    %197 = vmatmul.mubr.bf16.gmra.mrb[0].mxu0 %v121
    %v198 = vpop.f32.mrb[0].mxu0
    %v199 = vadd.f32 %v70, %v198
    %v200 = vpop.f32.mrb[0].mxu0
    %v201 = vadd.f32 %v74, %v200
    %v202 = vpop.f32.mrb[0].mxu0
    %v203 = vpop.f32.mrb[0].mxu0
    %204 = vdwg.mxu0
    %vm205 = vcmp.gt.f32.partialorder %v158, 0.0
    %vm206 = vcmp.gt.f32.partialorder %v160, 0.0
    %vm207 = vcmp.gt.f32.partialorder %v199, 0.0
    %vm208 = vcmp.gt.f32.partialorder %v201, 0.0
    %v209 = vmul.f32 %v158, 0.2
    %v210 = vmul.f32 %v160, 0.2
    %v211 = vmul.f32 %v199, 0.2
    %v212 = vmul.f32 %v201, 0.2
    %v213 = vsel %vm205, %v158, %v209
    %v214 = vsel %vm206, %v160, %v210
    %v215 = vsel %vm207, %v199, %v211
    %v216 = vsel %vm208, %v201, %v212
    %v217 = vpack.c.bf16 %v213, %v213
    %v218 = vpack.c.bf16 %v214, %v214
    %v219 = vpack.c.bf16 %v215, %v215
    %v220 = vpack.c.bf16 %v216, %v216
    %v221 = vld [vmem:[%s3] sm:$0xff]
    %v222 = vld [vmem:[%s3 + $0x8] sm:$0xff]
    %v223 = vld [vmem:[%s3 + $0x10] sm:$0xff]
    %v224 = vld [vmem:[%s3 + $0x18] sm:$0xff]
    %v225 = vld [vmem:[%s3 + $0x20] sm:$0xff]
    %v226 = vld [vmem:[%s3 + $0x28] sm:$0xff]
    %v227 = vld [vmem:[%s3 + $0x30] sm:$0xff]
    %v228 = vld [vmem:[%s3 + $0x38] sm:$0xff]
    %v229 = vld [vmem:[%s3 + $0x40] sm:$0xff]
    %v230 = vld [vmem:[%s3 + $0x48] sm:$0xff]
    %v231 = vld [vmem:[%s3 + $0x50] sm:$0xff]
    %v232 = vld [vmem:[%s3 + $0x58] sm:$0xff]
    %v233 = vld [vmem:[%s3 + $0x60] sm:$0xff]
    %v234 = vld [vmem:[%s3 + $0x68] sm:$0xff]
    %v235 = vld [vmem:[%s3 + $0x70] sm:$0xff]
    %v236 = vld [vmem:[%s3 + $0x78] sm:$0xff]
    %v237 = vld [vmem:[%s3 + $0x80] sm:$0xff]
    %v238 = vld [vmem:[%s3 + $0x88] sm:$0xff]
    %v239 = vld [vmem:[%s3 + $0x90] sm:$0xff]
    %v240 = vld [vmem:[%s3 + $0x98] sm:$0xff]
    %v241 = vld [vmem:[%s3 + $0xa0] sm:$0xff]
    %v242 = vld [vmem:[%s3 + $0xa8] sm:$0xff]
    %v243 = vld [vmem:[%s3 + $0xb0] sm:$0xff]
    %v244 = vld [vmem:[%s3 + $0xb8] sm:$0xff]
    %v245 = vld [vmem:[%s3 + $0xc0] sm:$0xff]
    %v246 = vld [vmem:[%s3 + $0xc8] sm:$0xff]
    %v247 = vld [vmem:[%s3 + $0xd0] sm:$0xff]
    %v248 = vld [vmem:[%s3 + $0xd8] sm:$0xff]
    %v249 = vld [vmem:[%s3 + $0xe0] sm:$0xff]
    %v250 = vld [vmem:[%s3 + $0xe8] sm:$0xff]
    %v251 = vld [vmem:[%s3 + $0xf0] sm:$0xff]
    %v252 = vld [vmem:[%s3 + $0xf8] sm:$0xff]
    %v253 = vld [vmem:[%s3 + $0x100] sm:$0xff]
    %v254 = vld [vmem:[%s3 + $0x108] sm:$0xff]
    %v255 = vld [vmem:[%s3 + $0x110] sm:$0xff]
    %v256 = vld [vmem:[%s3 + $0x118] sm:$0xff]
    %v257 = vld [vmem:[%s3 + $0x120] sm:$0xff]
    %v258 = vld [vmem:[%s3 + $0x128] sm:$0xff]
    %v259 = vld [vmem:[%s3 + $0x130] sm:$0xff]
    %v260 = vld [vmem:[%s3 + $0x138] sm:$0xff]
    %v261 = vld [vmem:[%s3 + $0x140] sm:$0xff]
    %v262 = vld [vmem:[%s3 + $0x148] sm:$0xff]
    %v263 = vld [vmem:[%s3 + $0x150] sm:$0xff]
    %v264 = vld [vmem:[%s3 + $0x158] sm:$0xff]
    %v265 = vld [vmem:[%s3 + $0x160] sm:$0xff]
    %v266 = vld [vmem:[%s3 + $0x168] sm:$0xff]
    %v267 = vld [vmem:[%s3 + $0x170] sm:$0xff]
    %v268 = vld [vmem:[%s3 + $0x178] sm:$0xff]
    %v269 = vld [vmem:[%s3 + $0x180] sm:$0xff]
    %v270 = vld [vmem:[%s3 + $0x188] sm:$0xff]
    %v271 = vld [vmem:[%s3 + $0x190] sm:$0xff]
    %v272 = vld [vmem:[%s3 + $0x198] sm:$0xff]
    %v273 = vld [vmem:[%s3 + $0x1a0] sm:$0xff]
    %v274 = vld [vmem:[%s3 + $0x1a8] sm:$0xff]
    %v275 = vld [vmem:[%s3 + $0x1b0] sm:$0xff]
    %v276 = vld [vmem:[%s3 + $0x1b8] sm:$0xff]
    %v277 = vld [vmem:[%s3 + $0x1c0] sm:$0xff]
    %v278 = vld [vmem:[%s3 + $0x1c8] sm:$0xff]
    %v279 = vld [vmem:[%s3 + $0x1d0] sm:$0xff]
    %v280 = vld [vmem:[%s3 + $0x1d8] sm:$0xff]
    %v281 = vld [vmem:[%s3 + $0x1e0] sm:$0xff]
    %v282 = vld [vmem:[%s3 + $0x1e8] sm:$0xff]
    %v283 = vld [vmem:[%s3 + $0x1f0] sm:$0xff]
    %v284 = vld [vmem:[%s3 + $0x1f8] sm:$0xff]
    %v285 = vld [vmem:[%s3 + $0x200] sm:$0xff]
    %v286 = vld [vmem:[%s3 + $0x208] sm:$0xff]
    %v287 = vld [vmem:[%s3 + $0x210] sm:$0xff]
    %v288 = vld [vmem:[%s3 + $0x218] sm:$0xff]
    %v289 = vld [vmem:[%s3 + $0x220] sm:$0xff]
    %v290 = vld [vmem:[%s3 + $0x228] sm:$0xff]
    %v291 = vld [vmem:[%s3 + $0x230] sm:$0xff]
    %v292 = vld [vmem:[%s3 + $0x238] sm:$0xff]
    %v293 = vld [vmem:[%s3 + $0x240] sm:$0xff]
    %v294 = vld [vmem:[%s3 + $0x248] sm:$0xff]
    %v295 = vld [vmem:[%s3 + $0x250] sm:$0xff]
    %v296 = vld [vmem:[%s3 + $0x258] sm:$0xff]
    %v297 = vld [vmem:[%s3 + $0x260] sm:$0xff]
    %v298 = vld [vmem:[%s3 + $0x268] sm:$0xff]
    %v299 = vld [vmem:[%s3 + $0x270] sm:$0xff]
    %v300 = vld [vmem:[%s3 + $0x278] sm:$0xff]
    %v301 = vld [vmem:[%s3 + $0x280] sm:$0xff]
    %v302 = vld [vmem:[%s3 + $0x288] sm:$0xff]
    %v303 = vld [vmem:[%s3 + $0x290] sm:$0xff]
    %v304 = vld [vmem:[%s3 + $0x298] sm:$0xff]
    %v305 = vld [vmem:[%s3 + $0x2a0] sm:$0xff]
    %v306 = vld [vmem:[%s3 + $0x2a8] sm:$0xff]
    %v307 = vld [vmem:[%s3 + $0x2b0] sm:$0xff]
    %v308 = vld [vmem:[%s3 + $0x2b8] sm:$0xff]
    %v309 = vld [vmem:[%s3 + $0x2c0] sm:$0xff]
    %v310 = vld [vmem:[%s3 + $0x2c8] sm:$0xff]
    %v311 = vld [vmem:[%s3 + $0x2d0] sm:$0xff]
    %v312 = vld [vmem:[%s3 + $0x2d8] sm:$0xff]
    %v313 = vld [vmem:[%s3 + $0x2e0] sm:$0xff]
    %v314 = vld [vmem:[%s3 + $0x2e8] sm:$0xff]
    %v315 = vld [vmem:[%s3 + $0x2f0] sm:$0xff]
    %v316 = vld [vmem:[%s3 + $0x2f8] sm:$0xff]
    %v317 = vld [vmem:[%s3 + $0x300] sm:$0xff]
    %v318 = vld [vmem:[%s3 + $0x308] sm:$0xff]
    %v319 = vld [vmem:[%s3 + $0x310] sm:$0xff]
    %v320 = vld [vmem:[%s3 + $0x318] sm:$0xff]
    %v321 = vld [vmem:[%s3 + $0x320] sm:$0xff]
    %v322 = vld [vmem:[%s3 + $0x328] sm:$0xff]
    %v323 = vld [vmem:[%s3 + $0x330] sm:$0xff]
    %v324 = vld [vmem:[%s3 + $0x338] sm:$0xff]
    %v325 = vld [vmem:[%s3 + $0x340] sm:$0xff]
    %v326 = vld [vmem:[%s3 + $0x348] sm:$0xff]
    %v327 = vld [vmem:[%s3 + $0x350] sm:$0xff]
    %v328 = vld [vmem:[%s3 + $0x358] sm:$0xff]
    %v329 = vld [vmem:[%s3 + $0x360] sm:$0xff]
    %v330 = vld [vmem:[%s3 + $0x368] sm:$0xff]
    %v331 = vld [vmem:[%s3 + $0x370] sm:$0xff]
    %v332 = vld [vmem:[%s3 + $0x378] sm:$0xff]
    %v333 = vld [vmem:[%s3 + $0x380] sm:$0xff]
    %v334 = vld [vmem:[%s3 + $0x388] sm:$0xff]
    %v335 = vld [vmem:[%s3 + $0x390] sm:$0xff]
    %v336 = vld [vmem:[%s3 + $0x398] sm:$0xff]
    %v337 = vld [vmem:[%s3 + $0x3a0] sm:$0xff]
    %v338 = vld [vmem:[%s3 + $0x3a8] sm:$0xff]
    %v339 = vld [vmem:[%s3 + $0x3b0] sm:$0xff]
    %v340 = vld [vmem:[%s3 + $0x3b8] sm:$0xff]
    %v341 = vld [vmem:[%s3 + $0x3c0] sm:$0xff]
    %v342 = vld [vmem:[%s3 + $0x3c8] sm:$0xff]
    %v343 = vld [vmem:[%s3 + $0x3d0] sm:$0xff]
    %v344 = vld [vmem:[%s3 + $0x3d8] sm:$0xff]
    %v345 = vld [vmem:[%s3 + $0x3e0] sm:$0xff]
    %v346 = vld [vmem:[%s3 + $0x3e8] sm:$0xff]
    %v347 = vld [vmem:[%s3 + $0x3f0] sm:$0xff]
    %v348 = vld [vmem:[%s3 + $0x3f8] sm:$0xff]
    %v349 = vld [vmem:[%s4] sm:$0xf]
    %v351 = vlaneseq
    %v352 = vshrl.u32 %v351, 7
    %v353 = vsub.s32 0, %v352
    %v354 = vrot.slane %v349, %v353
    %v355 = vlaneseq
    %v356 = vshrl.u32 %v355, 7
    %v357 = vsub.s32 1, %v356
    %v358 = vrot.slane %v349, %v357
    %v359 = vlaneseq
    %v360 = vshrl.u32 %v359, 7
    %v361 = vsub.s32 2, %v360
    %v362 = vrot.slane %v349, %v361
    %v363 = vlaneseq
    %v364 = vshrl.u32 %v363, 7
    %v365 = vsub.s32 3, %v364
    %v366 = vrot.slane %v349, %v365
    %v499 = vunpack.c.l.b16 %v221
    %v500 = vunpack.c.h.b16 %v221
    %v501 = vunpack.c.l.b16 %v222
    %v502 = vunpack.c.h.b16 %v222
    %v503 = vunpack.c.l.b16 %v223
    %v504 = vunpack.c.h.b16 %v223
    %v505 = vunpack.c.l.b16 %v224
    %v506 = vunpack.c.h.b16 %v224
    %v507 = vunpack.c.l.b16 %v225
    %v508 = vunpack.c.h.b16 %v225
    %v509 = vunpack.c.l.b16 %v226
    %v510 = vunpack.c.h.b16 %v226
    %v511 = vunpack.c.l.b16 %v227
    %v512 = vunpack.c.h.b16 %v227
    %v513 = vunpack.c.l.b16 %v228
    %v514 = vunpack.c.h.b16 %v228
    %v515 = vunpack.c.l.b16 %v229
    %v516 = vunpack.c.h.b16 %v229
    %v517 = vunpack.c.l.b16 %v230
    %v518 = vunpack.c.h.b16 %v230
    %v519 = vunpack.c.l.b16 %v231
    %v520 = vunpack.c.h.b16 %v231
    %v521 = vunpack.c.l.b16 %v232
    %v522 = vunpack.c.h.b16 %v232
    %v523 = vunpack.c.l.b16 %v233
    %v524 = vunpack.c.h.b16 %v233
    %v525 = vunpack.c.l.b16 %v234
    %v526 = vunpack.c.h.b16 %v234
    %v527 = vunpack.c.l.b16 %v235
    %v528 = vunpack.c.h.b16 %v235
    %v529 = vunpack.c.l.b16 %v236
    %v530 = vunpack.c.h.b16 %v236
    %v531 = vunpack.c.l.b16 %v237
    %v532 = vunpack.c.h.b16 %v237
    %v533 = vunpack.c.l.b16 %v238
    %v534 = vunpack.c.h.b16 %v238
    %v535 = vunpack.c.l.b16 %v239
    %v536 = vunpack.c.h.b16 %v239
    %v537 = vunpack.c.l.b16 %v240
    %v538 = vunpack.c.h.b16 %v240
    %v539 = vunpack.c.l.b16 %v241
    %v540 = vunpack.c.h.b16 %v241
    %v541 = vunpack.c.l.b16 %v242
    %v542 = vunpack.c.h.b16 %v242
    %v543 = vunpack.c.l.b16 %v243
    %v544 = vunpack.c.h.b16 %v243
    %v545 = vunpack.c.l.b16 %v244
    %v546 = vunpack.c.h.b16 %v244
    %v547 = vunpack.c.l.b16 %v245
    %v548 = vunpack.c.h.b16 %v245
    %v549 = vunpack.c.l.b16 %v246
    %v550 = vunpack.c.h.b16 %v246
    %v551 = vunpack.c.l.b16 %v247
    %v552 = vunpack.c.h.b16 %v247
    %v553 = vunpack.c.l.b16 %v248
    %v554 = vunpack.c.h.b16 %v248
    %v555 = vunpack.c.l.b16 %v249
    %v556 = vunpack.c.h.b16 %v249
    %v557 = vunpack.c.l.b16 %v250
    %v558 = vunpack.c.h.b16 %v250
    %v559 = vunpack.c.l.b16 %v251
    %v560 = vunpack.c.h.b16 %v251
    %v561 = vunpack.c.l.b16 %v252
    %v562 = vunpack.c.h.b16 %v252
    %v563 = vunpack.c.l.b16 %v253
    %v564 = vunpack.c.h.b16 %v253
    %v565 = vunpack.c.l.b16 %v254
    %v566 = vunpack.c.h.b16 %v254
    %v567 = vunpack.c.l.b16 %v255
    %v568 = vunpack.c.h.b16 %v255
    %v569 = vunpack.c.l.b16 %v256
    %v570 = vunpack.c.h.b16 %v256
    %v571 = vunpack.c.l.b16 %v257
    %v572 = vunpack.c.h.b16 %v257
    %v573 = vunpack.c.l.b16 %v258
    %v574 = vunpack.c.h.b16 %v258
    %v575 = vunpack.c.l.b16 %v259
    %v576 = vunpack.c.h.b16 %v259
    %v577 = vunpack.c.l.b16 %v260
    %v578 = vunpack.c.h.b16 %v260
    %v579 = vunpack.c.l.b16 %v261
    %v580 = vunpack.c.h.b16 %v261
    %v581 = vunpack.c.l.b16 %v262
    %v582 = vunpack.c.h.b16 %v262
    %v583 = vunpack.c.l.b16 %v263
    %v584 = vunpack.c.h.b16 %v263
    %v585 = vunpack.c.l.b16 %v264
    %v586 = vunpack.c.h.b16 %v264
    %v587 = vunpack.c.l.b16 %v265
    %v588 = vunpack.c.h.b16 %v265
    %v589 = vunpack.c.l.b16 %v266
    %v590 = vunpack.c.h.b16 %v266
    %v591 = vunpack.c.l.b16 %v267
    %v592 = vunpack.c.h.b16 %v267
    %v593 = vunpack.c.l.b16 %v268
    %v594 = vunpack.c.h.b16 %v268
    %v595 = vunpack.c.l.b16 %v269
    %v596 = vunpack.c.h.b16 %v269
    %v597 = vunpack.c.l.b16 %v270
    %v598 = vunpack.c.h.b16 %v270
    %v599 = vunpack.c.l.b16 %v271
    %v600 = vunpack.c.h.b16 %v271
    %v601 = vunpack.c.l.b16 %v272
    %v602 = vunpack.c.h.b16 %v272
    %v603 = vunpack.c.l.b16 %v273
    %v604 = vunpack.c.h.b16 %v273
    %v605 = vunpack.c.l.b16 %v274
    %v606 = vunpack.c.h.b16 %v274
    %v607 = vunpack.c.l.b16 %v275
    %v608 = vunpack.c.h.b16 %v275
    %v609 = vunpack.c.l.b16 %v276
    %v610 = vunpack.c.h.b16 %v276
    %v611 = vunpack.c.l.b16 %v277
    %v612 = vunpack.c.h.b16 %v277
    %v613 = vunpack.c.l.b16 %v278
    %v614 = vunpack.c.h.b16 %v278
    %v615 = vunpack.c.l.b16 %v279
    %v616 = vunpack.c.h.b16 %v279
    %v617 = vunpack.c.l.b16 %v280
    %v618 = vunpack.c.h.b16 %v280
    %v619 = vunpack.c.l.b16 %v281
    %v620 = vunpack.c.h.b16 %v281
    %v621 = vunpack.c.l.b16 %v282
    %v622 = vunpack.c.h.b16 %v282
    %v623 = vunpack.c.l.b16 %v283
    %v624 = vunpack.c.h.b16 %v283
    %v625 = vunpack.c.l.b16 %v284
    %v626 = vunpack.c.h.b16 %v284
    %v627 = vunpack.c.l.b16 %v285
    %v628 = vunpack.c.h.b16 %v285
    %v629 = vunpack.c.l.b16 %v286
    %v630 = vunpack.c.h.b16 %v286
    %v631 = vunpack.c.l.b16 %v287
    %v632 = vunpack.c.h.b16 %v287
    %v633 = vunpack.c.l.b16 %v288
    %v634 = vunpack.c.h.b16 %v288
    %v635 = vunpack.c.l.b16 %v289
    %v636 = vunpack.c.h.b16 %v289
    %v637 = vunpack.c.l.b16 %v290
    %v638 = vunpack.c.h.b16 %v290
    %v639 = vunpack.c.l.b16 %v291
    %v640 = vunpack.c.h.b16 %v291
    %v641 = vunpack.c.l.b16 %v292
    %v642 = vunpack.c.h.b16 %v292
    %v643 = vunpack.c.l.b16 %v293
    %v644 = vunpack.c.h.b16 %v293
    %v645 = vunpack.c.l.b16 %v294
    %v646 = vunpack.c.h.b16 %v294
    %v647 = vunpack.c.l.b16 %v295
    %v648 = vunpack.c.h.b16 %v295
    %v649 = vunpack.c.l.b16 %v296
    %v650 = vunpack.c.h.b16 %v296
    %v651 = vunpack.c.l.b16 %v297
    %v652 = vunpack.c.h.b16 %v297
    %v653 = vunpack.c.l.b16 %v298
    %v654 = vunpack.c.h.b16 %v298
    %v655 = vunpack.c.l.b16 %v299
    %v656 = vunpack.c.h.b16 %v299
    %v657 = vunpack.c.l.b16 %v300
    %v658 = vunpack.c.h.b16 %v300
    %v659 = vunpack.c.l.b16 %v301
    %v660 = vunpack.c.h.b16 %v301
    %v661 = vunpack.c.l.b16 %v302
    %v662 = vunpack.c.h.b16 %v302
    %v663 = vunpack.c.l.b16 %v303
    %v664 = vunpack.c.h.b16 %v303
    %v665 = vunpack.c.l.b16 %v304
    %v666 = vunpack.c.h.b16 %v304
    %v667 = vunpack.c.l.b16 %v305
    %v668 = vunpack.c.h.b16 %v305
    %v669 = vunpack.c.l.b16 %v306
    %v670 = vunpack.c.h.b16 %v306
    %v671 = vunpack.c.l.b16 %v307
    %v672 = vunpack.c.h.b16 %v307
    %v673 = vunpack.c.l.b16 %v308
    %v674 = vunpack.c.h.b16 %v308
    %v675 = vunpack.c.l.b16 %v309
    %v676 = vunpack.c.h.b16 %v309
    %v677 = vunpack.c.l.b16 %v310
    %v678 = vunpack.c.h.b16 %v310
    %v679 = vunpack.c.l.b16 %v311
    %v680 = vunpack.c.h.b16 %v311
    %v681 = vunpack.c.l.b16 %v312
    %v682 = vunpack.c.h.b16 %v312
    %v683 = vunpack.c.l.b16 %v313
    %v684 = vunpack.c.h.b16 %v313
    %v685 = vunpack.c.l.b16 %v314
    %v686 = vunpack.c.h.b16 %v314
    %v687 = vunpack.c.l.b16 %v315
    %v688 = vunpack.c.h.b16 %v315
    %v689 = vunpack.c.l.b16 %v316
    %v690 = vunpack.c.h.b16 %v316
    %v691 = vunpack.c.l.b16 %v317
    %v692 = vunpack.c.h.b16 %v317
    %v693 = vunpack.c.l.b16 %v318
    %v694 = vunpack.c.h.b16 %v318
    %v695 = vunpack.c.l.b16 %v319
    %v696 = vunpack.c.h.b16 %v319
    %v697 = vunpack.c.l.b16 %v320
    %v698 = vunpack.c.h.b16 %v320
    %v699 = vunpack.c.l.b16 %v321
    %v700 = vunpack.c.h.b16 %v321
    %v701 = vunpack.c.l.b16 %v322
    %v702 = vunpack.c.h.b16 %v322
    %v703 = vunpack.c.l.b16 %v323
    %v704 = vunpack.c.h.b16 %v323
    %v705 = vunpack.c.l.b16 %v324
    %v706 = vunpack.c.h.b16 %v324
    %v707 = vunpack.c.l.b16 %v325
    %v708 = vunpack.c.h.b16 %v325
    %v709 = vunpack.c.l.b16 %v326
    %v710 = vunpack.c.h.b16 %v326
    %v711 = vunpack.c.l.b16 %v327
    %v712 = vunpack.c.h.b16 %v327
    %v713 = vunpack.c.l.b16 %v328
    %v714 = vunpack.c.h.b16 %v328
    %v715 = vunpack.c.l.b16 %v329
    %v716 = vunpack.c.h.b16 %v329
    %v717 = vunpack.c.l.b16 %v330
    %v718 = vunpack.c.h.b16 %v330
    %v719 = vunpack.c.l.b16 %v331
    %v720 = vunpack.c.h.b16 %v331
    %v721 = vunpack.c.l.b16 %v332
    %v722 = vunpack.c.h.b16 %v332
    %v723 = vunpack.c.l.b16 %v333
    %v724 = vunpack.c.h.b16 %v333
    %v725 = vunpack.c.l.b16 %v334
    %v726 = vunpack.c.h.b16 %v334
    %v727 = vunpack.c.l.b16 %v335
    %v728 = vunpack.c.h.b16 %v335
    %v729 = vunpack.c.l.b16 %v336
    %v730 = vunpack.c.h.b16 %v336
    %v731 = vunpack.c.l.b16 %v337
    %v732 = vunpack.c.h.b16 %v337
    %v733 = vunpack.c.l.b16 %v338
    %v734 = vunpack.c.h.b16 %v338
    %v735 = vunpack.c.l.b16 %v339
    %v736 = vunpack.c.h.b16 %v339
    %v737 = vunpack.c.l.b16 %v340
    %v738 = vunpack.c.h.b16 %v340
    %v739 = vunpack.c.l.b16 %v341
    %v740 = vunpack.c.h.b16 %v341
    %v741 = vunpack.c.l.b16 %v342
    %v742 = vunpack.c.h.b16 %v342
    %v743 = vunpack.c.l.b16 %v343
    %v744 = vunpack.c.h.b16 %v343
    %v745 = vunpack.c.l.b16 %v344
    %v746 = vunpack.c.h.b16 %v344
    %v747 = vunpack.c.l.b16 %v345
    %v748 = vunpack.c.h.b16 %v345
    %v749 = vunpack.c.l.b16 %v346
    %v750 = vunpack.c.h.b16 %v346
    %v751 = vunpack.c.l.b16 %v347
    %v752 = vunpack.c.h.b16 %v347
    %v753 = vunpack.c.l.b16 %v348
    %v754 = vunpack.c.h.b16 %v348
    %v755 = vpack.c.b16 %v503, %v499
    %v756 = vpack.c.b16 %v504, %v500
    %v757 = vpack.c.b16 %v505, %v501
    %v758 = vpack.c.b16 %v506, %v502
    %v759 = vpack.c.b16 %v511, %v507
    %v760 = vpack.c.b16 %v512, %v508
    %v761 = vpack.c.b16 %v513, %v509
    %v762 = vpack.c.b16 %v514, %v510
    %v763 = vpack.c.b16 %v519, %v515
    %v764 = vpack.c.b16 %v520, %v516
    %v765 = vpack.c.b16 %v521, %v517
    %v766 = vpack.c.b16 %v522, %v518
    %v767 = vpack.c.b16 %v527, %v523
    %v768 = vpack.c.b16 %v528, %v524
    %v769 = vpack.c.b16 %v529, %v525
    %v770 = vpack.c.b16 %v530, %v526
    %v771 = vpack.c.b16 %v535, %v531
    %v772 = vpack.c.b16 %v536, %v532
    %v773 = vpack.c.b16 %v537, %v533
    %v774 = vpack.c.b16 %v538, %v534
    %v775 = vpack.c.b16 %v543, %v539
    %v776 = vpack.c.b16 %v544, %v540
    %v777 = vpack.c.b16 %v545, %v541
    %v778 = vpack.c.b16 %v546, %v542
    %v779 = vpack.c.b16 %v551, %v547
    %v780 = vpack.c.b16 %v552, %v548
    %v781 = vpack.c.b16 %v553, %v549
    %v782 = vpack.c.b16 %v554, %v550
    %v783 = vpack.c.b16 %v559, %v555
    %v784 = vpack.c.b16 %v560, %v556
    %v785 = vpack.c.b16 %v561, %v557
    %v786 = vpack.c.b16 %v562, %v558
    %v787 = vpack.c.b16 %v567, %v563
    %v788 = vpack.c.b16 %v568, %v564
    %v789 = vpack.c.b16 %v569, %v565
    %v790 = vpack.c.b16 %v570, %v566
    %v791 = vpack.c.b16 %v575, %v571
    %v792 = vpack.c.b16 %v576, %v572
    %v793 = vpack.c.b16 %v577, %v573
    %v794 = vpack.c.b16 %v578, %v574
    %v795 = vpack.c.b16 %v583, %v579
    %v796 = vpack.c.b16 %v584, %v580
    %v797 = vpack.c.b16 %v585, %v581
    %v798 = vpack.c.b16 %v586, %v582
    %v799 = vpack.c.b16 %v591, %v587
    %v800 = vpack.c.b16 %v592, %v588
    %v801 = vpack.c.b16 %v593, %v589
    %v802 = vpack.c.b16 %v594, %v590
    %v803 = vpack.c.b16 %v599, %v595
    %v804 = vpack.c.b16 %v600, %v596
    %v805 = vpack.c.b16 %v601, %v597
    %v806 = vpack.c.b16 %v602, %v598
    %v807 = vpack.c.b16 %v607, %v603
    %v808 = vpack.c.b16 %v608, %v604
    %v809 = vpack.c.b16 %v609, %v605
    %v810 = vpack.c.b16 %v610, %v606
    %v811 = vpack.c.b16 %v615, %v611
    %v812 = vpack.c.b16 %v616, %v612
    %v813 = vpack.c.b16 %v617, %v613
    %v814 = vpack.c.b16 %v618, %v614
    %v815 = vpack.c.b16 %v623, %v619
    %v816 = vpack.c.b16 %v624, %v620
    %v817 = vpack.c.b16 %v625, %v621
    %v818 = vpack.c.b16 %v626, %v622
    %v819 = vpack.c.b16 %v631, %v627
    %v820 = vpack.c.b16 %v632, %v628
    %v821 = vpack.c.b16 %v633, %v629
    %v822 = vpack.c.b16 %v634, %v630
    %v823 = vpack.c.b16 %v639, %v635
    %v824 = vpack.c.b16 %v640, %v636
    %v825 = vpack.c.b16 %v641, %v637
    %v826 = vpack.c.b16 %v642, %v638
    %v827 = vpack.c.b16 %v647, %v643
    %v828 = vpack.c.b16 %v648, %v644
    %v829 = vpack.c.b16 %v649, %v645
    %v830 = vpack.c.b16 %v650, %v646
    %v831 = vpack.c.b16 %v655, %v651
    %v832 = vpack.c.b16 %v656, %v652
    %v833 = vpack.c.b16 %v657, %v653
    %v834 = vpack.c.b16 %v658, %v654
    %v835 = vpack.c.b16 %v663, %v659
    %v836 = vpack.c.b16 %v664, %v660
    %v837 = vpack.c.b16 %v665, %v661
    %v838 = vpack.c.b16 %v666, %v662
    %v839 = vpack.c.b16 %v671, %v667
    %v840 = vpack.c.b16 %v672, %v668
    %v841 = vpack.c.b16 %v673, %v669
    %v842 = vpack.c.b16 %v674, %v670
    %v843 = vpack.c.b16 %v679, %v675
    %v844 = vpack.c.b16 %v680, %v676
    %v845 = vpack.c.b16 %v681, %v677
    %v846 = vpack.c.b16 %v682, %v678
    %v847 = vpack.c.b16 %v687, %v683
    %v848 = vpack.c.b16 %v688, %v684
    %v849 = vpack.c.b16 %v689, %v685
    %v850 = vpack.c.b16 %v690, %v686
    %v851 = vpack.c.b16 %v695, %v691
    %v852 = vpack.c.b16 %v696, %v692
    %v853 = vpack.c.b16 %v697, %v693
    %v854 = vpack.c.b16 %v698, %v694
    %v855 = vpack.c.b16 %v703, %v699
    %v856 = vpack.c.b16 %v704, %v700
    %v857 = vpack.c.b16 %v705, %v701
    %v858 = vpack.c.b16 %v706, %v702
    %v859 = vpack.c.b16 %v711, %v707
    %v860 = vpack.c.b16 %v712, %v708
    %v861 = vpack.c.b16 %v713, %v709
    %v862 = vpack.c.b16 %v714, %v710
    %v863 = vpack.c.b16 %v719, %v715
    %v864 = vpack.c.b16 %v720, %v716
    %v865 = vpack.c.b16 %v721, %v717
    %v866 = vpack.c.b16 %v722, %v718
    %v867 = vpack.c.b16 %v727, %v723
    %v868 = vpack.c.b16 %v728, %v724
    %v869 = vpack.c.b16 %v729, %v725
    %v870 = vpack.c.b16 %v730, %v726
    %v871 = vpack.c.b16 %v735, %v731
    %v872 = vpack.c.b16 %v736, %v732
    %v873 = vpack.c.b16 %v737, %v733
    %v874 = vpack.c.b16 %v738, %v734
    %v875 = vpack.c.b16 %v743, %v739
    %v876 = vpack.c.b16 %v744, %v740
    %v877 = vpack.c.b16 %v745, %v741
    %v878 = vpack.c.b16 %v746, %v742
    %v879 = vpack.c.b16 %v751, %v747
    %v880 = vpack.c.b16 %v752, %v748
    %v881 = vpack.c.b16 %v753, %v749
    %v882 = vpack.c.b16 %v754, %v750
    %1011 = vmatprep.subr.bf16.mxu0 %v756
    %1012 = vmatpush1.bf16.msra.mxu0 %v755
    %1013 = vmatprep.subr.bf16.mxu0 %v760
    %1014 = vmatpush1.bf16.msra.mxu0 %v759
    %1015 = vmatprep.subr.bf16.mxu0 %v764
    %1016 = vmatpush1.bf16.msra.mxu0 %v763
    %1017 = vmatprep.subr.bf16.mxu0 %v768
    %1018 = vmatpush1.bf16.msra.mxu0 %v767
    %1019 = vmatprep.subr.bf16.mxu0 %v772
    %1020 = vmatpush1.bf16.msra.mxu0 %v771
    %1021 = vmatprep.subr.bf16.mxu0 %v776
    %1022 = vmatpush1.bf16.msra.mxu0 %v775
    %1023 = vmatprep.subr.bf16.mxu0 %v780
    %1024 = vmatpush1.bf16.msra.mxu0 %v779
    %1025 = vmatprep.subr.bf16.mxu0 %v784
    %1026 = vmatpush1.bf16.msra.mxu0 %v783
    %1027 = vmatprep.subr.bf16.mxu0 %v788
    %1028 = vmatpush1.bf16.msra.mxu0 %v787
    %1029 = vmatprep.subr.bf16.mxu0 %v792
    %1030 = vmatpush1.bf16.msra.mxu0 %v791
    %1031 = vmatprep.subr.bf16.mxu0 %v796
    %1032 = vmatpush1.bf16.msra.mxu0 %v795
    %1033 = vmatprep.subr.bf16.mxu0 %v800
    %1034 = vmatpush1.bf16.msra.mxu0 %v799
    %1035 = vmatprep.subr.bf16.mxu0 %v804
    %1036 = vmatpush1.bf16.msra.mxu0 %v803
    %1037 = vmatprep.subr.bf16.mxu0 %v808
    %1038 = vmatpush1.bf16.msra.mxu0 %v807
    %1039 = vmatprep.subr.bf16.mxu0 %v812
    %1040 = vmatpush1.bf16.msra.mxu0 %v811
    %1041 = vmatprep.subr.bf16.mxu0 %v816
    %1042 = vmatpush1.bf16.msra.mxu0 %v815
    %1043 = vmatprep.mubr.bf16.mxu0 %v218
    %1044 = vmatmul.mubr.bf16.gmra.mrb[0].mxu0 %v217
    %v1045 = vpop.f32.mrb[0].mxu0
    %v1046 = vadd.f32 %v354, %v1045
    %v1047 = vpop.f32.mrb[0].mxu0
    %v1048 = vadd.f32 %v358, %v1047
    %v1049 = vpop.f32.mrb[0].mxu0
    %v1050 = vpop.f32.mrb[0].mxu0
    %1051 = vdwg.mxu0
    %1052 = vmatprep.subr.bf16.mxu0 %v820
    %1053 = vmatpush1.bf16.msra.mxu0 %v819
    %1054 = vmatprep.subr.bf16.mxu0 %v824
    %1055 = vmatpush1.bf16.msra.mxu0 %v823
    %1056 = vmatprep.subr.bf16.mxu0 %v828
    %1057 = vmatpush1.bf16.msra.mxu0 %v827
    %1058 = vmatprep.subr.bf16.mxu0 %v832
    %1059 = vmatpush1.bf16.msra.mxu0 %v831
    %1060 = vmatprep.subr.bf16.mxu0 %v836
    %1061 = vmatpush1.bf16.msra.mxu0 %v835
    %1062 = vmatprep.subr.bf16.mxu0 %v840
    %1063 = vmatpush1.bf16.msra.mxu0 %v839
    %1064 = vmatprep.subr.bf16.mxu0 %v844
    %1065 = vmatpush1.bf16.msra.mxu0 %v843
    %1066 = vmatprep.subr.bf16.mxu0 %v848
    %1067 = vmatpush1.bf16.msra.mxu0 %v847
    %1068 = vmatprep.subr.bf16.mxu0 %v852
    %1069 = vmatpush1.bf16.msra.mxu0 %v851
    %1070 = vmatprep.subr.bf16.mxu0 %v856
    %1071 = vmatpush1.bf16.msra.mxu0 %v855
    %1072 = vmatprep.subr.bf16.mxu0 %v860
    %1073 = vmatpush1.bf16.msra.mxu0 %v859
    %1074 = vmatprep.subr.bf16.mxu0 %v864
    %1075 = vmatpush1.bf16.msra.mxu0 %v863
    %1076 = vmatprep.subr.bf16.mxu0 %v868
    %1077 = vmatpush1.bf16.msra.mxu0 %v867
    %1078 = vmatprep.subr.bf16.mxu0 %v872
    %1079 = vmatpush1.bf16.msra.mxu0 %v871
    %1080 = vmatprep.subr.bf16.mxu0 %v876
    %1081 = vmatpush1.bf16.msra.mxu0 %v875
    %1082 = vmatprep.subr.bf16.mxu0 %v880
    %1083 = vmatpush1.bf16.msra.mxu0 %v879
    %1084 = vmatprep.mubr.bf16.mxu0 %v220
    %1085 = vmatmul.mubr.bf16.gmra.mrb[0].mxu0 %v219
    %v1086 = vpop.f32.mrb[0].mxu0
    %v1087 = vadd.f32 %v1046, %v1086
    %v1088 = vpop.f32.mrb[0].mxu0
    %v1089 = vadd.f32 %v1048, %v1088
    %v1090 = vpop.f32.mrb[0].mxu0
    %v1091 = vpop.f32.mrb[0].mxu0
    %1092 = vdwg.mxu0
    %1093 = vmatprep.subr.bf16.mxu0 %v758
    %1094 = vmatpush1.bf16.msra.mxu0 %v757
    %1095 = vmatprep.subr.bf16.mxu0 %v762
    %1096 = vmatpush1.bf16.msra.mxu0 %v761
    %1097 = vmatprep.subr.bf16.mxu0 %v766
    %1098 = vmatpush1.bf16.msra.mxu0 %v765
    %1099 = vmatprep.subr.bf16.mxu0 %v770
    %1100 = vmatpush1.bf16.msra.mxu0 %v769
    %1101 = vmatprep.subr.bf16.mxu0 %v774
    %1102 = vmatpush1.bf16.msra.mxu0 %v773
    %1103 = vmatprep.subr.bf16.mxu0 %v778
    %1104 = vmatpush1.bf16.msra.mxu0 %v777
    %1105 = vmatprep.subr.bf16.mxu0 %v782
    %1106 = vmatpush1.bf16.msra.mxu0 %v781
    %1107 = vmatprep.subr.bf16.mxu0 %v786
    %1108 = vmatpush1.bf16.msra.mxu0 %v785
    %1109 = vmatprep.subr.bf16.mxu0 %v790
    %1110 = vmatpush1.bf16.msra.mxu0 %v789
    %1111 = vmatprep.subr.bf16.mxu0 %v794
    %1112 = vmatpush1.bf16.msra.mxu0 %v793
    %1113 = vmatprep.subr.bf16.mxu0 %v798
    %1114 = vmatpush1.bf16.msra.mxu0 %v797
    %1115 = vmatprep.subr.bf16.mxu0 %v802
    %1116 = vmatpush1.bf16.msra.mxu0 %v801
    %1117 = vmatprep.subr.bf16.mxu0 %v806
    %1118 = vmatpush1.bf16.msra.mxu0 %v805
    %1119 = vmatprep.subr.bf16.mxu0 %v810
    %1120 = vmatpush1.bf16.msra.mxu0 %v809
    %1121 = vmatprep.subr.bf16.mxu0 %v814
    %1122 = vmatpush1.bf16.msra.mxu0 %v813
    %1123 = vmatprep.subr.bf16.mxu0 %v818
    %1124 = vmatpush1.bf16.msra.mxu0 %v817
    %1125 = vmatprep.mubr.bf16.mxu0 %v218
    %1126 = vmatmul.mubr.bf16.gmra.mrb[0].mxu0 %v217
    %v1127 = vpop.f32.mrb[0].mxu0
    %v1128 = vadd.f32 %v362, %v1127
    %v1129 = vpop.f32.mrb[0].mxu0
    %v1130 = vadd.f32 %v366, %v1129
    %v1131 = vpop.f32.mrb[0].mxu0
    %v1132 = vpop.f32.mrb[0].mxu0
    %1133 = vdwg.mxu0
    %1134 = vmatprep.subr.bf16.mxu0 %v822
    %1135 = vmatpush1.bf16.msra.mxu0 %v821
    %1136 = vmatprep.subr.bf16.mxu0 %v826
    %1137 = vmatpush1.bf16.msra.mxu0 %v825
    %1138 = vmatprep.subr.bf16.mxu0 %v830
    %1139 = vmatpush1.bf16.msra.mxu0 %v829
    %1140 = vmatprep.subr.bf16.mxu0 %v834
    %1141 = vmatpush1.bf16.msra.mxu0 %v833
    %1142 = vmatprep.subr.bf16.mxu0 %v838
    %1143 = vmatpush1.bf16.msra.mxu0 %v837
    %1144 = vmatprep.subr.bf16.mxu0 %v842
    %1145 = vmatpush1.bf16.msra.mxu0 %v841
    %1146 = vmatprep.subr.bf16.mxu0 %v846
    %1147 = vmatpush1.bf16.msra.mxu0 %v845
    %1148 = vmatprep.subr.bf16.mxu0 %v850
    %1149 = vmatpush1.bf16.msra.mxu0 %v849
    %1150 = vmatprep.subr.bf16.mxu0 %v854
    %1151 = vmatpush1.bf16.msra.mxu0 %v853
    %1152 = vmatprep.subr.bf16.mxu0 %v858
    %1153 = vmatpush1.bf16.msra.mxu0 %v857
    %1154 = vmatprep.subr.bf16.mxu0 %v862
    %1155 = vmatpush1.bf16.msra.mxu0 %v861
    %1156 = vmatprep.subr.bf16.mxu0 %v866
    %1157 = vmatpush1.bf16.msra.mxu0 %v865
    %1158 = vmatprep.subr.bf16.mxu0 %v870
    %1159 = vmatpush1.bf16.msra.mxu0 %v869
    %1160 = vmatprep.subr.bf16.mxu0 %v874
    %1161 = vmatpush1.bf16.msra.mxu0 %v873
    %1162 = vmatprep.subr.bf16.mxu0 %v878
    %1163 = vmatpush1.bf16.msra.mxu0 %v877
    %1164 = vmatprep.subr.bf16.mxu0 %v882
    %1165 = vmatpush1.bf16.msra.mxu0 %v881
    %1166 = vmatprep.mubr.bf16.mxu0 %v220
    %1167 = vmatmul.mubr.bf16.gmra.mrb[0].mxu0 %v219
    %v1168 = vpop.f32.mrb[0].mxu0
    %v1169 = vadd.f32 %v1128, %v1168
    %v1170 = vpop.f32.mrb[0].mxu0
    %v1171 = vadd.f32 %v1130, %v1170
    %v1172 = vpop.f32.mrb[0].mxu0
    %v1173 = vpop.f32.mrb[0].mxu0
    %1174 = vdwg.mxu0
    %v1175 = vld [vmem:[%s5] sm:$0xf]
    %v1177 = vlaneseq
    %v1178 = vshrl.u32 %v1177, 7
    %v1179 = vsub.s32 0, %v1178
    %v1180 = vrot.slane %v1175, %v1179
    %v1181 = vlaneseq
    %v1182 = vshrl.u32 %v1181, 7
    %v1183 = vsub.s32 1, %v1182
    %v1184 = vrot.slane %v1175, %v1183
    %v1185 = vlaneseq
    %v1186 = vshrl.u32 %v1185, 7
    %v1187 = vsub.s32 2, %v1186
    %v1188 = vrot.slane %v1175, %v1187
    %v1189 = vlaneseq
    %v1190 = vshrl.u32 %v1189, 7
    %v1191 = vsub.s32 3, %v1190
    %v1192 = vrot.slane %v1175, %v1191
    %v1197 = vmul.f32 %v1087, %v1180
    %v1198 = vmul.f32 %v1089, %v1184
    %v1199 = vmul.f32 %v1169, %v1188
    %v1200 = vmul.f32 %v1171, %v1192
    %v1201 = vld [vmem:[%s6] sm:$0xf]
    %v1203 = vlaneseq
    %v1204 = vshrl.u32 %v1203, 7
    %v1205 = vsub.s32 0, %v1204
    %v1206 = vrot.slane %v1201, %v1205
    %v1207 = vlaneseq
    %v1208 = vshrl.u32 %v1207, 7
    %v1209 = vsub.s32 1, %v1208
    %v1210 = vrot.slane %v1201, %v1209
    %v1211 = vlaneseq
    %v1212 = vshrl.u32 %v1211, 7
    %v1213 = vsub.s32 2, %v1212
    %v1214 = vrot.slane %v1201, %v1213
    %v1215 = vlaneseq
    %v1216 = vshrl.u32 %v1215, 7
    %v1217 = vsub.s32 3, %v1216
    %v1218 = vrot.slane %v1201, %v1217
    %v1223 = vadd.f32 %v1197, %v1206
    %v1224 = vadd.f32 %v1198, %v1210
    %v1225 = vadd.f32 %v1199, %v1214
    %v1226 = vadd.f32 %v1200, %v1218
    %vm1227 = vcmp.gt.f32.partialorder %v1223, 0.0
    %vm1228 = vcmp.gt.f32.partialorder %v1224, 0.0
    %vm1229 = vcmp.gt.f32.partialorder %v1225, 0.0
    %vm1230 = vcmp.gt.f32.partialorder %v1226, 0.0
    %v1231 = vmul.f32 %v1223, 0.2
    %v1232 = vmul.f32 %v1224, 0.2
    %v1233 = vmul.f32 %v1225, 0.2
    %v1234 = vmul.f32 %v1226, 0.2
    %v1235 = vsel %vm1227, %v1223, %v1231
    %v1236 = vsel %vm1228, %v1224, %v1232
    %v1237 = vsel %vm1229, %v1225, %v1233
    %v1238 = vsel %vm1230, %v1226, %v1234
    %v1239 = vpack.c.bf16 %v1235, %v1235
    %v1240 = vpack.c.bf16 %v1236, %v1236
    %v1241 = vpack.c.bf16 %v1237, %v1237
    %v1242 = vpack.c.bf16 %v1238, %v1238
    %v1243 = vld [vmem:[#allocation2] sm:$0xff]
    %v1244 = vld [vmem:[#allocation2 + $0x8] sm:$0xff]
    %v1245 = vld [vmem:[#allocation2 + $0x10] sm:$0xff]
    %v1246 = vld [vmem:[#allocation2 + $0x18] sm:$0xff]
    %v1247 = vld [vmem:[#allocation2 + $0x20] sm:$0xff]
    %v1248 = vld [vmem:[#allocation2 + $0x28] sm:$0xff]
    %v1249 = vld [vmem:[#allocation2 + $0x30] sm:$0xff]
    %v1250 = vld [vmem:[#allocation2 + $0x38] sm:$0xff]
    %v1251 = vld [vmem:[#allocation2 + $0x40] sm:$0xff]
    %v1252 = vld [vmem:[#allocation2 + $0x48] sm:$0xff]
    %v1253 = vld [vmem:[#allocation2 + $0x50] sm:$0xff]
    %v1254 = vld [vmem:[#allocation2 + $0x58] sm:$0xff]
    %v1255 = vld [vmem:[#allocation2 + $0x60] sm:$0xff]
    %v1256 = vld [vmem:[#allocation2 + $0x68] sm:$0xff]
    %v1257 = vld [vmem:[#allocation2 + $0x70] sm:$0xff]
    %v1258 = vld [vmem:[#allocation2 + $0x78] sm:$0xff]
    %v1259 = vld [vmem:[#allocation2 + $0x80] sm:$0xff]
    %v1260 = vld [vmem:[#allocation2 + $0x88] sm:$0xff]
    %v1261 = vld [vmem:[#allocation2 + $0x90] sm:$0xff]
    %v1262 = vld [vmem:[#allocation2 + $0x98] sm:$0xff]
    %v1263 = vld [vmem:[#allocation2 + $0xa0] sm:$0xff]
    %v1264 = vld [vmem:[#allocation2 + $0xa8] sm:$0xff]
    %v1265 = vld [vmem:[#allocation2 + $0xb0] sm:$0xff]
    %v1266 = vld [vmem:[#allocation2 + $0xb8] sm:$0xff]
    %v1267 = vld [vmem:[#allocation2 + $0xc0] sm:$0xff]
    %v1268 = vld [vmem:[#allocation2 + $0xc8] sm:$0xff]
    %v1269 = vld [vmem:[#allocation2 + $0xd0] sm:$0xff]
    %v1270 = vld [vmem:[#allocation2 + $0xd8] sm:$0xff]
    %v1271 = vld [vmem:[#allocation2 + $0xe0] sm:$0xff]
    %v1272 = vld [vmem:[#allocation2 + $0xe8] sm:$0xff]
    %v1273 = vld [vmem:[#allocation2 + $0xf0] sm:$0xff]
    %v1274 = vld [vmem:[#allocation2 + $0xf8] sm:$0xff]
    %v1275 = vld [vmem:[#allocation2 + $0x100] sm:$0xff]
    %v1276 = vld [vmem:[#allocation2 + $0x108] sm:$0xff]
    %v1277 = vld [vmem:[#allocation2 + $0x110] sm:$0xff]
    %v1278 = vld [vmem:[#allocation2 + $0x118] sm:$0xff]
    %v1279 = vld [vmem:[#allocation2 + $0x120] sm:$0xff]
    %v1280 = vld [vmem:[#allocation2 + $0x128] sm:$0xff]
    %v1281 = vld [vmem:[#allocation2 + $0x130] sm:$0xff]
    %v1282 = vld [vmem:[#allocation2 + $0x138] sm:$0xff]
    %v1283 = vld [vmem:[#allocation2 + $0x140] sm:$0xff]
    %v1284 = vld [vmem:[#allocation2 + $0x148] sm:$0xff]
    %v1285 = vld [vmem:[#allocation2 + $0x150] sm:$0xff]
    %v1286 = vld [vmem:[#allocation2 + $0x158] sm:$0xff]
    %v1287 = vld [vmem:[#allocation2 + $0x160] sm:$0xff]
    %v1288 = vld [vmem:[#allocation2 + $0x168] sm:$0xff]
    %v1289 = vld [vmem:[#allocation2 + $0x170] sm:$0xff]
    %v1290 = vld [vmem:[#allocation2 + $0x178] sm:$0xff]
    %v1291 = vld [vmem:[#allocation2 + $0x180] sm:$0xff]
    %v1292 = vld [vmem:[#allocation2 + $0x188] sm:$0xff]
    %v1293 = vld [vmem:[#allocation2 + $0x190] sm:$0xff]
    %v1294 = vld [vmem:[#allocation2 + $0x198] sm:$0xff]
    %v1295 = vld [vmem:[#allocation2 + $0x1a0] sm:$0xff]
    %v1296 = vld [vmem:[#allocation2 + $0x1a8] sm:$0xff]
    %v1297 = vld [vmem:[#allocation2 + $0x1b0] sm:$0xff]
    %v1298 = vld [vmem:[#allocation2 + $0x1b8] sm:$0xff]
    %v1299 = vld [vmem:[#allocation2 + $0x1c0] sm:$0xff]
    %v1300 = vld [vmem:[#allocation2 + $0x1c8] sm:$0xff]
    %v1301 = vld [vmem:[#allocation2 + $0x1d0] sm:$0xff]
    %v1302 = vld [vmem:[#allocation2 + $0x1d8] sm:$0xff]
    %v1303 = vld [vmem:[#allocation2 + $0x1e0] sm:$0xff]
    %v1304 = vld [vmem:[#allocation2 + $0x1e8] sm:$0xff]
    %v1305 = vld [vmem:[#allocation2 + $0x1f0] sm:$0xff]
    %v1306 = vld [vmem:[#allocation2 + $0x1f8] sm:$0xff]
    %v1307 = vld [vmem:[#allocation2 + $0x200] sm:$0xff]
    %v1308 = vld [vmem:[#allocation2 + $0x208] sm:$0xff]
    %v1309 = vld [vmem:[#allocation2 + $0x210] sm:$0xff]
    %v1310 = vld [vmem:[#allocation2 + $0x218] sm:$0xff]
    %v1311 = vld [vmem:[#allocation2 + $0x220] sm:$0xff]
    %v1312 = vld [vmem:[#allocation2 + $0x228] sm:$0xff]
    %v1313 = vld [vmem:[#allocation2 + $0x230] sm:$0xff]
    %v1314 = vld [vmem:[#allocation2 + $0x238] sm:$0xff]
    %v1315 = vld [vmem:[#allocation2 + $0x240] sm:$0xff]
    %v1316 = vld [vmem:[#allocation2 + $0x248] sm:$0xff]
    %v1317 = vld [vmem:[#allocation2 + $0x250] sm:$0xff]
    %v1318 = vld [vmem:[#allocation2 + $0x258] sm:$0xff]
    %v1319 = vld [vmem:[#allocation2 + $0x260] sm:$0xff]
    %v1320 = vld [vmem:[#allocation2 + $0x268] sm:$0xff]
    %v1321 = vld [vmem:[#allocation2 + $0x270] sm:$0xff]
    %v1322 = vld [vmem:[#allocation2 + $0x278] sm:$0xff]
    %v1323 = vld [vmem:[#allocation2 + $0x280] sm:$0xff]
    %v1324 = vld [vmem:[#allocation2 + $0x288] sm:$0xff]
    %v1325 = vld [vmem:[#allocation2 + $0x290] sm:$0xff]
    %v1326 = vld [vmem:[#allocation2 + $0x298] sm:$0xff]
    %v1327 = vld [vmem:[#allocation2 + $0x2a0] sm:$0xff]
    %v1328 = vld [vmem:[#allocation2 + $0x2a8] sm:$0xff]
    %v1329 = vld [vmem:[#allocation2 + $0x2b0] sm:$0xff]
    %v1330 = vld [vmem:[#allocation2 + $0x2b8] sm:$0xff]
    %v1331 = vld [vmem:[#allocation2 + $0x2c0] sm:$0xff]
    %v1332 = vld [vmem:[#allocation2 + $0x2c8] sm:$0xff]
    %v1333 = vld [vmem:[#allocation2 + $0x2d0] sm:$0xff]
    %v1334 = vld [vmem:[#allocation2 + $0x2d8] sm:$0xff]
    %v1335 = vld [vmem:[#allocation2 + $0x2e0] sm:$0xff]
    %v1336 = vld [vmem:[#allocation2 + $0x2e8] sm:$0xff]
    %v1337 = vld [vmem:[#allocation2 + $0x2f0] sm:$0xff]
    %v1338 = vld [vmem:[#allocation2 + $0x2f8] sm:$0xff]
    %v1339 = vld [vmem:[#allocation2 + $0x300] sm:$0xff]
    %v1340 = vld [vmem:[#allocation2 + $0x308] sm:$0xff]
    %v1341 = vld [vmem:[#allocation2 + $0x310] sm:$0xff]
    %v1342 = vld [vmem:[#allocation2 + $0x318] sm:$0xff]
    %v1343 = vld [vmem:[#allocation2 + $0x320] sm:$0xff]
    %v1344 = vld [vmem:[#allocation2 + $0x328] sm:$0xff]
    %v1345 = vld [vmem:[#allocation2 + $0x330] sm:$0xff]
    %v1346 = vld [vmem:[#allocation2 + $0x338] sm:$0xff]
    %v1347 = vld [vmem:[#allocation2 + $0x340] sm:$0xff]
    %v1348 = vld [vmem:[#allocation2 + $0x348] sm:$0xff]
    %v1349 = vld [vmem:[#allocation2 + $0x350] sm:$0xff]
    %v1350 = vld [vmem:[#allocation2 + $0x358] sm:$0xff]
    %v1351 = vld [vmem:[#allocation2 + $0x360] sm:$0xff]
    %v1352 = vld [vmem:[#allocation2 + $0x368] sm:$0xff]
    %v1353 = vld [vmem:[#allocation2 + $0x370] sm:$0xff]
    %v1354 = vld [vmem:[#allocation2 + $0x378] sm:$0xff]
    %v1355 = vld [vmem:[#allocation2 + $0x380] sm:$0xff]
    %v1356 = vld [vmem:[#allocation2 + $0x388] sm:$0xff]
    %v1357 = vld [vmem:[#allocation2 + $0x390] sm:$0xff]
    %v1358 = vld [vmem:[#allocation2 + $0x398] sm:$0xff]
    %v1359 = vld [vmem:[#allocation2 + $0x3a0] sm:$0xff]
    %v1360 = vld [vmem:[#allocation2 + $0x3a8] sm:$0xff]
    %v1361 = vld [vmem:[#allocation2 + $0x3b0] sm:$0xff]
    %v1362 = vld [vmem:[#allocation2 + $0x3b8] sm:$0xff]
    %v1363 = vld [vmem:[#allocation2 + $0x3c0] sm:$0xff]
    %v1364 = vld [vmem:[#allocation2 + $0x3c8] sm:$0xff]
    %v1365 = vld [vmem:[#allocation2 + $0x3d0] sm:$0xff]
    %v1366 = vld [vmem:[#allocation2 + $0x3d8] sm:$0xff]
    %v1367 = vld [vmem:[#allocation2 + $0x3e0] sm:$0xff]
    %v1368 = vld [vmem:[#allocation2 + $0x3e8] sm:$0xff]
    %v1369 = vld [vmem:[#allocation2 + $0x3f0] sm:$0xff]
    %v1370 = vld [vmem:[#allocation2 + $0x3f8] sm:$0xff]
    %v1371 = vld [vmem:[#allocation2 + $0x400] sm:$0xff]
    %v1372 = vld [vmem:[#allocation2 + $0x408] sm:$0xff]
    %v1373 = vld [vmem:[#allocation2 + $0x410] sm:$0xff]
    %v1374 = vld [vmem:[#allocation2 + $0x418] sm:$0xff]
    %v1375 = vld [vmem:[#allocation2 + $0x420] sm:$0xff]
    %v1376 = vld [vmem:[#allocation2 + $0x428] sm:$0xff]
    %v1377 = vld [vmem:[#allocation2 + $0x430] sm:$0xff]
    %v1378 = vld [vmem:[#allocation2 + $0x438] sm:$0xff]
    %v1379 = vld [vmem:[#allocation2 + $0x440] sm:$0xff]
    %v1380 = vld [vmem:[#allocation2 + $0x448] sm:$0xff]
    %v1381 = vld [vmem:[#allocation2 + $0x450] sm:$0xff]
    %v1382 = vld [vmem:[#allocation2 + $0x458] sm:$0xff]
    %v1383 = vld [vmem:[#allocation2 + $0x460] sm:$0xff]
    %v1384 = vld [vmem:[#allocation2 + $0x468] sm:$0xff]
    %v1385 = vld [vmem:[#allocation2 + $0x470] sm:$0xff]
    %v1386 = vld [vmem:[#allocation2 + $0x478] sm:$0xff]
    %v1387 = vld [vmem:[#allocation2 + $0x480] sm:$0xff]
    %v1388 = vld [vmem:[#allocation2 + $0x488] sm:$0xff]
    %v1389 = vld [vmem:[#allocation2 + $0x490] sm:$0xff]
    %v1390 = vld [vmem:[#allocation2 + $0x498] sm:$0xff]
    %v1391 = vld [vmem:[#allocation2 + $0x4a0] sm:$0xff]
    %v1392 = vld [vmem:[#allocation2 + $0x4a8] sm:$0xff]
    %v1393 = vld [vmem:[#allocation2 + $0x4b0] sm:$0xff]
    %v1394 = vld [vmem:[#allocation2 + $0x4b8] sm:$0xff]
    %v1395 = vld [vmem:[#allocation2 + $0x4c0] sm:$0xff]
    %v1396 = vld [vmem:[#allocation2 + $0x4c8] sm:$0xff]
    %v1397 = vld [vmem:[#allocation2 + $0x4d0] sm:$0xff]
    %v1398 = vld [vmem:[#allocation2 + $0x4d8] sm:$0xff]
    %v1399 = vld [vmem:[#allocation2 + $0x4e0] sm:$0xff]
    %v1400 = vld [vmem:[#allocation2 + $0x4e8] sm:$0xff]
    %v1401 = vld [vmem:[#allocation2 + $0x4f0] sm:$0xff]
    %v1402 = vld [vmem:[#allocation2 + $0x4f8] sm:$0xff]
    %v1403 = vld [vmem:[#allocation2 + $0x500] sm:$0xff]
    %v1404 = vld [vmem:[#allocation2 + $0x508] sm:$0xff]
    %v1405 = vld [vmem:[#allocation2 + $0x510] sm:$0xff]
    %v1406 = vld [vmem:[#allocation2 + $0x518] sm:$0xff]
    %v1407 = vld [vmem:[#allocation2 + $0x520] sm:$0xff]
    %v1408 = vld [vmem:[#allocation2 + $0x528] sm:$0xff]
    %v1409 = vld [vmem:[#allocation2 + $0x530] sm:$0xff]
    %v1410 = vld [vmem:[#allocation2 + $0x538] sm:$0xff]
    %v1411 = vld [vmem:[#allocation2 + $0x540] sm:$0xff]
    %v1412 = vld [vmem:[#allocation2 + $0x548] sm:$0xff]
    %v1413 = vld [vmem:[#allocation2 + $0x550] sm:$0xff]
    %v1414 = vld [vmem:[#allocation2 + $0x558] sm:$0xff]
    %v1415 = vld [vmem:[#allocation2 + $0x560] sm:$0xff]
    %v1416 = vld [vmem:[#allocation2 + $0x568] sm:$0xff]
    %v1417 = vld [vmem:[#allocation2 + $0x570] sm:$0xff]
    %v1418 = vld [vmem:[#allocation2 + $0x578] sm:$0xff]
    %v1419 = vld [vmem:[#allocation2 + $0x580] sm:$0xff]
    %v1420 = vld [vmem:[#allocation2 + $0x588] sm:$0xff]
    %v1421 = vld [vmem:[#allocation2 + $0x590] sm:$0xff]
    %v1422 = vld [vmem:[#allocation2 + $0x598] sm:$0xff]
    %v1423 = vld [vmem:[#allocation2 + $0x5a0] sm:$0xff]
    %v1424 = vld [vmem:[#allocation2 + $0x5a8] sm:$0xff]
    %v1425 = vld [vmem:[#allocation2 + $0x5b0] sm:$0xff]
    %v1426 = vld [vmem:[#allocation2 + $0x5b8] sm:$0xff]
    %v1427 = vld [vmem:[#allocation2 + $0x5c0] sm:$0xff]
    %v1428 = vld [vmem:[#allocation2 + $0x5c8] sm:$0xff]
    %v1429 = vld [vmem:[#allocation2 + $0x5d0] sm:$0xff]
    %v1430 = vld [vmem:[#allocation2 + $0x5d8] sm:$0xff]
    %v1431 = vld [vmem:[#allocation2 + $0x5e0] sm:$0xff]
    %v1432 = vld [vmem:[#allocation2 + $0x5e8] sm:$0xff]
    %v1433 = vld [vmem:[#allocation2 + $0x5f0] sm:$0xff]
    %v1434 = vld [vmem:[#allocation2 + $0x5f8] sm:$0xff]
    %v1435 = vld [vmem:[#allocation2 + $0x600] sm:$0xff]
    %v1436 = vld [vmem:[#allocation2 + $0x608] sm:$0xff]
    %v1437 = vld [vmem:[#allocation2 + $0x610] sm:$0xff]
    %v1438 = vld [vmem:[#allocation2 + $0x618] sm:$0xff]
    %v1439 = vld [vmem:[#allocation2 + $0x620] sm:$0xff]
    %v1440 = vld [vmem:[#allocation2 + $0x628] sm:$0xff]
    %v1441 = vld [vmem:[#allocation2 + $0x630] sm:$0xff]
    %v1442 = vld [vmem:[#allocation2 + $0x638] sm:$0xff]
    %v1443 = vld [vmem:[#allocation2 + $0x640] sm:$0xff]
    %v1444 = vld [vmem:[#allocation2 + $0x648] sm:$0xff]
    %v1445 = vld [vmem:[#allocation2 + $0x650] sm:$0xff]
    %v1446 = vld [vmem:[#allocation2 + $0x658] sm:$0xff]
    %v1447 = vld [vmem:[#allocation2 + $0x660] sm:$0xff]
    %v1448 = vld [vmem:[#allocation2 + $0x668] sm:$0xff]
    %v1449 = vld [vmem:[#allocation2 + $0x670] sm:$0xff]
    %v1450 = vld [vmem:[#allocation2 + $0x678] sm:$0xff]
    %v1451 = vld [vmem:[#allocation2 + $0x680] sm:$0xff]
    %v1452 = vld [vmem:[#allocation2 + $0x688] sm:$0xff]
    %v1453 = vld [vmem:[#allocation2 + $0x690] sm:$0xff]
    %v1454 = vld [vmem:[#allocation2 + $0x698] sm:$0xff]
    %v1455 = vld [vmem:[#allocation2 + $0x6a0] sm:$0xff]
    %v1456 = vld [vmem:[#allocation2 + $0x6a8] sm:$0xff]
    %v1457 = vld [vmem:[#allocation2 + $0x6b0] sm:$0xff]
    %v1458 = vld [vmem:[#allocation2 + $0x6b8] sm:$0xff]
    %v1459 = vld [vmem:[#allocation2 + $0x6c0] sm:$0xff]
    %v1460 = vld [vmem:[#allocation2 + $0x6c8] sm:$0xff]
    %v1461 = vld [vmem:[#allocation2 + $0x6d0] sm:$0xff]
    %v1462 = vld [vmem:[#allocation2 + $0x6d8] sm:$0xff]
    %v1463 = vld [vmem:[#allocation2 + $0x6e0] sm:$0xff]
    %v1464 = vld [vmem:[#allocation2 + $0x6e8] sm:$0xff]
    %v1465 = vld [vmem:[#allocation2 + $0x6f0] sm:$0xff]
    %v1466 = vld [vmem:[#allocation2 + $0x6f8] sm:$0xff]
    %v1467 = vld [vmem:[#allocation2 + $0x700] sm:$0xff]
    %v1468 = vld [vmem:[#allocation2 + $0x708] sm:$0xff]
    %v1469 = vld [vmem:[#allocation2 + $0x710] sm:$0xff]
    %v1470 = vld [vmem:[#allocation2 + $0x718] sm:$0xff]
    %v1471 = vld [vmem:[#allocation2 + $0x720] sm:$0xff]
    %v1472 = vld [vmem:[#allocation2 + $0x728] sm:$0xff]
    %v1473 = vld [vmem:[#allocation2 + $0x730] sm:$0xff]
    %v1474 = vld [vmem:[#allocation2 + $0x738] sm:$0xff]
    %v1475 = vld [vmem:[#allocation2 + $0x740] sm:$0xff]
    %v1476 = vld [vmem:[#allocation2 + $0x748] sm:$0xff]
    %v1477 = vld [vmem:[#allocation2 + $0x750] sm:$0xff]
    %v1478 = vld [vmem:[#allocation2 + $0x758] sm:$0xff]
    %v1479 = vld [vmem:[#allocation2 + $0x760] sm:$0xff]
    %v1480 = vld [vmem:[#allocation2 + $0x768] sm:$0xff]
    %v1481 = vld [vmem:[#allocation2 + $0x770] sm:$0xff]
    %v1482 = vld [vmem:[#allocation2 + $0x778] sm:$0xff]
    %v1483 = vld [vmem:[#allocation2 + $0x780] sm:$0xff]
    %v1484 = vld [vmem:[#allocation2 + $0x788] sm:$0xff]
    %v1485 = vld [vmem:[#allocation2 + $0x790] sm:$0xff]
    %v1486 = vld [vmem:[#allocation2 + $0x798] sm:$0xff]
    %v1487 = vld [vmem:[#allocation2 + $0x7a0] sm:$0xff]
    %v1488 = vld [vmem:[#allocation2 + $0x7a8] sm:$0xff]
    %v1489 = vld [vmem:[#allocation2 + $0x7b0] sm:$0xff]
    %v1490 = vld [vmem:[#allocation2 + $0x7b8] sm:$0xff]
    %v1491 = vld [vmem:[#allocation2 + $0x7c0] sm:$0xff]
    %v1492 = vld [vmem:[#allocation2 + $0x7c8] sm:$0xff]
    %v1493 = vld [vmem:[#allocation2 + $0x7d0] sm:$0xff]
    %v1494 = vld [vmem:[#allocation2 + $0x7d8] sm:$0xff]
    %v1495 = vld [vmem:[#allocation2 + $0x7e0] sm:$0xff]
    %v1496 = vld [vmem:[#allocation2 + $0x7e8] sm:$0xff]
    %v1497 = vld [vmem:[#allocation2 + $0x7f0] sm:$0xff]
    %v1498 = vld [vmem:[#allocation2 + $0x7f8] sm:$0xff]
    %v1499 = vld [vmem:[%s8] sm:$0xff]
    %v1501 = vlaneseq
    %v1502 = vshrl.u32 %v1501, 7
    %v1503 = vsub.s32 0, %v1502
    %v1504 = vrot.slane %v1499, %v1503
    %v1505 = vlaneseq
    %v1506 = vshrl.u32 %v1505, 7
    %v1507 = vsub.s32 1, %v1506
    %v1508 = vrot.slane %v1499, %v1507
    %v1509 = vlaneseq
    %v1510 = vshrl.u32 %v1509, 7
    %v1511 = vsub.s32 2, %v1510
    %v1512 = vrot.slane %v1499, %v1511
    %v1513 = vlaneseq
    %v1514 = vshrl.u32 %v1513, 7
    %v1515 = vsub.s32 3, %v1514
    %v1516 = vrot.slane %v1499, %v1515
    %v1517 = vlaneseq
    %v1518 = vshrl.u32 %v1517, 7
    %v1519 = vsub.s32 4, %v1518
    %v1520 = vrot.slane %v1499, %v1519
    %v1521 = vlaneseq
    %v1522 = vshrl.u32 %v1521, 7
    %v1523 = vsub.s32 5, %v1522
    %v1524 = vrot.slane %v1499, %v1523
    %v1525 = vlaneseq
    %v1526 = vshrl.u32 %v1525, 7
    %v1527 = vsub.s32 6, %v1526
    %v1528 = vrot.slane %v1499, %v1527
    %v1529 = vlaneseq
    %v1530 = vshrl.u32 %v1529, 7
    %v1531 = vsub.s32 7, %v1530
    %v1532 = vrot.slane %v1499, %v1531
    %v1797 = vunpack.c.l.b16 %v1243
    %v1798 = vunpack.c.h.b16 %v1243
    %v1799 = vunpack.c.l.b16 %v1244
    %v1800 = vunpack.c.h.b16 %v1244
    %v1801 = vunpack.c.l.b16 %v1245
    %v1802 = vunpack.c.h.b16 %v1245
    %v1803 = vunpack.c.l.b16 %v1246
    %v1804 = vunpack.c.h.b16 %v1246
    %v1805 = vunpack.c.l.b16 %v1247
    %v1806 = vunpack.c.h.b16 %v1247
    %v1807 = vunpack.c.l.b16 %v1248
    %v1808 = vunpack.c.h.b16 %v1248
    %v1809 = vunpack.c.l.b16 %v1249
    %v1810 = vunpack.c.h.b16 %v1249
    %v1811 = vunpack.c.l.b16 %v1250
    %v1812 = vunpack.c.h.b16 %v1250
    %v1813 = vunpack.c.l.b16 %v1251
    %v1814 = vunpack.c.h.b16 %v1251
    %v1815 = vunpack.c.l.b16 %v1252
    %v1816 = vunpack.c.h.b16 %v1252
    %v1817 = vunpack.c.l.b16 %v1253
    %v1818 = vunpack.c.h.b16 %v1253
    %v1819 = vunpack.c.l.b16 %v1254
    %v1820 = vunpack.c.h.b16 %v1254
    %v1821 = vunpack.c.l.b16 %v1255
    %v1822 = vunpack.c.h.b16 %v1255
    %v1823 = vunpack.c.l.b16 %v1256
    %v1824 = vunpack.c.h.b16 %v1256
    %v1825 = vunpack.c.l.b16 %v1257
    %v1826 = vunpack.c.h.b16 %v1257
    %v1827 = vunpack.c.l.b16 %v1258
    %v1828 = vunpack.c.h.b16 %v1258
    %v1829 = vunpack.c.l.b16 %v1259
    %v1830 = vunpack.c.h.b16 %v1259
    %v1831 = vunpack.c.l.b16 %v1260
    %v1832 = vunpack.c.h.b16 %v1260
    %v1833 = vunpack.c.l.b16 %v1261
    %v1834 = vunpack.c.h.b16 %v1261
    %v1835 = vunpack.c.l.b16 %v1262
    %v1836 = vunpack.c.h.b16 %v1262
    %v1837 = vunpack.c.l.b16 %v1263
    %v1838 = vunpack.c.h.b16 %v1263
    %v1839 = vunpack.c.l.b16 %v1264
    %v1840 = vunpack.c.h.b16 %v1264
    %v1841 = vunpack.c.l.b16 %v1265
    %v1842 = vunpack.c.h.b16 %v1265
    %v1843 = vunpack.c.l.b16 %v1266
    %v1844 = vunpack.c.h.b16 %v1266
    %v1845 = vunpack.c.l.b16 %v1267
    %v1846 = vunpack.c.h.b16 %v1267
    %v1847 = vunpack.c.l.b16 %v1268
    %v1848 = vunpack.c.h.b16 %v1268
    %v1849 = vunpack.c.l.b16 %v1269
    %v1850 = vunpack.c.h.b16 %v1269
    %v1851 = vunpack.c.l.b16 %v1270
    %v1852 = vunpack.c.h.b16 %v1270
    %v1853 = vunpack.c.l.b16 %v1271
    %v1854 = vunpack.c.h.b16 %v1271
    %v1855 = vunpack.c.l.b16 %v1272
    %v1856 = vunpack.c.h.b16 %v1272
    %v1857 = vunpack.c.l.b16 %v1273
    %v1858 = vunpack.c.h.b16 %v1273
    %v1859 = vunpack.c.l.b16 %v1274
    %v1860 = vunpack.c.h.b16 %v1274
    %v1861 = vunpack.c.l.b16 %v1275
    %v1862 = vunpack.c.h.b16 %v1275
    %v1863 = vunpack.c.l.b16 %v1276
    %v1864 = vunpack.c.h.b16 %v1276
    %v1865 = vunpack.c.l.b16 %v1277
    %v1866 = vunpack.c.h.b16 %v1277
    %v1867 = vunpack.c.l.b16 %v1278
    %v1868 = vunpack.c.h.b16 %v1278
    %v1869 = vunpack.c.l.b16 %v1279
    %v1870 = vunpack.c.h.b16 %v1279
    %v1871 = vunpack.c.l.b16 %v1280
    %v1872 = vunpack.c.h.b16 %v1280
    %v1873 = vunpack.c.l.b16 %v1281
    %v1874 = vunpack.c.h.b16 %v1281
    %v1875 = vunpack.c.l.b16 %v1282
    %v1876 = vunpack.c.h.b16 %v1282
    %v1877 = vunpack.c.l.b16 %v1283
    %v1878 = vunpack.c.h.b16 %v1283
    %v1879 = vunpack.c.l.b16 %v1284
    %v1880 = vunpack.c.h.b16 %v1284
    %v1881 = vunpack.c.l.b16 %v1285
    %v1882 = vunpack.c.h.b16 %v1285
    %v1883 = vunpack.c.l.b16 %v1286
    %v1884 = vunpack.c.h.b16 %v1286
    %v1885 = vunpack.c.l.b16 %v1287
    %v1886 = vunpack.c.h.b16 %v1287
    %v1887 = vunpack.c.l.b16 %v1288
    %v1888 = vunpack.c.h.b16 %v1288
    %v1889 = vunpack.c.l.b16 %v1289
    %v1890 = vunpack.c.h.b16 %v1289
    %v1891 = vunpack.c.l.b16 %v1290
    %v1892 = vunpack.c.h.b16 %v1290
    %v1893 = vunpack.c.l.b16 %v1291
    %v1894 = vunpack.c.h.b16 %v1291
    %v1895 = vunpack.c.l.b16 %v1292
    %v1896 = vunpack.c.h.b16 %v1292
    %v1897 = vunpack.c.l.b16 %v1293
    %v1898 = vunpack.c.h.b16 %v1293
    %v1899 = vunpack.c.l.b16 %v1294
    %v1900 = vunpack.c.h.b16 %v1294
    %v1901 = vunpack.c.l.b16 %v1295
    %v1902 = vunpack.c.h.b16 %v1295
    %v1903 = vunpack.c.l.b16 %v1296
    %v1904 = vunpack.c.h.b16 %v1296
    %v1905 = vunpack.c.l.b16 %v1297
    %v1906 = vunpack.c.h.b16 %v1297
    %v1907 = vunpack.c.l.b16 %v1298
    %v1908 = vunpack.c.h.b16 %v1298
    %v1909 = vunpack.c.l.b16 %v1299
    %v1910 = vunpack.c.h.b16 %v1299
    %v1911 = vunpack.c.l.b16 %v1300
    %v1912 = vunpack.c.h.b16 %v1300
    %v1913 = vunpack.c.l.b16 %v1301
    %v1914 = vunpack.c.h.b16 %v1301
    %v1915 = vunpack.c.l.b16 %v1302
    %v1916 = vunpack.c.h.b16 %v1302
    %v1917 = vunpack.c.l.b16 %v1303
    %v1918 = vunpack.c.h.b16 %v1303
    %v1919 = vunpack.c.l.b16 %v1304
    %v1920 = vunpack.c.h.b16 %v1304
    %v1921 = vunpack.c.l.b16 %v1305
    %v1922 = vunpack.c.h.b16 %v1305
    %v1923 = vunpack.c.l.b16 %v1306
    %v1924 = vunpack.c.h.b16 %v1306
    %v1925 = vunpack.c.l.b16 %v1307
    %v1926 = vunpack.c.h.b16 %v1307
    %v1927 = vunpack.c.l.b16 %v1308
    %v1928 = vunpack.c.h.b16 %v1308
    %v1929 = vunpack.c.l.b16 %v1309
    %v1930 = vunpack.c.h.b16 %v1309
    %v1931 = vunpack.c.l.b16 %v1310
    %v1932 = vunpack.c.h.b16 %v1310
    %v1933 = vunpack.c.l.b16 %v1311
    %v1934 = vunpack.c.h.b16 %v1311
    %v1935 = vunpack.c.l.b16 %v1312
    %v1936 = vunpack.c.h.b16 %v1312
    %v1937 = vunpack.c.l.b16 %v1313
    %v1938 = vunpack.c.h.b16 %v1313
    %v1939 = vunpack.c.l.b16 %v1314
    %v1940 = vunpack.c.h.b16 %v1314
    %v1941 = vunpack.c.l.b16 %v1315
    %v1942 = vunpack.c.h.b16 %v1315
    %v1943 = vunpack.c.l.b16 %v1316
    %v1944 = vunpack.c.h.b16 %v1316
    %v1945 = vunpack.c.l.b16 %v1317
    %v1946 = vunpack.c.h.b16 %v1317
    %v1947 = vunpack.c.l.b16 %v1318
    %v1948 = vunpack.c.h.b16 %v1318
    %v1949 = vunpack.c.l.b16 %v1319
    %v1950 = vunpack.c.h.b16 %v1319
    %v1951 = vunpack.c.l.b16 %v1320
    %v1952 = vunpack.c.h.b16 %v1320
    %v1953 = vunpack.c.l.b16 %v1321
    %v1954 = vunpack.c.h.b16 %v1321
    %v1955 = vunpack.c.l.b16 %v1322
    %v1956 = vunpack.c.h.b16 %v1322
    %v1957 = vunpack.c.l.b16 %v1323
    %v1958 = vunpack.c.h.b16 %v1323
    %v1959 = vunpack.c.l.b16 %v1324
    %v1960 = vunpack.c.h.b16 %v1324
    %v1961 = vunpack.c.l.b16 %v1325
    %v1962 = vunpack.c.h.b16 %v1325
    %v1963 = vunpack.c.l.b16 %v1326
    %v1964 = vunpack.c.h.b16 %v1326
    %v1965 = vunpack.c.l.b16 %v1327
    %v1966 = vunpack.c.h.b16 %v1327
    %v1967 = vunpack.c.l.b16 %v1328
    %v1968 = vunpack.c.h.b16 %v1328
    %v1969 = vunpack.c.l.b16 %v1329
    %v1970 = vunpack.c.h.b16 %v1329
    %v1971 = vunpack.c.l.b16 %v1330
    %v1972 = vunpack.c.h.b16 %v1330
    %v1973 = vunpack.c.l.b16 %v1331
    %v1974 = vunpack.c.h.b16 %v1331
    %v1975 = vunpack.c.l.b16 %v1332
    %v1976 = vunpack.c.h.b16 %v1332
    %v1977 = vunpack.c.l.b16 %v1333
    %v1978 = vunpack.c.h.b16 %v1333
    %v1979 = vunpack.c.l.b16 %v1334
    %v1980 = vunpack.c.h.b16 %v1334
    %v1981 = vunpack.c.l.b16 %v1335
    %v1982 = vunpack.c.h.b16 %v1335
    %v1983 = vunpack.c.l.b16 %v1336
    %v1984 = vunpack.c.h.b16 %v1336
    %v1985 = vunpack.c.l.b16 %v1337
    %v1986 = vunpack.c.h.b16 %v1337
    %v1987 = vunpack.c.l.b16 %v1338
    %v1988 = vunpack.c.h.b16 %v1338
    %v1989 = vunpack.c.l.b16 %v1339
    %v1990 = vunpack.c.h.b16 %v1339
    %v1991 = vunpack.c.l.b16 %v1340
    %v1992 = vunpack.c.h.b16 %v1340
    %v1993 = vunpack.c.l.b16 %v1341
    %v1994 = vunpack.c.h.b16 %v1341
    %v1995 = vunpack.c.l.b16 %v1342
    %v1996 = vunpack.c.h.b16 %v1342
    %v1997 = vunpack.c.l.b16 %v1343
    %v1998 = vunpack.c.h.b16 %v1343
    %v1999 = vunpack.c.l.b16 %v1344
    %v2000 = vunpack.c.h.b16 %v1344
    %v2001 = vunpack.c.l.b16 %v1345
    %v2002 = vunpack.c.h.b16 %v1345
    %v2003 = vunpack.c.l.b16 %v1346
    %v2004 = vunpack.c.h.b16 %v1346
    %v2005 = vunpack.c.l.b16 %v1347
    %v2006 = vunpack.c.h.b16 %v1347
    %v2007 = vunpack.c.l.b16 %v1348
    %v2008 = vunpack.c.h.b16 %v1348
    %v2009 = vunpack.c.l.b16 %v1349
    %v2010 = vunpack.c.h.b16 %v1349
    %v2011 = vunpack.c.l.b16 %v1350
    %v2012 = vunpack.c.h.b16 %v1350
    %v2013 = vunpack.c.l.b16 %v1351
    %v2014 = vunpack.c.h.b16 %v1351
    %v2015 = vunpack.c.l.b16 %v1352
    %v2016 = vunpack.c.h.b16 %v1352
    %v2017 = vunpack.c.l.b16 %v1353
    %v2018 = vunpack.c.h.b16 %v1353
    %v2019 = vunpack.c.l.b16 %v1354
    %v2020 = vunpack.c.h.b16 %v1354
    %v2021 = vunpack.c.l.b16 %v1355
    %v2022 = vunpack.c.h.b16 %v1355
    %v2023 = vunpack.c.l.b16 %v1356
    %v2024 = vunpack.c.h.b16 %v1356
    %v2025 = vunpack.c.l.b16 %v1357
    %v2026 = vunpack.c.h.b16 %v1357
    %v2027 = vunpack.c.l.b16 %v1358
    %v2028 = vunpack.c.h.b16 %v1358
    %v2029 = vunpack.c.l.b16 %v1359
    %v2030 = vunpack.c.h.b16 %v1359
    %v2031 = vunpack.c.l.b16 %v1360
    %v2032 = vunpack.c.h.b16 %v1360
    %v2033 = vunpack.c.l.b16 %v1361
    %v2034 = vunpack.c.h.b16 %v1361
    %v2035 = vunpack.c.l.b16 %v1362
    %v2036 = vunpack.c.h.b16 %v1362
    %v2037 = vunpack.c.l.b16 %v1363
    %v2038 = vunpack.c.h.b16 %v1363
    %v2039 = vunpack.c.l.b16 %v1364
    %v2040 = vunpack.c.h.b16 %v1364
    %v2041 = vunpack.c.l.b16 %v1365
    %v2042 = vunpack.c.h.b16 %v1365
    %v2043 = vunpack.c.l.b16 %v1366
    %v2044 = vunpack.c.h.b16 %v1366
    %v2045 = vunpack.c.l.b16 %v1367
    %v2046 = vunpack.c.h.b16 %v1367
    %v2047 = vunpack.c.l.b16 %v1368
    %v2048 = vunpack.c.h.b16 %v1368
    %v2049 = vunpack.c.l.b16 %v1369
    %v2050 = vunpack.c.h.b16 %v1369
    %v2051 = vunpack.c.l.b16 %v1370
    %v2052 = vunpack.c.h.b16 %v1370
    %v2053 = vunpack.c.l.b16 %v1371
    %v2054 = vunpack.c.h.b16 %v1371
    %v2055 = vunpack.c.l.b16 %v1372
    %v2056 = vunpack.c.h.b16 %v1372
    %v2057 = vunpack.c.l.b16 %v1373
    %v2058 = vunpack.c.h.b16 %v1373
    %v2059 = vunpack.c.l.b16 %v1374
    %v2060 = vunpack.c.h.b16 %v1374
    %v2061 = vunpack.c.l.b16 %v1375
    %v2062 = vunpack.c.h.b16 %v1375
    %v2063 = vunpack.c.l.b16 %v1376
    %v2064 = vunpack.c.h.b16 %v1376
    %v2065 = vunpack.c.l.b16 %v1377
    %v2066 = vunpack.c.h.b16 %v1377
    %v2067 = vunpack.c.l.b16 %v1378
    %v2068 = vunpack.c.h.b16 %v1378
    %v2069 = vunpack.c.l.b16 %v1379
    %v2070 = vunpack.c.h.b16 %v1379
    %v2071 = vunpack.c.l.b16 %v1380
    %v2072 = vunpack.c.h.b16 %v1380
    %v2073 = vunpack.c.l.b16 %v1381
    %v2074 = vunpack.c.h.b16 %v1381
    %v2075 = vunpack.c.l.b16 %v1382
    %v2076 = vunpack.c.h.b16 %v1382
    %v2077 = vunpack.c.l.b16 %v1383
    %v2078 = vunpack.c.h.b16 %v1383
    %v2079 = vunpack.c.l.b16 %v1384
    %v2080 = vunpack.c.h.b16 %v1384
    %v2081 = vunpack.c.l.b16 %v1385
    %v2082 = vunpack.c.h.b16 %v1385
    %v2083 = vunpack.c.l.b16 %v1386
    %v2084 = vunpack.c.h.b16 %v1386
    %v2085 = vunpack.c.l.b16 %v1387
    %v2086 = vunpack.c.h.b16 %v1387
    %v2087 = vunpack.c.l.b16 %v1388
    %v2088 = vunpack.c.h.b16 %v1388
    %v2089 = vunpack.c.l.b16 %v1389
    %v2090 = vunpack.c.h.b16 %v1389
    %v2091 = vunpack.c.l.b16 %v1390
    %v2092 = vunpack.c.h.b16 %v1390
    %v2093 = vunpack.c.l.b16 %v1391
    %v2094 = vunpack.c.h.b16 %v1391
    %v2095 = vunpack.c.l.b16 %v1392
    %v2096 = vunpack.c.h.b16 %v1392
    %v2097 = vunpack.c.l.b16 %v1393
    %v2098 = vunpack.c.h.b16 %v1393
    %v2099 = vunpack.c.l.b16 %v1394
    %v2100 = vunpack.c.h.b16 %v1394
    %v2101 = vunpack.c.l.b16 %v1395
    %v2102 = vunpack.c.h.b16 %v1395
    %v2103 = vunpack.c.l.b16 %v1396
    %v2104 = vunpack.c.h.b16 %v1396
    %v2105 = vunpack.c.l.b16 %v1397
    %v2106 = vunpack.c.h.b16 %v1397
    %v2107 = vunpack.c.l.b16 %v1398
    %v2108 = vunpack.c.h.b16 %v1398
    %v2109 = vunpack.c.l.b16 %v1399
    %v2110 = vunpack.c.h.b16 %v1399
    %v2111 = vunpack.c.l.b16 %v1400
    %v2112 = vunpack.c.h.b16 %v1400
    %v2113 = vunpack.c.l.b16 %v1401
    %v2114 = vunpack.c.h.b16 %v1401
    %v2115 = vunpack.c.l.b16 %v1402
    %v2116 = vunpack.c.h.b16 %v1402
    %v2117 = vunpack.c.l.b16 %v1403
    %v2118 = vunpack.c.h.b16 %v1403
    %v2119 = vunpack.c.l.b16 %v1404
    %v2120 = vunpack.c.h.b16 %v1404
    %v2121 = vunpack.c.l.b16 %v1405
    %v2122 = vunpack.c.h.b16 %v1405
    %v2123 = vunpack.c.l.b16 %v1406
    %v2124 = vunpack.c.h.b16 %v1406
    %v2125 = vunpack.c.l.b16 %v1407
    %v2126 = vunpack.c.h.b16 %v1407
    %v2127 = vunpack.c.l.b16 %v1408
    %v2128 = vunpack.c.h.b16 %v1408
    %v2129 = vunpack.c.l.b16 %v1409
    %v2130 = vunpack.c.h.b16 %v1409
    %v2131 = vunpack.c.l.b16 %v1410
    %v2132 = vunpack.c.h.b16 %v1410
    %v2133 = vunpack.c.l.b16 %v1411
    %v2134 = vunpack.c.h.b16 %v1411
    %v2135 = vunpack.c.l.b16 %v1412
    %v2136 = vunpack.c.h.b16 %v1412
    %v2137 = vunpack.c.l.b16 %v1413
    %v2138 = vunpack.c.h.b16 %v1413
    %v2139 = vunpack.c.l.b16 %v1414
    %v2140 = vunpack.c.h.b16 %v1414
    %v2141 = vunpack.c.l.b16 %v1415
    %v2142 = vunpack.c.h.b16 %v1415
    %v2143 = vunpack.c.l.b16 %v1416
    %v2144 = vunpack.c.h.b16 %v1416
    %v2145 = vunpack.c.l.b16 %v1417
    %v2146 = vunpack.c.h.b16 %v1417
    %v2147 = vunpack.c.l.b16 %v1418
    %v2148 = vunpack.c.h.b16 %v1418
    %v2149 = vunpack.c.l.b16 %v1419
    %v2150 = vunpack.c.h.b16 %v1419
    %v2151 = vunpack.c.l.b16 %v1420
    %v2152 = vunpack.c.h.b16 %v1420
    %v2153 = vunpack.c.l.b16 %v1421
    %v2154 = vunpack.c.h.b16 %v1421
    %v2155 = vunpack.c.l.b16 %v1422
    %v2156 = vunpack.c.h.b16 %v1422
    %v2157 = vunpack.c.l.b16 %v1423
    %v2158 = vunpack.c.h.b16 %v1423
    %v2159 = vunpack.c.l.b16 %v1424
    %v2160 = vunpack.c.h.b16 %v1424
    %v2161 = vunpack.c.l.b16 %v1425
    %v2162 = vunpack.c.h.b16 %v1425
    %v2163 = vunpack.c.l.b16 %v1426
    %v2164 = vunpack.c.h.b16 %v1426
    %v2165 = vunpack.c.l.b16 %v1427
    %v2166 = vunpack.c.h.b16 %v1427
    %v2167 = vunpack.c.l.b16 %v1428
    %v2168 = vunpack.c.h.b16 %v1428
    %v2169 = vunpack.c.l.b16 %v1429
    %v2170 = vunpack.c.h.b16 %v1429
    %v2171 = vunpack.c.l.b16 %v1430
    %v2172 = vunpack.c.h.b16 %v1430
    %v2173 = vunpack.c.l.b16 %v1431
    %v2174 = vunpack.c.h.b16 %v1431
    %v2175 = vunpack.c.l.b16 %v1432
    %v2176 = vunpack.c.h.b16 %v1432
    %v2177 = vunpack.c.l.b16 %v1433
    %v2178 = vunpack.c.h.b16 %v1433
    %v2179 = vunpack.c.l.b16 %v1434
    %v2180 = vunpack.c.h.b16 %v1434
    %v2181 = vunpack.c.l.b16 %v1435
    %v2182 = vunpack.c.h.b16 %v1435
    %v2183 = vunpack.c.l.b16 %v1436
    %v2184 = vunpack.c.h.b16 %v1436
    %v2185 = vunpack.c.l.b16 %v1437
    %v2186 = vunpack.c.h.b16 %v1437
    %v2187 = vunpack.c.l.b16 %v1438
    %v2188 = vunpack.c.h.b16 %v1438
    %v2189 = vunpack.c.l.b16 %v1439
    %v2190 = vunpack.c.h.b16 %v1439
    %v2191 = vunpack.c.l.b16 %v1440
    %v2192 = vunpack.c.h.b16 %v1440
    %v2193 = vunpack.c.l.b16 %v1441
    %v2194 = vunpack.c.h.b16 %v1441
    %v2195 = vunpack.c.l.b16 %v1442
    %v2196 = vunpack.c.h.b16 %v1442
    %v2197 = vunpack.c.l.b16 %v1443
    %v2198 = vunpack.c.h.b16 %v1443
    %v2199 = vunpack.c.l.b16 %v1444
    %v2200 = vunpack.c.h.b16 %v1444
    %v2201 = vunpack.c.l.b16 %v1445
    %v2202 = vunpack.c.h.b16 %v1445
    %v2203 = vunpack.c.l.b16 %v1446
    %v2204 = vunpack.c.h.b16 %v1446
    %v2205 = vunpack.c.l.b16 %v1447
    %v2206 = vunpack.c.h.b16 %v1447
    %v2207 = vunpack.c.l.b16 %v1448
    %v2208 = vunpack.c.h.b16 %v1448
    %v2209 = vunpack.c.l.b16 %v1449
    %v2210 = vunpack.c.h.b16 %v1449
    %v2211 = vunpack.c.l.b16 %v1450
    %v2212 = vunpack.c.h.b16 %v1450
    %v2213 = vunpack.c.l.b16 %v1451
    %v2214 = vunpack.c.h.b16 %v1451
    %v2215 = vunpack.c.l.b16 %v1452
    %v2216 = vunpack.c.h.b16 %v1452
    %v2217 = vunpack.c.l.b16 %v1453
    %v2218 = vunpack.c.h.b16 %v1453
    %v2219 = vunpack.c.l.b16 %v1454
    %v2220 = vunpack.c.h.b16 %v1454
    %v2221 = vunpack.c.l.b16 %v1455
    %v2222 = vunpack.c.h.b16 %v1455
    %v2223 = vunpack.c.l.b16 %v1456
    %v2224 = vunpack.c.h.b16 %v1456
    %v2225 = vunpack.c.l.b16 %v1457
    %v2226 = vunpack.c.h.b16 %v1457
    %v2227 = vunpack.c.l.b16 %v1458
    %v2228 = vunpack.c.h.b16 %v1458
    %v2229 = vunpack.c.l.b16 %v1459
    %v2230 = vunpack.c.h.b16 %v1459
    %v2231 = vunpack.c.l.b16 %v1460
    %v2232 = vunpack.c.h.b16 %v1460
    %v2233 = vunpack.c.l.b16 %v1461
    %v2234 = vunpack.c.h.b16 %v1461
    %v2235 = vunpack.c.l.b16 %v1462
    %v2236 = vunpack.c.h.b16 %v1462
    %v2237 = vunpack.c.l.b16 %v1463
    %v2238 = vunpack.c.h.b16 %v1463
    %v2239 = vunpack.c.l.b16 %v1464
    %v2240 = vunpack.c.h.b16 %v1464
    %v2241 = vunpack.c.l.b16 %v1465
    %v2242 = vunpack.c.h.b16 %v1465
    %v2243 = vunpack.c.l.b16 %v1466
    %v2244 = vunpack.c.h.b16 %v1466
    %v2245 = vunpack.c.l.b16 %v1467
    %v2246 = vunpack.c.h.b16 %v1467
    %v2247 = vunpack.c.l.b16 %v1468
    %v2248 = vunpack.c.h.b16 %v1468
    %v2249 = vunpack.c.l.b16 %v1469
    %v2250 = vunpack.c.h.b16 %v1469
    %v2251 = vunpack.c.l.b16 %v1470
    %v2252 = vunpack.c.h.b16 %v1470
    %v2253 = vunpack.c.l.b16 %v1471
    %v2254 = vunpack.c.h.b16 %v1471
    %v2255 = vunpack.c.l.b16 %v1472
    %v2256 = vunpack.c.h.b16 %v1472
    %v2257 = vunpack.c.l.b16 %v1473
    %v2258 = vunpack.c.h.b16 %v1473
    %v2259 = vunpack.c.l.b16 %v1474
    %v2260 = vunpack.c.h.b16 %v1474
    %v2261 = vunpack.c.l.b16 %v1475
    %v2262 = vunpack.c.h.b16 %v1475
    %v2263 = vunpack.c.l.b16 %v1476
    %v2264 = vunpack.c.h.b16 %v1476
    %v2265 = vunpack.c.l.b16 %v1477
    %v2266 = vunpack.c.h.b16 %v1477
    %v2267 = vunpack.c.l.b16 %v1478
    %v2268 = vunpack.c.h.b16 %v1478
    %v2269 = vunpack.c.l.b16 %v1479
    %v2270 = vunpack.c.h.b16 %v1479
    %v2271 = vunpack.c.l.b16 %v1480
    %v2272 = vunpack.c.h.b16 %v1480
    %v2273 = vunpack.c.l.b16 %v1481
    %v2274 = vunpack.c.h.b16 %v1481
    %v2275 = vunpack.c.l.b16 %v1482
    %v2276 = vunpack.c.h.b16 %v1482
    %v2277 = vunpack.c.l.b16 %v1483
    %v2278 = vunpack.c.h.b16 %v1483
    %v2279 = vunpack.c.l.b16 %v1484
    %v2280 = vunpack.c.h.b16 %v1484
    %v2281 = vunpack.c.l.b16 %v1485
    %v2282 = vunpack.c.h.b16 %v1485
    %v2283 = vunpack.c.l.b16 %v1486
    %v2284 = vunpack.c.h.b16 %v1486
    %v2285 = vunpack.c.l.b16 %v1487
    %v2286 = vunpack.c.h.b16 %v1487
    %v2287 = vunpack.c.l.b16 %v1488
    %v2288 = vunpack.c.h.b16 %v1488
    %v2289 = vunpack.c.l.b16 %v1489
    %v2290 = vunpack.c.h.b16 %v1489
    %v2291 = vunpack.c.l.b16 %v1490
    %v2292 = vunpack.c.h.b16 %v1490
    %v2293 = vunpack.c.l.b16 %v1491
    %v2294 = vunpack.c.h.b16 %v1491
    %v2295 = vunpack.c.l.b16 %v1492
    %v2296 = vunpack.c.h.b16 %v1492
    %v2297 = vunpack.c.l.b16 %v1493
    %v2298 = vunpack.c.h.b16 %v1493
    %v2299 = vunpack.c.l.b16 %v1494
    %v2300 = vunpack.c.h.b16 %v1494
    %v2301 = vunpack.c.l.b16 %v1495
    %v2302 = vunpack.c.h.b16 %v1495
    %v2303 = vunpack.c.l.b16 %v1496
    %v2304 = vunpack.c.h.b16 %v1496
    %v2305 = vunpack.c.l.b16 %v1497
    %v2306 = vunpack.c.h.b16 %v1497
    %v2307 = vunpack.c.l.b16 %v1498
    %v2308 = vunpack.c.h.b16 %v1498
    %v2309 = vpack.c.b16 %v1805, %v1797
    %v2310 = vpack.c.b16 %v1806, %v1798
    %v2311 = vpack.c.b16 %v1807, %v1799
    %v2312 = vpack.c.b16 %v1808, %v1800
    %v2313 = vpack.c.b16 %v1809, %v1801
    %v2314 = vpack.c.b16 %v1810, %v1802
    %v2315 = vpack.c.b16 %v1811, %v1803
    %v2316 = vpack.c.b16 %v1812, %v1804
    %v2317 = vpack.c.b16 %v1821, %v1813
    %v2318 = vpack.c.b16 %v1822, %v1814
    %v2319 = vpack.c.b16 %v1823, %v1815
    %v2320 = vpack.c.b16 %v1824, %v1816
    %v2321 = vpack.c.b16 %v1825, %v1817
    %v2322 = vpack.c.b16 %v1826, %v1818
    %v2323 = vpack.c.b16 %v1827, %v1819
    %v2324 = vpack.c.b16 %v1828, %v1820
    %v2325 = vpack.c.b16 %v1837, %v1829
    %v2326 = vpack.c.b16 %v1838, %v1830
    %v2327 = vpack.c.b16 %v1839, %v1831
    %v2328 = vpack.c.b16 %v1840, %v1832
    %v2329 = vpack.c.b16 %v1841, %v1833
    %v2330 = vpack.c.b16 %v1842, %v1834
    %v2331 = vpack.c.b16 %v1843, %v1835
    %v2332 = vpack.c.b16 %v1844, %v1836
    %v2333 = vpack.c.b16 %v1853, %v1845
    %v2334 = vpack.c.b16 %v1854, %v1846
    %v2335 = vpack.c.b16 %v1855, %v1847
    %v2336 = vpack.c.b16 %v1856, %v1848
    %v2337 = vpack.c.b16 %v1857, %v1849
    %v2338 = vpack.c.b16 %v1858, %v1850
    %v2339 = vpack.c.b16 %v1859, %v1851
    %v2340 = vpack.c.b16 %v1860, %v1852
    %v2341 = vpack.c.b16 %v1869, %v1861
    %v2342 = vpack.c.b16 %v1870, %v1862
    %v2343 = vpack.c.b16 %v1871, %v1863
    %v2344 = vpack.c.b16 %v1872, %v1864
    %v2345 = vpack.c.b16 %v1873, %v1865
    %v2346 = vpack.c.b16 %v1874, %v1866
    %v2347 = vpack.c.b16 %v1875, %v1867
    %v2348 = vpack.c.b16 %v1876, %v1868
    %v2349 = vpack.c.b16 %v1885, %v1877
    %v2350 = vpack.c.b16 %v1886, %v1878
    %v2351 = vpack.c.b16 %v1887, %v1879
    %v2352 = vpack.c.b16 %v1888, %v1880
    %v2353 = vpack.c.b16 %v1889, %v1881
    %v2354 = vpack.c.b16 %v1890, %v1882
    %v2355 = vpack.c.b16 %v1891, %v1883
    %v2356 = vpack.c.b16 %v1892, %v1884
    %v2357 = vpack.c.b16 %v1901, %v1893
    %v2358 = vpack.c.b16 %v1902, %v1894
    %v2359 = vpack.c.b16 %v1903, %v1895
    %v2360 = vpack.c.b16 %v1904, %v1896
    %v2361 = vpack.c.b16 %v1905, %v1897
    %v2362 = vpack.c.b16 %v1906, %v1898
    %v2363 = vpack.c.b16 %v1907, %v1899
    %v2364 = vpack.c.b16 %v1908, %v1900
    %v2365 = vpack.c.b16 %v1917, %v1909
    %v2366 = vpack.c.b16 %v1918, %v1910
    %v2367 = vpack.c.b16 %v1919, %v1911
    %v2368 = vpack.c.b16 %v1920, %v1912
    %v2369 = vpack.c.b16 %v1921, %v1913
    %v2370 = vpack.c.b16 %v1922, %v1914
    %v2371 = vpack.c.b16 %v1923, %v1915
    %v2372 = vpack.c.b16 %v1924, %v1916
    %v2373 = vpack.c.b16 %v1933, %v1925
    %v2374 = vpack.c.b16 %v1934, %v1926
    %v2375 = vpack.c.b16 %v1935, %v1927
    %v2376 = vpack.c.b16 %v1936, %v1928
    %v2377 = vpack.c.b16 %v1937, %v1929
    %v2378 = vpack.c.b16 %v1938, %v1930
    %v2379 = vpack.c.b16 %v1939, %v1931
    %v2380 = vpack.c.b16 %v1940, %v1932
    %v2381 = vpack.c.b16 %v1949, %v1941
    %v2382 = vpack.c.b16 %v1950, %v1942
    %v2383 = vpack.c.b16 %v1951, %v1943
    %v2384 = vpack.c.b16 %v1952, %v1944
    %v2385 = vpack.c.b16 %v1953, %v1945
    %v2386 = vpack.c.b16 %v1954, %v1946
    %v2387 = vpack.c.b16 %v1955, %v1947
    %v2388 = vpack.c.b16 %v1956, %v1948
    %v2389 = vpack.c.b16 %v1965, %v1957
    %v2390 = vpack.c.b16 %v1966, %v1958
    %v2391 = vpack.c.b16 %v1967, %v1959
    %v2392 = vpack.c.b16 %v1968, %v1960
    %v2393 = vpack.c.b16 %v1969, %v1961
    %v2394 = vpack.c.b16 %v1970, %v1962
    %v2395 = vpack.c.b16 %v1971, %v1963
    %v2396 = vpack.c.b16 %v1972, %v1964
    %v2397 = vpack.c.b16 %v1981, %v1973
    %v2398 = vpack.c.b16 %v1982, %v1974
    %v2399 = vpack.c.b16 %v1983, %v1975
    %v2400 = vpack.c.b16 %v1984, %v1976
    %v2401 = vpack.c.b16 %v1985, %v1977
    %v2402 = vpack.c.b16 %v1986, %v1978
    %v2403 = vpack.c.b16 %v1987, %v1979
    %v2404 = vpack.c.b16 %v1988, %v1980
    %v2405 = vpack.c.b16 %v1997, %v1989
    %v2406 = vpack.c.b16 %v1998, %v1990
    %v2407 = vpack.c.b16 %v1999, %v1991
    %v2408 = vpack.c.b16 %v2000, %v1992
    %v2409 = vpack.c.b16 %v2001, %v1993
    %v2410 = vpack.c.b16 %v2002, %v1994
    %v2411 = vpack.c.b16 %v2003, %v1995
    %v2412 = vpack.c.b16 %v2004, %v1996
    %v2413 = vpack.c.b16 %v2013, %v2005
    %v2414 = vpack.c.b16 %v2014, %v2006
    %v2415 = vpack.c.b16 %v2015, %v2007
    %v2416 = vpack.c.b16 %v2016, %v2008
    %v2417 = vpack.c.b16 %v2017, %v2009
    %v2418 = vpack.c.b16 %v2018, %v2010
    %v2419 = vpack.c.b16 %v2019, %v2011
    %v2420 = vpack.c.b16 %v2020, %v2012
    %v2421 = vpack.c.b16 %v2029, %v2021
    %v2422 = vpack.c.b16 %v2030, %v2022
    %v2423 = vpack.c.b16 %v2031, %v2023
    %v2424 = vpack.c.b16 %v2032, %v2024
    %v2425 = vpack.c.b16 %v2033, %v2025
    %v2426 = vpack.c.b16 %v2034, %v2026
    %v2427 = vpack.c.b16 %v2035, %v2027
    %v2428 = vpack.c.b16 %v2036, %v2028
    %v2429 = vpack.c.b16 %v2045, %v2037
    %v2430 = vpack.c.b16 %v2046, %v2038
    %v2431 = vpack.c.b16 %v2047, %v2039
    %v2432 = vpack.c.b16 %v2048, %v2040
    %v2433 = vpack.c.b16 %v2049, %v2041
    %v2434 = vpack.c.b16 %v2050, %v2042
    %v2435 = vpack.c.b16 %v2051, %v2043
    %v2436 = vpack.c.b16 %v2052, %v2044
    %v2437 = vpack.c.b16 %v2061, %v2053
    %v2438 = vpack.c.b16 %v2062, %v2054
    %v2439 = vpack.c.b16 %v2063, %v2055
    %v2440 = vpack.c.b16 %v2064, %v2056
    %v2441 = vpack.c.b16 %v2065, %v2057
    %v2442 = vpack.c.b16 %v2066, %v2058
    %v2443 = vpack.c.b16 %v2067, %v2059
    %v2444 = vpack.c.b16 %v2068, %v2060
    %v2445 = vpack.c.b16 %v2077, %v2069
    %v2446 = vpack.c.b16 %v2078, %v2070
    %v2447 = vpack.c.b16 %v2079, %v2071
    %v2448 = vpack.c.b16 %v2080, %v2072
    %v2449 = vpack.c.b16 %v2081, %v2073
    %v2450 = vpack.c.b16 %v2082, %v2074
    %v2451 = vpack.c.b16 %v2083, %v2075
    %v2452 = vpack.c.b16 %v2084, %v2076
    %v2453 = vpack.c.b16 %v2093, %v2085
    %v2454 = vpack.c.b16 %v2094, %v2086
    %v2455 = vpack.c.b16 %v2095, %v2087
    %v2456 = vpack.c.b16 %v2096, %v2088
    %v2457 = vpack.c.b16 %v2097, %v2089
    %v2458 = vpack.c.b16 %v2098, %v2090
    %v2459 = vpack.c.b16 %v2099, %v2091
    %v2460 = vpack.c.b16 %v2100, %v2092
    %v2461 = vpack.c.b16 %v2109, %v2101
    %v2462 = vpack.c.b16 %v2110, %v2102
    %v2463 = vpack.c.b16 %v2111, %v2103
    %v2464 = vpack.c.b16 %v2112, %v2104
    %v2465 = vpack.c.b16 %v2113, %v2105
    %v2466 = vpack.c.b16 %v2114, %v2106
    %v2467 = vpack.c.b16 %v2115, %v2107
    %v2468 = vpack.c.b16 %v2116, %v2108
    %v2469 = vpack.c.b16 %v2125, %v2117
    %v2470 = vpack.c.b16 %v2126, %v2118
    %v2471 = vpack.c.b16 %v2127, %v2119
    %v2472 = vpack.c.b16 %v2128, %v2120
    %v2473 = vpack.c.b16 %v2129, %v2121
    %v2474 = vpack.c.b16 %v2130, %v2122
    %v2475 = vpack.c.b16 %v2131, %v2123
    %v2476 = vpack.c.b16 %v2132, %v2124
    %v2477 = vpack.c.b16 %v2141, %v2133
    %v2478 = vpack.c.b16 %v2142, %v2134
    %v2479 = vpack.c.b16 %v2143, %v2135
    %v2480 = vpack.c.b16 %v2144, %v2136
    %v2481 = vpack.c.b16 %v2145, %v2137
    %v2482 = vpack.c.b16 %v2146, %v2138
    %v2483 = vpack.c.b16 %v2147, %v2139
    %v2484 = vpack.c.b16 %v2148, %v2140
    %v2485 = vpack.c.b16 %v2157, %v2149
    %v2486 = vpack.c.b16 %v2158, %v2150
    %v2487 = vpack.c.b16 %v2159, %v2151
    %v2488 = vpack.c.b16 %v2160, %v2152
    %v2489 = vpack.c.b16 %v2161, %v2153
    %v2490 = vpack.c.b16 %v2162, %v2154
    %v2491 = vpack.c.b16 %v2163, %v2155
    %v2492 = vpack.c.b16 %v2164, %v2156
    %v2493 = vpack.c.b16 %v2173, %v2165
    %v2494 = vpack.c.b16 %v2174, %v2166
    %v2495 = vpack.c.b16 %v2175, %v2167
    %v2496 = vpack.c.b16 %v2176, %v2168
    %v2497 = vpack.c.b16 %v2177, %v2169
    %v2498 = vpack.c.b16 %v2178, %v2170
    %v2499 = vpack.c.b16 %v2179, %v2171
    %v2500 = vpack.c.b16 %v2180, %v2172
    %v2501 = vpack.c.b16 %v2189, %v2181
    %v2502 = vpack.c.b16 %v2190, %v2182
    %v2503 = vpack.c.b16 %v2191, %v2183
    %v2504 = vpack.c.b16 %v2192, %v2184
    %v2505 = vpack.c.b16 %v2193, %v2185
    %v2506 = vpack.c.b16 %v2194, %v2186
    %v2507 = vpack.c.b16 %v2195, %v2187
    %v2508 = vpack.c.b16 %v2196, %v2188
    %v2509 = vpack.c.b16 %v2205, %v2197
    %v2510 = vpack.c.b16 %v2206, %v2198
    %v2511 = vpack.c.b16 %v2207, %v2199
    %v2512 = vpack.c.b16 %v2208, %v2200
    %v2513 = vpack.c.b16 %v2209, %v2201
    %v2514 = vpack.c.b16 %v2210, %v2202
    %v2515 = vpack.c.b16 %v2211, %v2203
    %v2516 = vpack.c.b16 %v2212, %v2204
    %v2517 = vpack.c.b16 %v2221, %v2213
    %v2518 = vpack.c.b16 %v2222, %v2214
    %v2519 = vpack.c.b16 %v2223, %v2215
    %v2520 = vpack.c.b16 %v2224, %v2216
    %v2521 = vpack.c.b16 %v2225, %v2217
    %v2522 = vpack.c.b16 %v2226, %v2218
    %v2523 = vpack.c.b16 %v2227, %v2219
    %v2524 = vpack.c.b16 %v2228, %v2220
    %v2525 = vpack.c.b16 %v2237, %v2229
    %v2526 = vpack.c.b16 %v2238, %v2230
    %v2527 = vpack.c.b16 %v2239, %v2231
    %v2528 = vpack.c.b16 %v2240, %v2232
    %v2529 = vpack.c.b16 %v2241, %v2233
    %v2530 = vpack.c.b16 %v2242, %v2234
    %v2531 = vpack.c.b16 %v2243, %v2235
    %v2532 = vpack.c.b16 %v2244, %v2236
    %v2533 = vpack.c.b16 %v2253, %v2245
    %v2534 = vpack.c.b16 %v2254, %v2246
    %v2535 = vpack.c.b16 %v2255, %v2247
    %v2536 = vpack.c.b16 %v2256, %v2248
    %v2537 = vpack.c.b16 %v2257, %v2249
    %v2538 = vpack.c.b16 %v2258, %v2250
    %v2539 = vpack.c.b16 %v2259, %v2251
    %v2540 = vpack.c.b16 %v2260, %v2252
    %v2541 = vpack.c.b16 %v2269, %v2261
    %v2542 = vpack.c.b16 %v2270, %v2262
    %v2543 = vpack.c.b16 %v2271, %v2263
    %v2544 = vpack.c.b16 %v2272, %v2264
    %v2545 = vpack.c.b16 %v2273, %v2265
    %v2546 = vpack.c.b16 %v2274, %v2266
    %v2547 = vpack.c.b16 %v2275, %v2267
    %v2548 = vpack.c.b16 %v2276, %v2268
    %v2549 = vpack.c.b16 %v2285, %v2277
    %v2550 = vpack.c.b16 %v2286, %v2278
    %v2551 = vpack.c.b16 %v2287, %v2279
    %v2552 = vpack.c.b16 %v2288, %v2280
    %v2553 = vpack.c.b16 %v2289, %v2281
    %v2554 = vpack.c.b16 %v2290, %v2282
    %v2555 = vpack.c.b16 %v2291, %v2283
    %v2556 = vpack.c.b16 %v2292, %v2284
    %v2557 = vpack.c.b16 %v2301, %v2293
    %v2558 = vpack.c.b16 %v2302, %v2294
    %v2559 = vpack.c.b16 %v2303, %v2295
    %v2560 = vpack.c.b16 %v2304, %v2296
    %v2561 = vpack.c.b16 %v2305, %v2297
    %v2562 = vpack.c.b16 %v2306, %v2298
    %v2563 = vpack.c.b16 %v2307, %v2299
    %v2564 = vpack.c.b16 %v2308, %v2300
    %2821 = vmatprep.subr.bf16.mxu0 %v2310
    %2822 = vmatpush1.bf16.msra.mxu0 %v2309
    %2823 = vmatprep.subr.bf16.mxu0 %v2318
    %2824 = vmatpush1.bf16.msra.mxu0 %v2317
    %2825 = vmatprep.subr.bf16.mxu0 %v2326
    %2826 = vmatpush1.bf16.msra.mxu0 %v2325
    %2827 = vmatprep.subr.bf16.mxu0 %v2334
    %2828 = vmatpush1.bf16.msra.mxu0 %v2333
    %2829 = vmatprep.subr.bf16.mxu0 %v2342
    %2830 = vmatpush1.bf16.msra.mxu0 %v2341
    %2831 = vmatprep.subr.bf16.mxu0 %v2350
    %2832 = vmatpush1.bf16.msra.mxu0 %v2349
    %2833 = vmatprep.subr.bf16.mxu0 %v2358
    %2834 = vmatpush1.bf16.msra.mxu0 %v2357
    %2835 = vmatprep.subr.bf16.mxu0 %v2366
    %2836 = vmatpush1.bf16.msra.mxu0 %v2365
    %2837 = vmatprep.subr.bf16.mxu0 %v2374
    %2838 = vmatpush1.bf16.msra.mxu0 %v2373
    %2839 = vmatprep.subr.bf16.mxu0 %v2382
    %2840 = vmatpush1.bf16.msra.mxu0 %v2381
    %2841 = vmatprep.subr.bf16.mxu0 %v2390
    %2842 = vmatpush1.bf16.msra.mxu0 %v2389
    %2843 = vmatprep.subr.bf16.mxu0 %v2398
    %2844 = vmatpush1.bf16.msra.mxu0 %v2397
    %2845 = vmatprep.subr.bf16.mxu0 %v2406
    %2846 = vmatpush1.bf16.msra.mxu0 %v2405
    %2847 = vmatprep.subr.bf16.mxu0 %v2414
    %2848 = vmatpush1.bf16.msra.mxu0 %v2413
    %2849 = vmatprep.subr.bf16.mxu0 %v2422
    %2850 = vmatpush1.bf16.msra.mxu0 %v2421
    %2851 = vmatprep.subr.bf16.mxu0 %v2430
    %2852 = vmatpush1.bf16.msra.mxu0 %v2429
    %2853 = vmatprep.mubr.bf16.mxu0 %v1240
    %2854 = vmatmul.mubr.bf16.gmra.mrb[0].mxu0 %v1239
    %v2855 = vpop.f32.mrb[0].mxu0
    %v2856 = vadd.f32 %v1504, %v2855
    %v2857 = vpop.f32.mrb[0].mxu0
    %v2858 = vadd.f32 %v1508, %v2857
    %v2859 = vpop.f32.mrb[0].mxu0
    %v2860 = vpop.f32.mrb[0].mxu0
    %2861 = vdwg.mxu0
    %2862 = vmatprep.subr.bf16.mxu0 %v2438
    %2863 = vmatpush1.bf16.msra.mxu0 %v2437
    %2864 = vmatprep.subr.bf16.mxu0 %v2446
    %2865 = vmatpush1.bf16.msra.mxu0 %v2445
    %2866 = vmatprep.subr.bf16.mxu0 %v2454
    %2867 = vmatpush1.bf16.msra.mxu0 %v2453
    %2868 = vmatprep.subr.bf16.mxu0 %v2462
    %2869 = vmatpush1.bf16.msra.mxu0 %v2461
    %2870 = vmatprep.subr.bf16.mxu0 %v2470
    %2871 = vmatpush1.bf16.msra.mxu0 %v2469
    %2872 = vmatprep.subr.bf16.mxu0 %v2478
    %2873 = vmatpush1.bf16.msra.mxu0 %v2477
    %2874 = vmatprep.subr.bf16.mxu0 %v2486
    %2875 = vmatpush1.bf16.msra.mxu0 %v2485
    %2876 = vmatprep.subr.bf16.mxu0 %v2494
    %2877 = vmatpush1.bf16.msra.mxu0 %v2493
    %2878 = vmatprep.subr.bf16.mxu0 %v2502
    %2879 = vmatpush1.bf16.msra.mxu0 %v2501
    %2880 = vmatprep.subr.bf16.mxu0 %v2510
    %2881 = vmatpush1.bf16.msra.mxu0 %v2509
    %2882 = vmatprep.subr.bf16.mxu0 %v2518
    %2883 = vmatpush1.bf16.msra.mxu0 %v2517
    %2884 = vmatprep.subr.bf16.mxu0 %v2526
    %2885 = vmatpush1.bf16.msra.mxu0 %v2525
    %2886 = vmatprep.subr.bf16.mxu0 %v2534
    %2887 = vmatpush1.bf16.msra.mxu0 %v2533
    %2888 = vmatprep.subr.bf16.mxu0 %v2542
    %2889 = vmatpush1.bf16.msra.mxu0 %v2541
    %2890 = vmatprep.subr.bf16.mxu0 %v2550
    %2891 = vmatpush1.bf16.msra.mxu0 %v2549
    %2892 = vmatprep.subr.bf16.mxu0 %v2558
    %2893 = vmatpush1.bf16.msra.mxu0 %v2557
    %2894 = vmatprep.mubr.bf16.mxu0 %v1242
    %2895 = vmatmul.mubr.bf16.gmra.mrb[0].mxu0 %v1241
    %v2896 = vpop.f32.mrb[0].mxu0
    %v2897 = vadd.f32 %v2856, %v2896
    %v2898 = vpop.f32.mrb[0].mxu0
    %v2899 = vadd.f32 %v2858, %v2898
    %v2900 = vpop.f32.mrb[0].mxu0
    %v2901 = vpop.f32.mrb[0].mxu0
    %2902 = vdwg.mxu0
    %2903 = vmatprep.subr.bf16.mxu0 %v2312
    %2904 = vmatpush1.bf16.msra.mxu0 %v2311
    %2905 = vmatprep.subr.bf16.mxu0 %v2320
    %2906 = vmatpush1.bf16.msra.mxu0 %v2319
    %2907 = vmatprep.subr.bf16.mxu0 %v2328
    %2908 = vmatpush1.bf16.msra.mxu0 %v2327
    %2909 = vmatprep.subr.bf16.mxu0 %v2336
    %2910 = vmatpush1.bf16.msra.mxu0 %v2335
    %2911 = vmatprep.subr.bf16.mxu0 %v2344
    %2912 = vmatpush1.bf16.msra.mxu0 %v2343
    %2913 = vmatprep.subr.bf16.mxu0 %v2352
    %2914 = vmatpush1.bf16.msra.mxu0 %v2351
    %2915 = vmatprep.subr.bf16.mxu0 %v2360
    %2916 = vmatpush1.bf16.msra.mxu0 %v2359
    %2917 = vmatprep.subr.bf16.mxu0 %v2368
    %2918 = vmatpush1.bf16.msra.mxu0 %v2367
    %2919 = vmatprep.subr.bf16.mxu0 %v2376
    %2920 = vmatpush1.bf16.msra.mxu0 %v2375
    %2921 = vmatprep.subr.bf16.mxu0 %v2384
    %2922 = vmatpush1.bf16.msra.mxu0 %v2383
    %2923 = vmatprep.subr.bf16.mxu0 %v2392
    %2924 = vmatpush1.bf16.msra.mxu0 %v2391
    %2925 = vmatprep.subr.bf16.mxu0 %v2400
    %2926 = vmatpush1.bf16.msra.mxu0 %v2399
    %2927 = vmatprep.subr.bf16.mxu0 %v2408
    %2928 = vmatpush1.bf16.msra.mxu0 %v2407
    %2929 = vmatprep.subr.bf16.mxu0 %v2416
    %2930 = vmatpush1.bf16.msra.mxu0 %v2415
    %2931 = vmatprep.subr.bf16.mxu0 %v2424
    %2932 = vmatpush1.bf16.msra.mxu0 %v2423
    %2933 = vmatprep.subr.bf16.mxu0 %v2432
    %2934 = vmatpush1.bf16.msra.mxu0 %v2431
    %2935 = vmatprep.mubr.bf16.mxu0 %v1240
    %2936 = vmatmul.mubr.bf16.gmra.mrb[0].mxu0 %v1239
    %v2937 = vpop.f32.mrb[0].mxu0
    %v2938 = vadd.f32 %v1512, %v2937
    %v2939 = vpop.f32.mrb[0].mxu0
    %v2940 = vadd.f32 %v1516, %v2939
    %v2941 = vpop.f32.mrb[0].mxu0
    %v2942 = vpop.f32.mrb[0].mxu0
    %2943 = vdwg.mxu0
    %2944 = vmatprep.subr.bf16.mxu0 %v2440
    %2945 = vmatpush1.bf16.msra.mxu0 %v2439
    %2946 = vmatprep.subr.bf16.mxu0 %v2448
    %2947 = vmatpush1.bf16.msra.mxu0 %v2447
    %2948 = vmatprep.subr.bf16.mxu0 %v2456
    %2949 = vmatpush1.bf16.msra.mxu0 %v2455
    %2950 = vmatprep.subr.bf16.mxu0 %v2464
    %2951 = vmatpush1.bf16.msra.mxu0 %v2463
    %2952 = vmatprep.subr.bf16.mxu0 %v2472
    %2953 = vmatpush1.bf16.msra.mxu0 %v2471
    %2954 = vmatprep.subr.bf16.mxu0 %v2480
    %2955 = vmatpush1.bf16.msra.mxu0 %v2479
    %2956 = vmatprep.subr.bf16.mxu0 %v2488
    %2957 = vmatpush1.bf16.msra.mxu0 %v2487
    %2958 = vmatprep.subr.bf16.mxu0 %v2496
    %2959 = vmatpush1.bf16.msra.mxu0 %v2495
    %2960 = vmatprep.subr.bf16.mxu0 %v2504
    %2961 = vmatpush1.bf16.msra.mxu0 %v2503
    %2962 = vmatprep.subr.bf16.mxu0 %v2512
    %2963 = vmatpush1.bf16.msra.mxu0 %v2511
    %2964 = vmatprep.subr.bf16.mxu0 %v2520
    %2965 = vmatpush1.bf16.msra.mxu0 %v2519
    %2966 = vmatprep.subr.bf16.mxu0 %v2528
    %2967 = vmatpush1.bf16.msra.mxu0 %v2527
    %2968 = vmatprep.subr.bf16.mxu0 %v2536
    %2969 = vmatpush1.bf16.msra.mxu0 %v2535
    %2970 = vmatprep.subr.bf16.mxu0 %v2544
    %2971 = vmatpush1.bf16.msra.mxu0 %v2543
    %2972 = vmatprep.subr.bf16.mxu0 %v2552
    %2973 = vmatpush1.bf16.msra.mxu0 %v2551
    %2974 = vmatprep.subr.bf16.mxu0 %v2560
    %2975 = vmatpush1.bf16.msra.mxu0 %v2559
    %2976 = vmatprep.mubr.bf16.mxu0 %v1242
    %2977 = vmatmul.mubr.bf16.gmra.mrb[0].mxu0 %v1241
    %v2978 = vpop.f32.mrb[0].mxu0
    %v2979 = vadd.f32 %v2938, %v2978
    %v2980 = vpop.f32.mrb[0].mxu0
    %v2981 = vadd.f32 %v2940, %v2980
    %v2982 = vpop.f32.mrb[0].mxu0
    %v2983 = vpop.f32.mrb[0].mxu0
    %2984 = vdwg.mxu0
    %2985 = vmatprep.subr.bf16.mxu0 %v2314
    %2986 = vmatpush1.bf16.msra.mxu0 %v2313
    %2987 = vmatprep.subr.bf16.mxu0 %v2322
    %2988 = vmatpush1.bf16.msra.mxu0 %v2321
    %2989 = vmatprep.subr.bf16.mxu0 %v2330
    %2990 = vmatpush1.bf16.msra.mxu0 %v2329
    %2991 = vmatprep.subr.bf16.mxu0 %v2338
    %2992 = vmatpush1.bf16.msra.mxu0 %v2337
    %2993 = vmatprep.subr.bf16.mxu0 %v2346
    %2994 = vmatpush1.bf16.msra.mxu0 %v2345
    %2995 = vmatprep.subr.bf16.mxu0 %v2354
    %2996 = vmatpush1.bf16.msra.mxu0 %v2353
    %2997 = vmatprep.subr.bf16.mxu0 %v2362
    %2998 = vmatpush1.bf16.msra.mxu0 %v2361
    %2999 = vmatprep.subr.bf16.mxu0 %v2370
    %3000 = vmatpush1.bf16.msra.mxu0 %v2369
    %3001 = vmatprep.subr.bf16.mxu0 %v2378
    %3002 = vmatpush1.bf16.msra.mxu0 %v2377
    %3003 = vmatprep.subr.bf16.mxu0 %v2386
    %3004 = vmatpush1.bf16.msra.mxu0 %v2385
    %3005 = vmatprep.subr.bf16.mxu0 %v2394
    %3006 = vmatpush1.bf16.msra.mxu0 %v2393
    %3007 = vmatprep.subr.bf16.mxu0 %v2402
    %3008 = vmatpush1.bf16.msra.mxu0 %v2401
    %3009 = vmatprep.subr.bf16.mxu0 %v2410
    %3010 = vmatpush1.bf16.msra.mxu0 %v2409
    %3011 = vmatprep.subr.bf16.mxu0 %v2418
    %3012 = vmatpush1.bf16.msra.mxu0 %v2417
    %3013 = vmatprep.subr.bf16.mxu0 %v2426
    %3014 = vmatpush1.bf16.msra.mxu0 %v2425
    %3015 = vmatprep.subr.bf16.mxu0 %v2434
    %3016 = vmatpush1.bf16.msra.mxu0 %v2433
    %3017 = vmatprep.mubr.bf16.mxu0 %v1240
    %3018 = vmatmul.mubr.bf16.gmra.mrb[0].mxu0 %v1239
    %v3019 = vpop.f32.mrb[0].mxu0
    %v3020 = vadd.f32 %v1520, %v3019
    %v3021 = vpop.f32.mrb[0].mxu0
    %v3022 = vadd.f32 %v1524, %v3021
    %v3023 = vpop.f32.mrb[0].mxu0
    %v3024 = vpop.f32.mrb[0].mxu0
    %3025 = vdwg.mxu0
    %3026 = vmatprep.subr.bf16.mxu0 %v2442
    %3027 = vmatpush1.bf16.msra.mxu0 %v2441
    %3028 = vmatprep.subr.bf16.mxu0 %v2450
    %3029 = vmatpush1.bf16.msra.mxu0 %v2449
    %3030 = vmatprep.subr.bf16.mxu0 %v2458
    %3031 = vmatpush1.bf16.msra.mxu0 %v2457
    %3032 = vmatprep.subr.bf16.mxu0 %v2466
    %3033 = vmatpush1.bf16.msra.mxu0 %v2465
    %3034 = vmatprep.subr.bf16.mxu0 %v2474
    %3035 = vmatpush1.bf16.msra.mxu0 %v2473
    %3036 = vmatprep.subr.bf16.mxu0 %v2482
    %3037 = vmatpush1.bf16.msra.mxu0 %v2481
    %3038 = vmatprep.subr.bf16.mxu0 %v2490
    %3039 = vmatpush1.bf16.msra.mxu0 %v2489
    %3040 = vmatprep.subr.bf16.mxu0 %v2498
    %3041 = vmatpush1.bf16.msra.mxu0 %v2497
    %3042 = vmatprep.subr.bf16.mxu0 %v2506
    %3043 = vmatpush1.bf16.msra.mxu0 %v2505
    %3044 = vmatprep.subr.bf16.mxu0 %v2514
    %3045 = vmatpush1.bf16.msra.mxu0 %v2513
    %3046 = vmatprep.subr.bf16.mxu0 %v2522
    %3047 = vmatpush1.bf16.msra.mxu0 %v2521
    %3048 = vmatprep.subr.bf16.mxu0 %v2530
    %3049 = vmatpush1.bf16.msra.mxu0 %v2529
    %3050 = vmatprep.subr.bf16.mxu0 %v2538
    %3051 = vmatpush1.bf16.msra.mxu0 %v2537
    %3052 = vmatprep.subr.bf16.mxu0 %v2546
    %3053 = vmatpush1.bf16.msra.mxu0 %v2545
    %3054 = vmatprep.subr.bf16.mxu0 %v2554
    %3055 = vmatpush1.bf16.msra.mxu0 %v2553
    %3056 = vmatprep.subr.bf16.mxu0 %v2562
    %3057 = vmatpush1.bf16.msra.mxu0 %v2561
    %3058 = vmatprep.mubr.bf16.mxu0 %v1242
    %3059 = vmatmul.mubr.bf16.gmra.mrb[0].mxu0 %v1241
    %v3060 = vpop.f32.mrb[0].mxu0
    %v3061 = vadd.f32 %v3020, %v3060
    %v3062 = vpop.f32.mrb[0].mxu0
    %v3063 = vadd.f32 %v3022, %v3062
    %v3064 = vpop.f32.mrb[0].mxu0
    %v3065 = vpop.f32.mrb[0].mxu0
    %3066 = vdwg.mxu0
    %3067 = vmatprep.subr.bf16.mxu0 %v2316
    %3068 = vmatpush1.bf16.msra.mxu0 %v2315
    %3069 = vmatprep.subr.bf16.mxu0 %v2324
    %3070 = vmatpush1.bf16.msra.mxu0 %v2323
    %3071 = vmatprep.subr.bf16.mxu0 %v2332
    %3072 = vmatpush1.bf16.msra.mxu0 %v2331
    %3073 = vmatprep.subr.bf16.mxu0 %v2340
    %3074 = vmatpush1.bf16.msra.mxu0 %v2339
    %3075 = vmatprep.subr.bf16.mxu0 %v2348
    %3076 = vmatpush1.bf16.msra.mxu0 %v2347
    %3077 = vmatprep.subr.bf16.mxu0 %v2356
    %3078 = vmatpush1.bf16.msra.mxu0 %v2355
    %3079 = vmatprep.subr.bf16.mxu0 %v2364
    %3080 = vmatpush1.bf16.msra.mxu0 %v2363
    %3081 = vmatprep.subr.bf16.mxu0 %v2372
    %3082 = vmatpush1.bf16.msra.mxu0 %v2371
    %3083 = vmatprep.subr.bf16.mxu0 %v2380
    %3084 = vmatpush1.bf16.msra.mxu0 %v2379
    %3085 = vmatprep.subr.bf16.mxu0 %v2388
    %3086 = vmatpush1.bf16.msra.mxu0 %v2387
    %3087 = vmatprep.subr.bf16.mxu0 %v2396
    %3088 = vmatpush1.bf16.msra.mxu0 %v2395
    %3089 = vmatprep.subr.bf16.mxu0 %v2404
    %3090 = vmatpush1.bf16.msra.mxu0 %v2403
    %3091 = vmatprep.subr.bf16.mxu0 %v2412
    %3092 = vmatpush1.bf16.msra.mxu0 %v2411
    %3093 = vmatprep.subr.bf16.mxu0 %v2420
    %3094 = vmatpush1.bf16.msra.mxu0 %v2419
    %3095 = vmatprep.subr.bf16.mxu0 %v2428
    %3096 = vmatpush1.bf16.msra.mxu0 %v2427
    %3097 = vmatprep.subr.bf16.mxu0 %v2436
    %3098 = vmatpush1.bf16.msra.mxu0 %v2435
    %3099 = vmatprep.mubr.bf16.mxu0 %v1240
    %3100 = vmatmul.mubr.bf16.gmra.mrb[0].mxu0 %v1239
    %v3101 = vpop.f32.mrb[0].mxu0
    %v3102 = vadd.f32 %v1528, %v3101
    %v3103 = vpop.f32.mrb[0].mxu0
    %v3104 = vadd.f32 %v1532, %v3103
    %v3105 = vpop.f32.mrb[0].mxu0
    %v3106 = vpop.f32.mrb[0].mxu0
    %3107 = vdwg.mxu0
    %3108 = vmatprep.subr.bf16.mxu0 %v2444
    %3109 = vmatpush1.bf16.msra.mxu0 %v2443
    %3110 = vmatprep.subr.bf16.mxu0 %v2452
    %3111 = vmatpush1.bf16.msra.mxu0 %v2451
    %3112 = vmatprep.subr.bf16.mxu0 %v2460
    %3113 = vmatpush1.bf16.msra.mxu0 %v2459
    %3114 = vmatprep.subr.bf16.mxu0 %v2468
    %3115 = vmatpush1.bf16.msra.mxu0 %v2467
    %3116 = vmatprep.subr.bf16.mxu0 %v2476
    %3117 = vmatpush1.bf16.msra.mxu0 %v2475
    %3118 = vmatprep.subr.bf16.mxu0 %v2484
    %3119 = vmatpush1.bf16.msra.mxu0 %v2483
    %3120 = vmatprep.subr.bf16.mxu0 %v2492
    %3121 = vmatpush1.bf16.msra.mxu0 %v2491
    %3122 = vmatprep.subr.bf16.mxu0 %v2500
    %3123 = vmatpush1.bf16.msra.mxu0 %v2499
    %3124 = vmatprep.subr.bf16.mxu0 %v2508
    %3125 = vmatpush1.bf16.msra.mxu0 %v2507
    %3126 = vmatprep.subr.bf16.mxu0 %v2516
    %3127 = vmatpush1.bf16.msra.mxu0 %v2515
    %3128 = vmatprep.subr.bf16.mxu0 %v2524
    %3129 = vmatpush1.bf16.msra.mxu0 %v2523
    %3130 = vmatprep.subr.bf16.mxu0 %v2532
    %3131 = vmatpush1.bf16.msra.mxu0 %v2531
    %3132 = vmatprep.subr.bf16.mxu0 %v2540
    %3133 = vmatpush1.bf16.msra.mxu0 %v2539
    %3134 = vmatprep.subr.bf16.mxu0 %v2548
    %3135 = vmatpush1.bf16.msra.mxu0 %v2547
    %3136 = vmatprep.subr.bf16.mxu0 %v2556
    %3137 = vmatpush1.bf16.msra.mxu0 %v2555
    %3138 = vmatprep.subr.bf16.mxu0 %v2564
    %3139 = vmatpush1.bf16.msra.mxu0 %v2563
    %3140 = vmatprep.mubr.bf16.mxu0 %v1242
    %3141 = vmatmul.mubr.bf16.gmra.mrb[0].mxu0 %v1241
    %v3142 = vpop.f32.mrb[0].mxu0
    %v3143 = vadd.f32 %v3102, %v3142
    %v3144 = vpop.f32.mrb[0].mxu0
    %v3145 = vadd.f32 %v3104, %v3144
    %v3146 = vpop.f32.mrb[0].mxu0
    %v3147 = vpop.f32.mrb[0].mxu0
    %3148 = vdwg.mxu0
    %v3149 = vtanh.pop %v2897
    %v3150 = vtanh.pop %v2899
    %v3151 = vtanh.pop %v2979
    %v3152 = vtanh.pop %v2981
    %v3153 = vtanh.pop %v3061
    %v3154 = vtanh.pop %v3063
    %v3155 = vtanh.pop %v3143
    %v3156 = vtanh.pop %v3145
    %3157 = vst [vmem:[%s9] sm:$0xff] %v3149
    %3158 = vst [vmem:[%s9 + $0x8] sm:$0xff] %v3150
    %3159 = vst [vmem:[%s9 + $0x10] sm:$0xff] %v3151
    %3160 = vst [vmem:[%s9 + $0x18] sm:$0xff] %v3152
    %3161 = vst [vmem:[%s9 + $0x20] sm:$0xff] %v3153
    %3162 = vst [vmem:[%s9 + $0x28] sm:$0xff] %v3154
    %3163 = vst [vmem:[%s9 + $0x30] sm:$0xff] %v3155
    %3164 = vst [vmem:[%s9 + $0x38] sm:$0xff] %v3156
    // Predicated region
    $region42: #{decoder_forward.3} parent=1 // pred_check
      _
    $region43: #{decoder_forward.3} parent=1 // pred_check_branch
      %3166 = sbr.rel (0) target = $region45
    $region44: #{decoder_forward.3} parent=1 // pred_region
      _
    $region45: #{decoder_forward.3} parent=1 // pred_fallthru
      _
    // Predicated region
    $region46: #{decoder_forward.3} parent=1 // pred_check
      _
    $region47: #{decoder_forward.3} parent=1 // pred_check_branch
      %3168 = sbr.rel (0) target = $region49
    $region48: #{decoder_forward.3} parent=1 // pred_region
      _
    $region49: #{decoder_forward.3} parent=1 // pred_fallthru
      _
    %3169 = vsyncpa [#allocation3], 1

</llo_original>
